<compile_context>
chip_gen: v5e
topology: v5e:2x2
jax: 0.10.0
libtpu: 0.0.40
codegen_flags: <defaults>
</compile_context>

<pallas_src>
import numpy as np
import jax
import jax.numpy as jnp
from jax.experimental import pallas as pl
from jax.experimental.pallas import tpu as pltpu

EMBED = 256
HIDDEN = 256


def _round_up(x, m):
    return ((x + m - 1) // m) * m


def _row_tile(rows, max_tile=1024):
    # Row tile that is a multiple of 8 (sublane) and covers `rows` when padded.
    if rows >= max_tile:
        return max_tile
    return _round_up(rows, 8)


# -------- pass A: fused input projection + time-blocked LSTM recurrence --------
def _lstm_block_kernel(emb_ref, wih_ref, whh_ref, b_ref, lens_ref,
                       h_out_ref, xp_sc, h_sc, c_sc):
    TT, Bb, E = emb_ref.shape
    H = whh_ref.shape[0]
    ti = pl.program_id(1)

    @pl.when(ti == 0)
    def _():
        h_sc[...] = jnp.zeros_like(h_sc)
        c_sc[...] = jnp.zeros_like(c_sc)

    # One big MXU matmul for the whole time block (input projection + folded bias),
    # kept in VMEM scratch (no HBM round trip).
    x2d = emb_ref[...].reshape(TT * Bb, E)                      # bf16
    xp_sc[...] = (jnp.dot(x2d, wih_ref[...],
                          preferred_element_type=jnp.float32)
                  + b_ref[...]).reshape(TT, Bb, 4 * H)

    whh = whh_ref[...]            # (H, 4H) bf16, hoisted out of the unrolled loop
    lens = lens_ref[...]          # (Bb, 1) int32
    t0 = ti * TT

    def step(t, carry):
        h, c = carry
        # gates, PyTorch order (i, f, g, o); input projection precomputed above
        gates = xp_sc[t] + jnp.dot(h.astype(jnp.bfloat16), whh,
                                   preferred_element_type=jnp.float32)   # (Bb,4H) f32
        i_g = jax.nn.sigmoid(gates[:, 0:H])
        f_g = jax.nn.sigmoid(gates[:, H:2 * H])
        g_g = jnp.tanh(gates[:, 2 * H:3 * H])
        o_g = jax.nn.sigmoid(gates[:, 3 * H:4 * H])
        c_new = f_g * c + i_g * g_g
        h_new = o_g * jnp.tanh(c_new)
        # pad_packed_sequence semantics: padded positions produce h == 0
        valid = (t0 + t) < lens                                  # (Bb,1) bool
        h_out_ref[t] = jnp.where(valid, h_new, 0.0).astype(h_out_ref.dtype)
        return (h_new, c_new)

    # Carry h/c in registers inside the unrolled block; write scratch once at end.
    h_f, c_f = jax.lax.fori_loop(0, TT, step, (h_sc[...], c_sc[...]), unroll=True)
    h_sc[...] = h_f
    c_sc[...] = c_f


# -------- pass B: batched fc2/ReLU/fc3 head (action dim padded to 128) ---------
def _head_kernel(h_ref, w2_ref, b2_ref, w3_ref, b3_ref, q_ref):
    z = jnp.dot(h_ref[...], w2_ref[...],
                preferred_element_type=jnp.float32) + b2_ref[...]
    z = jnp.maximum(z, 0.0)
    q = (jnp.dot(z.astype(jnp.bfloat16), w3_ref[...],
                 preferred_element_type=jnp.float32) + b3_ref[...])
    q_ref[...] = q.astype(q_ref.dtype)


def soft_q_forward(params, tokens, seq_lengths, *, tt=8):
    """tokens: (T, B) int32; seq_lengths: host array of ints (B,)."""
    H, E = HIDDEN, EMBED

    # pad_packed_sequence truncates to the max length -> host-resident lengths.
    # TODO(synk): pack_padded_sequence's length-sorted batching schedule has no clean
    # Pallas equivalent; emulated via per-timestep length masking (same outputs).
    seq_lengths = np.asarray(seq_lengths)
    T_out = int(seq_lengths.max())
    B = tokens.shape[1]
    A = params["w3"].shape[1]

    # bf16 matmul operands (f32 accumulation everywhere).
    emb_tbl = params["embedding"].astype(jnp.bfloat16)
    wih_bf = params["wih"].astype(jnp.bfloat16)
    whh_bf = params["whh"].astype(jnp.bfloat16)
    w2_bf = params["w2"].astype(jnp.bfloat16)
    w3_bf = params["w3"].astype(jnp.bfloat16)

    # Embedding lookup straight into bf16 (glue, plain JAX).
    emb = jnp.take(emb_tbl, tokens[:T_out], axis=0)              # (T_out, B, E) bf16

    # ---- padding: time to a multiple of TT, batch to a multiple of 8 ----
    TT = min(tt, max(T_out, 1))
    T_pad = _round_up(T_out, TT)
    B_pad = _round_up(B, 8)
    if T_pad > T_out or B_pad > B:
        emb = jnp.pad(emb, ((0, T_pad - T_out), (0, B_pad - B), (0, 0)))

    lens_np = np.zeros((B_pad, 1), np.int32)                     # padded cols: len 0
    lens_np[:B, 0] = seq_lengths.astype(np.int32)
    lens = jnp.asarray(lens_np)

    # Batch blocking: 2 blocks when possible (sharded across v7x's 2 TCs).
    nb = 2 if (B_pad % 16 == 0) else 1
    Bb = B_pad // nb

    # ---- pass A: fused projection + recurrence ----
    hs = pl.pallas_call(
        _lstm_block_kernel,
        out_shape=jax.ShapeDtypeStruct((T_pad, B_pad, H), jnp.bfloat16),
        grid_spec=pltpu.PrefetchScalarGridSpec(
            num_scalar_prefetch=0,
            grid=(nb, T_pad // TT),
            in_specs=[
                pl.BlockSpec((TT, Bb, E), lambda bi, ti: (ti, bi, 0)),
                pl.BlockSpec((E, 4 * H), lambda bi, ti: (0, 0)),
                pl.BlockSpec((H, 4 * H), lambda bi, ti: (0, 0)),
                pl.BlockSpec((1, 4 * H), lambda bi, ti: (0, 0)),
                pl.BlockSpec((Bb, 1), lambda bi, ti: (bi, 0)),
            ],
            out_specs=pl.BlockSpec((TT, Bb, H), lambda bi, ti: (ti, bi, 0)),
            scratch_shapes=[
                pltpu.VMEM((TT, Bb, 4 * H), jnp.float32),   # in-VMEM x-projection
                pltpu.VMEM((Bb, H), jnp.float32),           # h carry
                pltpu.VMEM((Bb, H), jnp.float32),           # c carry
            ],
        ),
        compiler_params=pltpu.CompilerParams(
            dimension_semantics=("parallel", "arbitrary")),
    )(emb, wih_bf, whh_bf, params["b_lstm"], lens)

    # ---- pass B: batched head over the whole padded slab ----
    A_pad = _round_up(A, 128)          # lane-dense, unmasked output stores
    w3p = jnp.zeros((H, A_pad), jnp.bfloat16).at[:, :A].set(w3_bf)
    b3p = jnp.zeros((1, A_pad), jnp.float32).at[:, :A].set(params["b3"])

    rows = T_pad * B_pad
    rb = _row_tile(rows)
    rows_p = _round_up(rows, rb)
    h2d = hs.reshape(rows, H)
    if rows_p > rows:
        h2d = jnp.pad(h2d, ((0, rows_p - rows), (0, 0)))

    q2d = pl.pallas_call(
        _head_kernel,
        out_shape=jax.ShapeDtypeStruct((rows_p, A_pad), jnp.float32),
        grid_spec=pltpu.PrefetchScalarGridSpec(
            num_scalar_prefetch=0,
            grid=(rows_p // rb,),
            in_specs=[
                pl.BlockSpec((rb, H), lambda r: (r, 0)),
                pl.BlockSpec((H, H), lambda r: (0, 0)),
                pl.BlockSpec((1, H), lambda r: (0, 0)),
                pl.BlockSpec((H, A_pad), lambda r: (0, 0)),
                pl.BlockSpec((1, A_pad), lambda r: (0, 0)),
            ],
            out_specs=pl.BlockSpec((rb, A_pad), lambda r: (r, 0)),
        ),
        compiler_params=pltpu.CompilerParams(dimension_semantics=("parallel",)),
    )(h2d, w2_bf, params["b2"], w3p, b3p)

    q = q2d[:rows].reshape(T_pad, B_pad, A_pad)
    return q[:T_out, :B, :A]


def reference(params, tokens, seq_lengths):
    """Pure-JAX (f32) reference reproducing the PyTorch forward."""
    emb = jnp.take(params["embedding"], tokens, axis=0).astype(jnp.float32)
    seq_lengths = np.asarray(seq_lengths)
    T_out = int(seq_lengths.max())
    emb = emb[:T_out]
    B = emb.shape[1]
    H = HIDDEN

    def step(carry, x_t):
        h, c = carry
        gates = x_t @ params["wih"] + h @ params["whh"] + params["b_lstm"][0]
        i = jax.nn.sigmoid(gates[:, :H])
        f = jax.nn.sigmoid(gates[:, H:2 * H])
        g = jnp.tanh(gates[:, 2 * H:3 * H])
        o = jax.nn.sigmoid(gates[:, 3 * H:])
        c = f * c + i * g
        h = o * jnp.tanh(c)
        return (h, c), h

    init = (jnp.zeros((B, H), jnp.float32), jnp.zeros((B, H), jnp.float32))
    _, hs = jax.lax.scan(step, init, emb)
    lens = jnp.asarray(seq_lengths, jnp.int32)[None, :, None]
    tidx = jnp.arange(T_out, dtype=jnp.int32)[:, None, None]
    hs = jnp.where(tidx < lens, hs, 0.0)
    z = jax.nn.relu(hs @ params["w2"] + params["b2"][0])
    return z @ params["w3"] + params["b3"][0]


def init_params(key, vocab, n_actions):
    ks = jax.random.split(key, 9)
    k_lstm = 1.0 / np.sqrt(HIDDEN)
    k_lin = 1.0 / np.sqrt(HIDDEN)
    u = lambda k, shp, s: jax.random.uniform(k, shp, jnp.float32, -s, s)
    return {
        "embedding": jax.random.normal(ks[0], (vocab, EMBED), jnp.float32),
        "wih": u(ks[1], (EMBED, 4 * HIDDEN), k_lstm),            # W_ih^T
        "whh": u(ks[2], (HIDDEN, 4 * HIDDEN), k_lstm),           # W_hh^T
        "b_lstm": u(ks[3], (1, 4 * HIDDEN), k_lstm) + u(ks[4], (1, 4 * HIDDEN), k_lstm),
        "w2": u(ks[5], (HIDDEN, HIDDEN), k_lin),
        "b2": u(ks[6], (1, HIDDEN), k_lin),
        "w3": u(ks[7], (HIDDEN, n_actions), k_lin),
        "b3": u(ks[8], (1, n_actions), k_lin),
    }


if __name__ == "__main__":
    key = jax.random.PRNGKey(0)
    VOCAB = 16       # env.single_observation_space.n
    N_ACTIONS = 4    # env.single_action_space.n
    T, B = 8, 2

    pkey, tkey = jax.random.split(key)
    params = init_params(pkey, VOCAB, N_ACTIONS)
    tokens = jax.random.randint(tkey, (T, B), 0, VOCAB, dtype=jnp.int32)
    seq_lengths = np.array([8, 5], dtype=np.int32)   # lengths <= T, max == T here

    q = jax.block_until_ready(soft_q_forward(params, tokens, seq_lengths))
    q_ref = jax.block_until_ready(reference(params, tokens, seq_lengths))

    # bf16 matmul operands (f32 accumulation) vs. f32 reference -> loose tolerance.
    np.testing.assert_allclose(np.asarray(q), np.asarray(q_ref), rtol=3e-2, atol=3e-2)

    print("KERNEL_OK")
</pallas_src>

<mosaic_0001>
module attributes {stable_mosaic.version = 11 : i64} {
  func.func @_lstm_block_kernel(%arg0: i32, %arg1: i32, %arg2: memref<8x8x256xbf16, #tpu.memory_space<vmem>>, %arg3: memref<256x1024xbf16, #tpu.memory_space<vmem>>, %arg4: memref<256x1024xbf16, #tpu.memory_space<vmem>>, %arg5: memref<1x1024xf32, #tpu.memory_space<vmem>>, %arg6: memref<8x1xi32, #tpu.memory_space<vmem>>, %arg7: memref<8x8x256xbf16, #tpu.memory_space<vmem>>, %arg8: memref<8x8x1024xf32, #tpu.memory_space<vmem>>, %arg9: memref<8x256xf32, #tpu.memory_space<vmem>>, %arg10: memref<8x256xf32, #tpu.memory_space<vmem>>) attributes {dimension_semantics = [#tpu.dimension_semantics<parallel>, #tpu.dimension_semantics<arbitrary>], iteration_bounds = array<i64: 1, 1>, scalar_prefetch = 0 : i64, scratch_operands = 3 : i64, tpu.core_type = #tpu.core_type<tc>, window_params = [{transform_indices = @transform_0, window_bounds = array<i64: 8, 8, 256>}, {pipeline_mode = #tpu.pipeline_mode<synchronous>, transform_indices = @transform_1, window_bounds = array<i64: 256, 1024>}, {pipeline_mode = #tpu.pipeline_mode<synchronous>, transform_indices = @transform_2, window_bounds = array<i64: 256, 1024>}, {pipeline_mode = #tpu.pipeline_mode<synchronous>, transform_indices = @transform_3, window_bounds = array<i64: 1, 1024>}, {transform_indices = @transform_4, window_bounds = array<i64: 8, 1>}, {transform_indices = @transform_5, window_bounds = array<i64: 8, 8, 256>}]} {
    %c0_i32 = arith.constant 0 : i32
    %0 = arith.cmpi eq, %arg1, %c0_i32 : i32
    %1 = arith.extui %0 : i1 to i32
    %c0_i32_0 = arith.constant 0 : i32
    %2 = arith.cmpi ne, %1, %c0_i32_0 : i32
    scf.if %2 {
      %cst_96 = arith.constant 0.000000e+00 : f32
      %363 = vector.broadcast %cst_96 : f32 to vector<8x256xf32>
      %c0_97 = arith.constant 0 : index
      %c0_98 = arith.constant 0 : index
      %364 = vector.load %arg9[%c0_97, %c0_98] : memref<8x256xf32, #tpu.memory_space<vmem>>, vector<8x256xf32>
      tpu.vector_store %arg9[%c0_97, %c0_98], %363 {strides = array<i32>} : memref<8x256xf32, #tpu.memory_space<vmem>>, vector<8x256xf32>,
      %cst_99 = arith.constant 0.000000e+00 : f32
      %365 = vector.broadcast %cst_99 : f32 to vector<8x256xf32>
      %c0_100 = arith.constant 0 : index
      %c0_101 = arith.constant 0 : index
      %366 = vector.load %arg10[%c0_100, %c0_101] : memref<8x256xf32, #tpu.memory_space<vmem>>, vector<8x256xf32>
      tpu.vector_store %arg10[%c0_100, %c0_101], %365 {strides = array<i32>} : memref<8x256xf32, #tpu.memory_space<vmem>>, vector<8x256xf32>,
    } else {
    }
    %c0 = arith.constant 0 : index
    %c0_1 = arith.constant 0 : index
    %c0_2 = arith.constant 0 : index
    %3 = vector.load %arg2[%c0, %c0_1, %c0_2] : memref<8x8x256xbf16, #tpu.memory_space<vmem>>, vector<8x8x256xbf16>
    %4 = vector.shape_cast %3 : vector<8x8x256xbf16> to vector<64x256xbf16>
    %c0_3 = arith.constant 0 : index
    %c0_4 = arith.constant 0 : index
    %5 = vector.load %arg3[%c0_3, %c0_4] : memref<256x1024xbf16, #tpu.memory_space<vmem>>, vector<256x1024xbf16>
    %cst = arith.constant dense<0.000000e+00> : vector<64x1024xf32>
    %6 = tpu.matmul %4, %5, %cst {dimension_numbers = #tpu.dot_dimension_numbers<[1], [0], [0], [1], [0, 0, 1, 1], [], []>} : vector<64x256xbf16>, vector<256x1024xbf16>, vector<64x1024xf32> -> vector<64x1024xf32>
    %c0_5 = arith.constant 0 : index
    %c0_6 = arith.constant 0 : index
    %7 = vector.load %arg5[%c0_5, %c0_6] : memref<1x1024xf32, #tpu.memory_space<vmem>>, vector<1x1024xf32>
    %8 = vector.broadcast %7 : vector<1x1024xf32> to vector<64x1024xf32>
    %9 = arith.addf %6, %8 : vector<64x1024xf32>
    %10 = vector.shape_cast %9 : vector<64x1024xf32> to vector<8x8x1024xf32>
    %c0_7 = arith.constant 0 : index
    %c0_8 = arith.constant 0 : index
    %c0_9 = arith.constant 0 : index
    %11 = vector.load %arg8[%c0_7, %c0_8, %c0_9] : memref<8x8x1024xf32, #tpu.memory_space<vmem>>, vector<8x8x1024xf32>
    tpu.vector_store %arg8[%c0_7, %c0_8, %c0_9], %10 {strides = array<i32>} : memref<8x8x1024xf32, #tpu.memory_space<vmem>>, vector<8x8x1024xf32>,
    %c0_10 = arith.constant 0 : index
    %c0_11 = arith.constant 0 : index
    %12 = vector.load %arg4[%c0_10, %c0_11] : memref<256x1024xbf16, #tpu.memory_space<vmem>>, vector<256x1024xbf16>
    %c0_12 = arith.constant 0 : index
    %c0_13 = arith.constant 0 : index
    %13 = vector.load %arg6[%c0_12, %c0_13] : memref<8x1xi32, #tpu.memory_space<vmem>>, vector<8x1xi32>
    %c8_i32 = arith.constant 8 : i32
    %14 = arith.muli %arg1, %c8_i32 : i32
    %c0_14 = arith.constant 0 : index
    %c0_15 = arith.constant 0 : index
    %15 = vector.load %arg9[%c0_14, %c0_15] : memref<8x256xf32, #tpu.memory_space<vmem>>, vector<8x256xf32>
    %c0_16 = arith.constant 0 : index
    %c0_17 = arith.constant 0 : index
    %16 = vector.load %arg10[%c0_16, %c0_17] : memref<8x256xf32, #tpu.memory_space<vmem>>, vector<8x256xf32>
    %c0_i32_18 = arith.constant 0 : i32
    %17 = arith.index_cast %c0_i32_18 : i32 to index
    %c0_19 = arith.constant 0 : index
    %c0_20 = arith.constant 0 : index
    %18 = vector.load %arg8[%17, %c0_19, %c0_20] : memref<8x8x1024xf32, #tpu.memory_space<vmem>>, vector<1x8x1024xf32>
    %19 = vector.shape_cast %18 : vector<1x8x1024xf32> to vector<8x1024xf32>
    %20 = arith.truncf %15 : vector<8x256xf32> to vector<8x256xbf16>
    %cst_21 = arith.constant dense<0.000000e+00> : vector<8x1024xf32>
    %21 = tpu.matmul %20, %12, %cst_21 {dimension_numbers = #tpu.dot_dimension_numbers<[1], [0], [0], [1], [0, 0, 1, 1], [], []>} : vector<8x256xbf16>, vector<256x1024xbf16>, vector<8x1024xf32> -> vector<8x1024xf32>
    %22 = arith.addf %19, %21 : vector<8x1024xf32>
    %23 = vector.extract_strided_slice %22 {offsets = [0, 0], sizes = [8, 256], strides = [1, 1]} : vector<8x1024xf32> to vector<8x256xf32>
    %24 = arith.negf %23 : vector<8x256xf32>
    %25 = math.exp %24 : vector<8x256xf32>
    %cst_22 = arith.constant 1.000000e+00 : f32
    %26 = vector.broadcast %cst_22 : f32 to vector<8x256xf32>
    %27 = arith.addf %26, %25 : vector<8x256xf32>
    %28 = arith.divf %26, %27 : vector<8x256xf32>
    %29 = vector.extract_strided_slice %22 {offsets = [0, 256], sizes = [8, 256], strides = [1, 1]} : vector<8x1024xf32> to vector<8x256xf32>
    %30 = arith.negf %29 : vector<8x256xf32>
    %31 = math.exp %30 : vector<8x256xf32>
    %cst_23 = arith.constant 1.000000e+00 : f32
    %32 = vector.broadcast %cst_23 : f32 to vector<8x256xf32>
    %33 = arith.addf %32, %31 : vector<8x256xf32>
    %34 = arith.divf %32, %33 : vector<8x256xf32>
    %35 = vector.extract_strided_slice %22 {offsets = [0, 512], sizes = [8, 256], strides = [1, 1]} : vector<8x1024xf32> to vector<8x256xf32>
    %36 = math.tanh %35 : vector<8x256xf32>
    %37 = vector.extract_strided_slice %22 {offsets = [0, 768], sizes = [8, 256], strides = [1, 1]} : vector<8x1024xf32> to vector<8x256xf32>
    %38 = arith.negf %37 : vector<8x256xf32>
    %39 = math.exp %38 : vector<8x256xf32>
    %cst_24 = arith.constant 1.000000e+00 : f32
    %40 = vector.broadcast %cst_24 : f32 to vector<8x256xf32>
    %41 = arith.addf %40, %39 : vector<8x256xf32>
    %42 = arith.divf %40, %41 : vector<8x256xf32>
    %43 = arith.mulf %34, %16 : vector<8x256xf32>
    %44 = arith.mulf %28, %36 : vector<8x256xf32>
    %45 = arith.addf %43, %44 : vector<8x256xf32>
    %46 = math.tanh %45 : vector<8x256xf32>
    %47 = arith.mulf %42, %46 : vector<8x256xf32>
    %48 = arith.addi %14, %c0_i32_18 : i32
    %49 = vector.broadcast %48 : i32 to vector<8x1xi32>
    %50 = arith.cmpi slt, %49, %13 : vector<8x1xi32>
    %cst_25 = arith.constant 0.000000e+00 : f32
    %51 = vector.shape_cast %50 : vector<8x1xi1> to vector<8x1xi1>
    %52 = vector.broadcast %51 : vector<8x1xi1> to vector<8x256xi1>
    %53 = vector.broadcast %cst_25 : f32 to vector<8x256xf32>
    %54 = arith.select %52, %47, %53 : vector<8x256xi1>, vector<8x256xf32>
    %55 = arith.truncf %54 : vector<8x256xf32> to vector<8x256xbf16>
    %56 = arith.index_cast %c0_i32_18 : i32 to index
    %c0_26 = arith.constant 0 : index
    %c0_27 = arith.constant 0 : index
    %57 = vector.load %arg7[%56, %c0_26, %c0_27] : memref<8x8x256xbf16, #tpu.memory_space<vmem>>, vector<1x8x256xbf16>
    %58 = vector.shape_cast %57 : vector<1x8x256xbf16> to vector<8x256xbf16>
    %59 = vector.shape_cast %55 : vector<8x256xbf16> to vector<1x8x256xbf16>
    tpu.vector_store %arg7[%56, %c0_26, %c0_27], %59 {strides = array<i32>} : memref<8x8x256xbf16, #tpu.memory_space<vmem>>, vector<1x8x256xbf16>,
    %c1_i32 = arith.constant 1 : i32
    %60 = arith.index_cast %c1_i32 : i32 to index
    %c0_28 = arith.constant 0 : index
    %c0_29 = arith.constant 0 : index
    %61 = vector.load %arg8[%60, %c0_28, %c0_29] : memref<8x8x1024xf32, #tpu.memory_space<vmem>>, vector<1x8x1024xf32>
    %62 = vector.shape_cast %61 : vector<1x8x1024xf32> to vector<8x1024xf32>
    %63 = arith.truncf %47 : vector<8x256xf32> to vector<8x256xbf16>
    %cst_30 = arith.constant dense<0.000000e+00> : vector<8x1024xf32>
    %64 = tpu.matmul %63, %12, %cst_30 {dimension_numbers = #tpu.dot_dimension_numbers<[1], [0], [0], [1], [0, 0, 1, 1], [], []>} : vector<8x256xbf16>, vector<256x1024xbf16>, vector<8x1024xf32> -> vector<8x1024xf32>
    %65 = arith.addf %62, %64 : vector<8x1024xf32>
    %66 = vector.extract_strided_slice %65 {offsets = [0, 0], sizes = [8, 256], strides = [1, 1]} : vector<8x1024xf32> to vector<8x256xf32>
    %67 = arith.negf %66 : vector<8x256xf32>
    %68 = math.exp %67 : vector<8x256xf32>
    %cst_31 = arith.constant 1.000000e+00 : f32
    %69 = vector.broadcast %cst_31 : f32 to vector<8x256xf32>
    %70 = arith.addf %69, %68 : vector<8x256xf32>
    %71 = arith.divf %69, %70 : vector<8x256xf32>
    %72 = vector.extract_strided_slice %65 {offsets = [0, 256], sizes = [8, 256], strides = [1, 1]} : vector<8x1024xf32> to vector<8x256xf32>
    %73 = arith.negf %72 : vector<8x256xf32>
    %74 = math.exp %73 : vector<8x256xf32>
    %cst_32 = arith.constant 1.000000e+00 : f32
    %75 = vector.broadcast %cst_32 : f32 to vector<8x256xf32>
    %76 = arith.addf %75, %74 : vector<8x256xf32>
    %77 = arith.divf %75, %76 : vector<8x256xf32>
    %78 = vector.extract_strided_slice %65 {offsets = [0, 512], sizes = [8, 256], strides = [1, 1]} : vector<8x1024xf32> to vector<8x256xf32>
    %79 = math.tanh %78 : vector<8x256xf32>
    %80 = vector.extract_strided_slice %65 {offsets = [0, 768], sizes = [8, 256], strides = [1, 1]} : vector<8x1024xf32> to vector<8x256xf32>
    %81 = arith.negf %80 : vector<8x256xf32>
    %82 = math.exp %81 : vector<8x256xf32>
    %cst_33 = arith.constant 1.000000e+00 : f32
    %83 = vector.broadcast %cst_33 : f32 to vector<8x256xf32>
    %84 = arith.addf %83, %82 : vector<8x256xf32>
    %85 = arith.divf %83, %84 : vector<8x256xf32>
    %86 = arith.mulf %77, %45 : vector<8x256xf32>
    %87 = arith.mulf %71, %79 : vector<8x256xf32>
    %88 = arith.addf %86, %87 : vector<8x256xf32>
    %89 = math.tanh %88 : vector<8x256xf32>
    %90 = arith.mulf %85, %89 : vector<8x256xf32>
    %91 = arith.addi %14, %c1_i32 : i32
    %92 = vector.broadcast %91 : i32 to vector<8x1xi32>
    %93 = arith.cmpi slt, %92, %13 : vector<8x1xi32>
    %cst_34 = arith.constant 0.000000e+00 : f32
    %94 = vector.shape_cast %93 : vector<8x1xi1> to vector<8x1xi1>
    %95 = vector.broadcast %94 : vector<8x1xi1> to vector<8x256xi1>
    %96 = vector.broadcast %cst_34 : f32 to vector<8x256xf32>
    %97 = arith.select %95, %90, %96 : vector<8x256xi1>, vector<8x256xf32>
    %98 = arith.truncf %97 : vector<8x256xf32> to vector<8x256xbf16>
    %99 = arith.index_cast %c1_i32 : i32 to index
    %c0_35 = arith.constant 0 : index
    %c0_36 = arith.constant 0 : index
    %100 = vector.load %arg7[%99, %c0_35, %c0_36] : memref<8x8x256xbf16, #tpu.memory_space<vmem>>, vector<1x8x256xbf16>
    %101 = vector.shape_cast %100 : vector<1x8x256xbf16> to vector<8x256xbf16>
    %102 = vector.shape_cast %98 : vector<8x256xbf16> to vector<1x8x256xbf16>
    tpu.vector_store %arg7[%99, %c0_35, %c0_36], %102 {strides = array<i32>} : memref<8x8x256xbf16, #tpu.memory_space<vmem>>, vector<1x8x256xbf16>,
    %c2_i32 = arith.constant 2 : i32
    %103 = arith.index_cast %c2_i32 : i32 to index
    %c0_37 = arith.constant 0 : index
    %c0_38 = arith.constant 0 : index
    %104 = vector.load %arg8[%103, %c0_37, %c0_38] : memref<8x8x1024xf32, #tpu.memory_space<vmem>>, vector<1x8x1024xf32>
    %105 = vector.shape_cast %104 : vector<1x8x1024xf32> to vector<8x1024xf32>
    %106 = arith.truncf %90 : vector<8x256xf32> to vector<8x256xbf16>
    %cst_39 = arith.constant dense<0.000000e+00> : vector<8x1024xf32>
    %107 = tpu.matmul %106, %12, %cst_39 {dimension_numbers = #tpu.dot_dimension_numbers<[1], [0], [0], [1], [0, 0, 1, 1], [], []>} : vector<8x256xbf16>, vector<256x1024xbf16>, vector<8x1024xf32> -> vector<8x1024xf32>
    %108 = arith.addf %105, %107 : vector<8x1024xf32>
    %109 = vector.extract_strided_slice %108 {offsets = [0, 0], sizes = [8, 256], strides = [1, 1]} : vector<8x1024xf32> to vector<8x256xf32>
    %110 = arith.negf %109 : vector<8x256xf32>
    %111 = math.exp %110 : vector<8x256xf32>
    %cst_40 = arith.constant 1.000000e+00 : f32
    %112 = vector.broadcast %cst_40 : f32 to vector<8x256xf32>
    %113 = arith.addf %112, %111 : vector<8x256xf32>
    %114 = arith.divf %112, %113 : vector<8x256xf32>
    %115 = vector.extract_strided_slice %108 {offsets = [0, 256], sizes = [8, 256], strides = [1, 1]} : vector<8x1024xf32> to vector<8x256xf32>
    %116 = arith.negf %115 : vector<8x256xf32>
    %117 = math.exp %116 : vector<8x256xf32>
    %cst_41 = arith.constant 1.000000e+00 : f32
    %118 = vector.broadcast %cst_41 : f32 to vector<8x256xf32>
    %119 = arith.addf %118, %117 : vector<8x256xf32>
    %120 = arith.divf %118, %119 : vector<8x256xf32>
    %121 = vector.extract_strided_slice %108 {offsets = [0, 512], sizes = [8, 256], strides = [1, 1]} : vector<8x1024xf32> to vector<8x256xf32>
    %122 = math.tanh %121 : vector<8x256xf32>
    %123 = vector.extract_strided_slice %108 {offsets = [0, 768], sizes = [8, 256], strides = [1, 1]} : vector<8x1024xf32> to vector<8x256xf32>
    %124 = arith.negf %123 : vector<8x256xf32>
    %125 = math.exp %124 : vector<8x256xf32>
    %cst_42 = arith.constant 1.000000e+00 : f32
    %126 = vector.broadcast %cst_42 : f32 to vector<8x256xf32>
    %127 = arith.addf %126, %125 : vector<8x256xf32>
    %128 = arith.divf %126, %127 : vector<8x256xf32>
    %129 = arith.mulf %120, %88 : vector<8x256xf32>
    %130 = arith.mulf %114, %122 : vector<8x256xf32>
    %131 = arith.addf %129, %130 : vector<8x256xf32>
    %132 = math.tanh %131 : vector<8x256xf32>
    %133 = arith.mulf %128, %132 : vector<8x256xf32>
    %134 = arith.addi %14, %c2_i32 : i32
    %135 = vector.broadcast %134 : i32 to vector<8x1xi32>
    %136 = arith.cmpi slt, %135, %13 : vector<8x1xi32>
    %cst_43 = arith.constant 0.000000e+00 : f32
    %137 = vector.shape_cast %136 : vector<8x1xi1> to vector<8x1xi1>
    %138 = vector.broadcast %137 : vector<8x1xi1> to vector<8x256xi1>
    %139 = vector.broadcast %cst_43 : f32 to vector<8x256xf32>
    %140 = arith.select %138, %133, %139 : vector<8x256xi1>, vector<8x256xf32>
    %141 = arith.truncf %140 : vector<8x256xf32> to vector<8x256xbf16>
    %142 = arith.index_cast %c2_i32 : i32 to index
    %c0_44 = arith.constant 0 : index
    %c0_45 = arith.constant 0 : index
    %143 = vector.load %arg7[%142, %c0_44, %c0_45] : memref<8x8x256xbf16, #tpu.memory_space<vmem>>, vector<1x8x256xbf16>
    %144 = vector.shape_cast %143 : vector<1x8x256xbf16> to vector<8x256xbf16>
    %145 = vector.shape_cast %141 : vector<8x256xbf16> to vector<1x8x256xbf16>
    tpu.vector_store %arg7[%142, %c0_44, %c0_45], %145 {strides = array<i32>} : memref<8x8x256xbf16, #tpu.memory_space<vmem>>, vector<1x8x256xbf16>,
    %c3_i32 = arith.constant 3 : i32
    %146 = arith.index_cast %c3_i32 : i32 to index
    %c0_46 = arith.constant 0 : index
    %c0_47 = arith.constant 0 : index
    %147 = vector.load %arg8[%146, %c0_46, %c0_47] : memref<8x8x1024xf32, #tpu.memory_space<vmem>>, vector<1x8x1024xf32>
    %148 = vector.shape_cast %147 : vector<1x8x1024xf32> to vector<8x1024xf32>
    %149 = arith.truncf %133 : vector<8x256xf32> to vector<8x256xbf16>
    %cst_48 = arith.constant dense<0.000000e+00> : vector<8x1024xf32>
    %150 = tpu.matmul %149, %12, %cst_48 {dimension_numbers = #tpu.dot_dimension_numbers<[1], [0], [0], [1], [0, 0, 1, 1], [], []>} : vector<8x256xbf16>, vector<256x1024xbf16>, vector<8x1024xf32> -> vector<8x1024xf32>
    %151 = arith.addf %148, %150 : vector<8x1024xf32>
    %152 = vector.extract_strided_slice %151 {offsets = [0, 0], sizes = [8, 256], strides = [1, 1]} : vector<8x1024xf32> to vector<8x256xf32>
    %153 = arith.negf %152 : vector<8x256xf32>
    %154 = math.exp %153 : vector<8x256xf32>
    %cst_49 = arith.constant 1.000000e+00 : f32
    %155 = vector.broadcast %cst_49 : f32 to vector<8x256xf32>
    %156 = arith.addf %155, %154 : vector<8x256xf32>
    %157 = arith.divf %155, %156 : vector<8x256xf32>
    %158 = vector.extract_strided_slice %151 {offsets = [0, 256], sizes = [8, 256], strides = [1, 1]} : vector<8x1024xf32> to vector<8x256xf32>
    %159 = arith.negf %158 : vector<8x256xf32>
    %160 = math.exp %159 : vector<8x256xf32>
    %cst_50 = arith.constant 1.000000e+00 : f32
    %161 = vector.broadcast %cst_50 : f32 to vector<8x256xf32>
    %162 = arith.addf %161, %160 : vector<8x256xf32>
    %163 = arith.divf %161, %162 : vector<8x256xf32>
    %164 = vector.extract_strided_slice %151 {offsets = [0, 512], sizes = [8, 256], strides = [1, 1]} : vector<8x1024xf32> to vector<8x256xf32>
    %165 = math.tanh %164 : vector<8x256xf32>
    %166 = vector.extract_strided_slice %151 {offsets = [0, 768], sizes = [8, 256], strides = [1, 1]} : vector<8x1024xf32> to vector<8x256xf32>
    %167 = arith.negf %166 : vector<8x256xf32>
    %168 = math.exp %167 : vector<8x256xf32>
    %cst_51 = arith.constant 1.000000e+00 : f32
    %169 = vector.broadcast %cst_51 : f32 to vector<8x256xf32>
    %170 = arith.addf %169, %168 : vector<8x256xf32>
    %171 = arith.divf %169, %170 : vector<8x256xf32>
    %172 = arith.mulf %163, %131 : vector<8x256xf32>
    %173 = arith.mulf %157, %165 : vector<8x256xf32>
    %174 = arith.addf %172, %173 : vector<8x256xf32>
    %175 = math.tanh %174 : vector<8x256xf32>
    %176 = arith.mulf %171, %175 : vector<8x256xf32>
    %177 = arith.addi %14, %c3_i32 : i32
    %178 = vector.broadcast %177 : i32 to vector<8x1xi32>
    %179 = arith.cmpi slt, %178, %13 : vector<8x1xi32>
    %cst_52 = arith.constant 0.000000e+00 : f32
    %180 = vector.shape_cast %179 : vector<8x1xi1> to vector<8x1xi1>
    %181 = vector.broadcast %180 : vector<8x1xi1> to vector<8x256xi1>
    %182 = vector.broadcast %cst_52 : f32 to vector<8x256xf32>
    %183 = arith.select %181, %176, %182 : vector<8x256xi1>, vector<8x256xf32>
    %184 = arith.truncf %183 : vector<8x256xf32> to vector<8x256xbf16>
    %185 = arith.index_cast %c3_i32 : i32 to index
    %c0_53 = arith.constant 0 : index
    %c0_54 = arith.constant 0 : index
    %186 = vector.load %arg7[%185, %c0_53, %c0_54] : memref<8x8x256xbf16, #tpu.memory_space<vmem>>, vector<1x8x256xbf16>
    %187 = vector.shape_cast %186 : vector<1x8x256xbf16> to vector<8x256xbf16>
    %188 = vector.shape_cast %184 : vector<8x256xbf16> to vector<1x8x256xbf16>
    tpu.vector_store %arg7[%185, %c0_53, %c0_54], %188 {strides = array<i32>} : memref<8x8x256xbf16, #tpu.memory_space<vmem>>, vector<1x8x256xbf16>,
    %c4_i32 = arith.constant 4 : i32
    %189 = arith.index_cast %c4_i32 : i32 to index
    %c0_55 = arith.constant 0 : index
    %c0_56 = arith.constant 0 : index
    %190 = vector.load %arg8[%189, %c0_55, %c0_56] : memref<8x8x1024xf32, #tpu.memory_space<vmem>>, vector<1x8x1024xf32>
    %191 = vector.shape_cast %190 : vector<1x8x1024xf32> to vector<8x1024xf32>
    %192 = arith.truncf %176 : vector<8x256xf32> to vector<8x256xbf16>
    %cst_57 = arith.constant dense<0.000000e+00> : vector<8x1024xf32>
    %193 = tpu.matmul %192, %12, %cst_57 {dimension_numbers = #tpu.dot_dimension_numbers<[1], [0], [0], [1], [0, 0, 1, 1], [], []>} : vector<8x256xbf16>, vector<256x1024xbf16>, vector<8x1024xf32> -> vector<8x1024xf32>
    %194 = arith.addf %191, %193 : vector<8x1024xf32>
    %195 = vector.extract_strided_slice %194 {offsets = [0, 0], sizes = [8, 256], strides = [1, 1]} : vector<8x1024xf32> to vector<8x256xf32>
    %196 = arith.negf %195 : vector<8x256xf32>
    %197 = math.exp %196 : vector<8x256xf32>
    %cst_58 = arith.constant 1.000000e+00 : f32
    %198 = vector.broadcast %cst_58 : f32 to vector<8x256xf32>
    %199 = arith.addf %198, %197 : vector<8x256xf32>
    %200 = arith.divf %198, %199 : vector<8x256xf32>
    %201 = vector.extract_strided_slice %194 {offsets = [0, 256], sizes = [8, 256], strides = [1, 1]} : vector<8x1024xf32> to vector<8x256xf32>
    %202 = arith.negf %201 : vector<8x256xf32>
    %203 = math.exp %202 : vector<8x256xf32>
    %cst_59 = arith.constant 1.000000e+00 : f32
    %204 = vector.broadcast %cst_59 : f32 to vector<8x256xf32>
    %205 = arith.addf %204, %203 : vector<8x256xf32>
    %206 = arith.divf %204, %205 : vector<8x256xf32>
    %207 = vector.extract_strided_slice %194 {offsets = [0, 512], sizes = [8, 256], strides = [1, 1]} : vector<8x1024xf32> to vector<8x256xf32>
    %208 = math.tanh %207 : vector<8x256xf32>
    %209 = vector.extract_strided_slice %194 {offsets = [0, 768], sizes = [8, 256], strides = [1, 1]} : vector<8x1024xf32> to vector<8x256xf32>
    %210 = arith.negf %209 : vector<8x256xf32>
    %211 = math.exp %210 : vector<8x256xf32>
    %cst_60 = arith.constant 1.000000e+00 : f32
    %212 = vector.broadcast %cst_60 : f32 to vector<8x256xf32>
    %213 = arith.addf %212, %211 : vector<8x256xf32>
    %214 = arith.divf %212, %213 : vector<8x256xf32>
    %215 = arith.mulf %206, %174 : vector<8x256xf32>
    %216 = arith.mulf %200, %208 : vector<8x256xf32>
    %217 = arith.addf %215, %216 : vector<8x256xf32>
    %218 = math.tanh %217 : vector<8x256xf32>
    %219 = arith.mulf %214, %218 : vector<8x256xf32>
    %220 = arith.addi %14, %c4_i32 : i32
    %221 = vector.broadcast %220 : i32 to vector<8x1xi32>
    %222 = arith.cmpi slt, %221, %13 : vector<8x1xi32>
    %cst_61 = arith.constant 0.000000e+00 : f32
    %223 = vector.shape_cast %222 : vector<8x1xi1> to vector<8x1xi1>
    %224 = vector.broadcast %223 : vector<8x1xi1> to vector<8x256xi1>
    %225 = vector.broadcast %cst_61 : f32 to vector<8x256xf32>
    %226 = arith.select %224, %219, %225 : vector<8x256xi1>, vector<8x256xf32>
    %227 = arith.truncf %226 : vector<8x256xf32> to vector<8x256xbf16>
    %228 = arith.index_cast %c4_i32 : i32 to index
    %c0_62 = arith.constant 0 : index
    %c0_63 = arith.constant 0 : index
    %229 = vector.load %arg7[%228, %c0_62, %c0_63] : memref<8x8x256xbf16, #tpu.memory_space<vmem>>, vector<1x8x256xbf16>
    %230 = vector.shape_cast %229 : vector<1x8x256xbf16> to vector<8x256xbf16>
    %231 = vector.shape_cast %227 : vector<8x256xbf16> to vector<1x8x256xbf16>
    tpu.vector_store %arg7[%228, %c0_62, %c0_63], %231 {strides = array<i32>} : memref<8x8x256xbf16, #tpu.memory_space<vmem>>, vector<1x8x256xbf16>,
    %c5_i32 = arith.constant 5 : i32
    %232 = arith.index_cast %c5_i32 : i32 to index
    %c0_64 = arith.constant 0 : index
    %c0_65 = arith.constant 0 : index
    %233 = vector.load %arg8[%232, %c0_64, %c0_65] : memref<8x8x1024xf32, #tpu.memory_space<vmem>>, vector<1x8x1024xf32>
    %234 = vector.shape_cast %233 : vector<1x8x1024xf32> to vector<8x1024xf32>
    %235 = arith.truncf %219 : vector<8x256xf32> to vector<8x256xbf16>
    %cst_66 = arith.constant dense<0.000000e+00> : vector<8x1024xf32>
    %236 = tpu.matmul %235, %12, %cst_66 {dimension_numbers = #tpu.dot_dimension_numbers<[1], [0], [0], [1], [0, 0, 1, 1], [], []>} : vector<8x256xbf16>, vector<256x1024xbf16>, vector<8x1024xf32> -> vector<8x1024xf32>
    %237 = arith.addf %234, %236 : vector<8x1024xf32>
    %238 = vector.extract_strided_slice %237 {offsets = [0, 0], sizes = [8, 256], strides = [1, 1]} : vector<8x1024xf32> to vector<8x256xf32>
    %239 = arith.negf %238 : vector<8x256xf32>
    %240 = math.exp %239 : vector<8x256xf32>
    %cst_67 = arith.constant 1.000000e+00 : f32
    %241 = vector.broadcast %cst_67 : f32 to vector<8x256xf32>
    %242 = arith.addf %241, %240 : vector<8x256xf32>
    %243 = arith.divf %241, %242 : vector<8x256xf32>
    %244 = vector.extract_strided_slice %237 {offsets = [0, 256], sizes = [8, 256], strides = [1, 1]} : vector<8x1024xf32> to vector<8x256xf32>
    %245 = arith.negf %244 : vector<8x256xf32>
    %246 = math.exp %245 : vector<8x256xf32>
    %cst_68 = arith.constant 1.000000e+00 : f32
    %247 = vector.broadcast %cst_68 : f32 to vector<8x256xf32>
    %248 = arith.addf %247, %246 : vector<8x256xf32>
    %249 = arith.divf %247, %248 : vector<8x256xf32>
    %250 = vector.extract_strided_slice %237 {offsets = [0, 512], sizes = [8, 256], strides = [1, 1]} : vector<8x1024xf32> to vector<8x256xf32>
    %251 = math.tanh %250 : vector<8x256xf32>
    %252 = vector.extract_strided_slice %237 {offsets = [0, 768], sizes = [8, 256], strides = [1, 1]} : vector<8x1024xf32> to vector<8x256xf32>
    %253 = arith.negf %252 : vector<8x256xf32>
    %254 = math.exp %253 : vector<8x256xf32>
    %cst_69 = arith.constant 1.000000e+00 : f32
    %255 = vector.broadcast %cst_69 : f32 to vector<8x256xf32>
    %256 = arith.addf %255, %254 : vector<8x256xf32>
    %257 = arith.divf %255, %256 : vector<8x256xf32>
    %258 = arith.mulf %249, %217 : vector<8x256xf32>
    %259 = arith.mulf %243, %251 : vector<8x256xf32>
    %260 = arith.addf %258, %259 : vector<8x256xf32>
    %261 = math.tanh %260 : vector<8x256xf32>
    %262 = arith.mulf %257, %261 : vector<8x256xf32>
    %263 = arith.addi %14, %c5_i32 : i32
    %264 = vector.broadcast %263 : i32 to vector<8x1xi32>
    %265 = arith.cmpi slt, %264, %13 : vector<8x1xi32>
    %cst_70 = arith.constant 0.000000e+00 : f32
    %266 = vector.shape_cast %265 : vector<8x1xi1> to vector<8x1xi1>
    %267 = vector.broadcast %266 : vector<8x1xi1> to vector<8x256xi1>
    %268 = vector.broadcast %cst_70 : f32 to vector<8x256xf32>
    %269 = arith.select %267, %262, %268 : vector<8x256xi1>, vector<8x256xf32>
    %270 = arith.truncf %269 : vector<8x256xf32> to vector<8x256xbf16>
    %271 = arith.index_cast %c5_i32 : i32 to index
    %c0_71 = arith.constant 0 : index
    %c0_72 = arith.constant 0 : index
    %272 = vector.load %arg7[%271, %c0_71, %c0_72] : memref<8x8x256xbf16, #tpu.memory_space<vmem>>, vector<1x8x256xbf16>
    %273 = vector.shape_cast %272 : vector<1x8x256xbf16> to vector<8x256xbf16>
    %274 = vector.shape_cast %270 : vector<8x256xbf16> to vector<1x8x256xbf16>
    tpu.vector_store %arg7[%271, %c0_71, %c0_72], %274 {strides = array<i32>} : memref<8x8x256xbf16, #tpu.memory_space<vmem>>, vector<1x8x256xbf16>,
    %c6_i32 = arith.constant 6 : i32
    %275 = arith.index_cast %c6_i32 : i32 to index
    %c0_73 = arith.constant 0 : index
    %c0_74 = arith.constant 0 : index
    %276 = vector.load %arg8[%275, %c0_73, %c0_74] : memref<8x8x1024xf32, #tpu.memory_space<vmem>>, vector<1x8x1024xf32>
    %277 = vector.shape_cast %276 : vector<1x8x1024xf32> to vector<8x1024xf32>
    %278 = arith.truncf %262 : vector<8x256xf32> to vector<8x256xbf16>
    %cst_75 = arith.constant dense<0.000000e+00> : vector<8x1024xf32>
    %279 = tpu.matmul %278, %12, %cst_75 {dimension_numbers = #tpu.dot_dimension_numbers<[1], [0], [0], [1], [0, 0, 1, 1], [], []>} : vector<8x256xbf16>, vector<256x1024xbf16>, vector<8x1024xf32> -> vector<8x1024xf32>
    %280 = arith.addf %277, %279 : vector<8x1024xf32>
    %281 = vector.extract_strided_slice %280 {offsets = [0, 0], sizes = [8, 256], strides = [1, 1]} : vector<8x1024xf32> to vector<8x256xf32>
    %282 = arith.negf %281 : vector<8x256xf32>
    %283 = math.exp %282 : vector<8x256xf32>
    %cst_76 = arith.constant 1.000000e+00 : f32
    %284 = vector.broadcast %cst_76 : f32 to vector<8x256xf32>
    %285 = arith.addf %284, %283 : vector<8x256xf32>
    %286 = arith.divf %284, %285 : vector<8x256xf32>
    %287 = vector.extract_strided_slice %280 {offsets = [0, 256], sizes = [8, 256], strides = [1, 1]} : vector<8x1024xf32> to vector<8x256xf32>
    %288 = arith.negf %287 : vector<8x256xf32>
    %289 = math.exp %288 : vector<8x256xf32>
    %cst_77 = arith.constant 1.000000e+00 : f32
    %290 = vector.broadcast %cst_77 : f32 to vector<8x256xf32>
    %291 = arith.addf %290, %289 : vector<8x256xf32>
    %292 = arith.divf %290, %291 : vector<8x256xf32>
    %293 = vector.extract_strided_slice %280 {offsets = [0, 512], sizes = [8, 256], strides = [1, 1]} : vector<8x1024xf32> to vector<8x256xf32>
    %294 = math.tanh %293 : vector<8x256xf32>
    %295 = vector.extract_strided_slice %280 {offsets = [0, 768], sizes = [8, 256], strides = [1, 1]} : vector<8x1024xf32> to vector<8x256xf32>
    %296 = arith.negf %295 : vector<8x256xf32>
    %297 = math.exp %296 : vector<8x256xf32>
    %cst_78 = arith.constant 1.000000e+00 : f32
    %298 = vector.broadcast %cst_78 : f32 to vector<8x256xf32>
    %299 = arith.addf %298, %297 : vector<8x256xf32>
    %300 = arith.divf %298, %299 : vector<8x256xf32>
    %301 = arith.mulf %292, %260 : vector<8x256xf32>
    %302 = arith.mulf %286, %294 : vector<8x256xf32>
    %303 = arith.addf %301, %302 : vector<8x256xf32>
    %304 = math.tanh %303 : vector<8x256xf32>
    %305 = arith.mulf %300, %304 : vector<8x256xf32>
    %306 = arith.addi %14, %c6_i32 : i32
    %307 = vector.broadcast %306 : i32 to vector<8x1xi32>
    %308 = arith.cmpi slt, %307, %13 : vector<8x1xi32>
    %cst_79 = arith.constant 0.000000e+00 : f32
    %309 = vector.shape_cast %308 : vector<8x1xi1> to vector<8x1xi1>
    %310 = vector.broadcast %309 : vector<8x1xi1> to vector<8x256xi1>
    %311 = vector.broadcast %cst_79 : f32 to vector<8x256xf32>
    %312 = arith.select %310, %305, %311 : vector<8x256xi1>, vector<8x256xf32>
    %313 = arith.truncf %312 : vector<8x256xf32> to vector<8x256xbf16>
    %314 = arith.index_cast %c6_i32 : i32 to index
    %c0_80 = arith.constant 0 : index
    %c0_81 = arith.constant 0 : index
    %315 = vector.load %arg7[%314, %c0_80, %c0_81] : memref<8x8x256xbf16, #tpu.memory_space<vmem>>, vector<1x8x256xbf16>
    %316 = vector.shape_cast %315 : vector<1x8x256xbf16> to vector<8x256xbf16>
    %317 = vector.shape_cast %313 : vector<8x256xbf16> to vector<1x8x256xbf16>
    tpu.vector_store %arg7[%314, %c0_80, %c0_81], %317 {strides = array<i32>} : memref<8x8x256xbf16, #tpu.memory_space<vmem>>, vector<1x8x256xbf16>,
    %c7_i32 = arith.constant 7 : i32
    %318 = arith.index_cast %c7_i32 : i32 to index
    %c0_82 = arith.constant 0 : index
    %c0_83 = arith.constant 0 : index
    %319 = vector.load %arg8[%318, %c0_82, %c0_83] : memref<8x8x1024xf32, #tpu.memory_space<vmem>>, vector<1x8x1024xf32>
    %320 = vector.shape_cast %319 : vector<1x8x1024xf32> to vector<8x1024xf32>
    %321 = arith.truncf %305 : vector<8x256xf32> to vector<8x256xbf16>
    %cst_84 = arith.constant dense<0.000000e+00> : vector<8x1024xf32>
    %322 = tpu.matmul %321, %12, %cst_84 {dimension_numbers = #tpu.dot_dimension_numbers<[1], [0], [0], [1], [0, 0, 1, 1], [], []>} : vector<8x256xbf16>, vector<256x1024xbf16>, vector<8x1024xf32> -> vector<8x1024xf32>
    %323 = arith.addf %320, %322 : vector<8x1024xf32>
    %324 = vector.extract_strided_slice %323 {offsets = [0, 0], sizes = [8, 256], strides = [1, 1]} : vector<8x1024xf32> to vector<8x256xf32>
    %325 = arith.negf %324 : vector<8x256xf32>
    %326 = math.exp %325 : vector<8x256xf32>
    %cst_85 = arith.constant 1.000000e+00 : f32
    %327 = vector.broadcast %cst_85 : f32 to vector<8x256xf32>
    %328 = arith.addf %327, %326 : vector<8x256xf32>
    %329 = arith.divf %327, %328 : vector<8x256xf32>
    %330 = vector.extract_strided_slice %323 {offsets = [0, 256], sizes = [8, 256], strides = [1, 1]} : vector<8x1024xf32> to vector<8x256xf32>
    %331 = arith.negf %330 : vector<8x256xf32>
    %332 = math.exp %331 : vector<8x256xf32>
    %cst_86 = arith.constant 1.000000e+00 : f32
    %333 = vector.broadcast %cst_86 : f32 to vector<8x256xf32>
    %334 = arith.addf %333, %332 : vector<8x256xf32>
    %335 = arith.divf %333, %334 : vector<8x256xf32>
    %336 = vector.extract_strided_slice %323 {offsets = [0, 512], sizes = [8, 256], strides = [1, 1]} : vector<8x1024xf32> to vector<8x256xf32>
    %337 = math.tanh %336 : vector<8x256xf32>
    %338 = vector.extract_strided_slice %323 {offsets = [0, 768], sizes = [8, 256], strides = [1, 1]} : vector<8x1024xf32> to vector<8x256xf32>
    %339 = arith.negf %338 : vector<8x256xf32>
    %340 = math.exp %339 : vector<8x256xf32>
    %cst_87 = arith.constant 1.000000e+00 : f32
    %341 = vector.broadcast %cst_87 : f32 to vector<8x256xf32>
    %342 = arith.addf %341, %340 : vector<8x256xf32>
    %343 = arith.divf %341, %342 : vector<8x256xf32>
    %344 = arith.mulf %335, %303 : vector<8x256xf32>
    %345 = arith.mulf %329, %337 : vector<8x256xf32>
    %346 = arith.addf %344, %345 : vector<8x256xf32>
    %347 = math.tanh %346 : vector<8x256xf32>
    %348 = arith.mulf %343, %347 : vector<8x256xf32>
    %349 = arith.addi %14, %c7_i32 : i32
    %350 = vector.broadcast %349 : i32 to vector<8x1xi32>
    %351 = arith.cmpi slt, %350, %13 : vector<8x1xi32>
    %cst_88 = arith.constant 0.000000e+00 : f32
    %352 = vector.shape_cast %351 : vector<8x1xi1> to vector<8x1xi1>
    %353 = vector.broadcast %352 : vector<8x1xi1> to vector<8x256xi1>
    %354 = vector.broadcast %cst_88 : f32 to vector<8x256xf32>
    %355 = arith.select %353, %348, %354 : vector<8x256xi1>, vector<8x256xf32>
    %356 = arith.truncf %355 : vector<8x256xf32> to vector<8x256xbf16>
    %357 = arith.index_cast %c7_i32 : i32 to index
    %c0_89 = arith.constant 0 : index
    %c0_90 = arith.constant 0 : index
    %358 = vector.load %arg7[%357, %c0_89, %c0_90] : memref<8x8x256xbf16, #tpu.memory_space<vmem>>, vector<1x8x256xbf16>
    %359 = vector.shape_cast %358 : vector<1x8x256xbf16> to vector<8x256xbf16>
    %360 = vector.shape_cast %356 : vector<8x256xbf16> to vector<1x8x256xbf16>
    tpu.vector_store %arg7[%357, %c0_89, %c0_90], %360 {strides = array<i32>} : memref<8x8x256xbf16, #tpu.memory_space<vmem>>, vector<1x8x256xbf16>,
    %c8_i32_91 = arith.constant 8 : i32
    %c0_92 = arith.constant 0 : index
    %c0_93 = arith.constant 0 : index
    %361 = vector.load %arg9[%c0_92, %c0_93] : memref<8x256xf32, #tpu.memory_space<vmem>>, vector<8x256xf32>
    tpu.vector_store %arg9[%c0_92, %c0_93], %348 {strides = array<i32>} : memref<8x256xf32, #tpu.memory_space<vmem>>, vector<8x256xf32>,
    %c0_94 = arith.constant 0 : index
    %c0_95 = arith.constant 0 : index
    %362 = vector.load %arg10[%c0_94, %c0_95] : memref<8x256xf32, #tpu.memory_space<vmem>>, vector<8x256xf32>
    tpu.vector_store %arg10[%c0_94, %c0_95], %346 {strides = array<i32>} : memref<8x256xf32, #tpu.memory_space<vmem>>, vector<8x256xf32>,
    return
  }
  func.func @transform_0(%arg0: i32, %arg1: i32) -> (i32, i32, i32) {
    %c0_i32 = arith.constant 0 : i32
    %c0_i32_0 = arith.constant 0 : i32
    return %arg1, %arg0, %c0_i32 : i32, i32, i32
  }
  func.func @transform_1(%arg0: i32, %arg1: i32) -> (i32, i32) {
    %c0_i32 = arith.constant 0 : i32
    %c0_i32_0 = arith.constant 0 : i32
    %c0_i32_1 = arith.constant 0 : i32
    return %c0_i32, %c0_i32_0 : i32, i32
  }
  func.func @transform_2(%arg0: i32, %arg1: i32) -> (i32, i32) {
    %c0_i32 = arith.constant 0 : i32
    %c0_i32_0 = arith.constant 0 : i32
    %c0_i32_1 = arith.constant 0 : i32
    return %c0_i32, %c0_i32_0 : i32, i32
  }
  func.func @transform_3(%arg0: i32, %arg1: i32) -> (i32, i32) {
    %c0_i32 = arith.constant 0 : i32
    %c0_i32_0 = arith.constant 0 : i32
    %c0_i32_1 = arith.constant 0 : i32
    return %c0_i32, %c0_i32_0 : i32, i32
  }
  func.func @transform_4(%arg0: i32, %arg1: i32) -> (i32, i32) {
    %c0_i32 = arith.constant 0 : i32
    %c0_i32_0 = arith.constant 0 : i32
    return %arg0, %c0_i32 : i32, i32
  }
  func.func @transform_5(%arg0: i32, %arg1: i32) -> (i32, i32, i32) {
    %c0_i32 = arith.constant 0 : i32
    %c0_i32_0 = arith.constant 0 : i32
    return %arg1, %arg0, %c0_i32 : i32, i32, i32
  }
}

</mosaic_0001>

<llo_original>
// kernel: tpu_custom_call.1
$region0: #{tpu_custom_call.1}
  #allocation0 [shape = 'u32[]', space=smem, size = 0x4, offset = 0x4, fixed_abs, tag = 'smem constant byte address 0x4 - core index']
  #allocation1 [shape = 'u32[72,128]{1,0:T(1,128)}', space=vmem, size = 0x9000, scoped, tag = 'internal scratch']
  #allocation2 [shape = 'f32[8,8,1024]{2,1,0:T(8,128)}', space=vmem, size = 0x40000, scoped, tag = 'scratch operand']
  #allocation3 [shape = 'f32[8,256]{1,0:T(8,128)}', space=vmem, size = 0x2000, scoped, tag = 'scratch operand']
  #allocation4 [shape = 'f32[8,256]{1,0:T(8,128)}', space=vmem, size = 0x2000, scoped, tag = 'scratch operand']
  %s0 = inlined_call_operand.hbm [shape: bf16[8,8,256], index: 0, kind: input, shape index: {}]
  %s1 = inlined_call_operand.hbm [shape: bf16[256,1024], index: 1, kind: input, shape index: {}]
  %s2 = inlined_call_operand.hbm [shape: bf16[256,1024], index: 2, kind: input, shape index: {}]
  %s3 = inlined_call_operand.vmem [shape: f32[1,1024], index: 3, kind: input, shape index: {}]
  %s4 = inlined_call_operand.vmem [shape: s32[8,1], index: 4, kind: input, shape index: {}]
  %s5 = inlined_call_operand.hbm [shape: bf16[8,8,256], index: 5, kind: output, shape index: {}]
  %s6 = sld [smem:[#allocation0]]
  $region46: #{tpu_custom_call.1} parent=0
    _
  %s8 = ssub.s32 1, %s6
  %s9 = scalar_select 0, %s8, %s6
  $region1: #{tpu_custom_call.1} parent=0
    #allocation5 [shape = 'u8[32768]{0}', space=vmem, size = 0x8000, scoped, tag = 'input window, operand 0, single buffered']
    #allocation6 [shape = 's32[1]{0}', space=sflag, size = 0x4, scoped, tag = 'scoped memory for tpu_custom_call.1']
    #allocation7 [shape = 's32[1]{0}', space=sflag, size = 0x4, scoped, tag = 'scoped memory for tpu_custom_call.1']
    #allocation8 [shape = 'u8[524288]{0}', space=vmem, size = 0x80000, scoped, tag = 'input window, operand 1, single buffered']
    #allocation9 [shape = 's32[1]{0}', space=sflag, size = 0x4, scoped, tag = 'scoped memory for tpu_custom_call.1']
    #allocation10 [shape = 'u8[524288]{0}', space=vmem, size = 0x80000, scoped, tag = 'input window, operand 2, single buffered']
    #allocation11 [shape = 'u8[32768]{0}', space=vmem, size = 0x8000, scoped, tag = 'output window, operand 0, single buffered']
    %10 = vsyncpa [#allocation6], 0
    %11 = vsyncpa [#allocation9], 0
    %12 = vsyncpa [#allocation7], 0
    // Predicated region
    $region2: #{tpu_custom_call.1} parent=1 // pred_check
      _
    $region3: #{tpu_custom_call.1} parent=1 // pred_check_branch
      %14 = sbr.rel (0) target = $region5
    $region4: #{tpu_custom_call.1} parent=1 // pred_region
      %16 = vsyncadd [#allocation6], 0
      %s17 = sshll.u32 %s0, 4
      %s18 = int_to_ptr.hbm [resolvable:$true] %s17
      %s19 = sshll.u32 [#allocation5], 4
      %s20 = int_to_ptr.vmem [resolvable:$true] %s19
      %25 = dma.hbm_to_vmem [thread:$0]  %s18, 1024, %s20, [#allocation6], 128, 128, 8
    $region5: #{tpu_custom_call.1} parent=1 // pred_fallthru
      _
    // Predicated region
    $region6: #{tpu_custom_call.1} parent=1 // pred_check
      _
    $region7: #{tpu_custom_call.1} parent=1 // pred_check_branch
      %27 = sbr.rel (0) target = $region9
    $region8: #{tpu_custom_call.1} parent=1 // pred_region
      %29 = vsyncadd [#allocation9], 0
      %s30 = sshll.u32 %s1, 4
      %s31 = int_to_ptr.hbm [resolvable:$true] %s30
      %s32 = sshll.u32 [#allocation8], 4
      %s33 = int_to_ptr.vmem [resolvable:$true] %s32
      %38 = dma.hbm_to_vmem [thread:$0]  %s31, 16384, %s33, [#allocation9], 512, 512, 32
    $region9: #{tpu_custom_call.1} parent=1 // pred_fallthru
      _
    // Predicated region
    $region10: #{tpu_custom_call.1} parent=1 // pred_check
      _
    $region11: #{tpu_custom_call.1} parent=1 // pred_check_branch
      %40 = sbr.rel (0) target = $region13
    $region12: #{tpu_custom_call.1} parent=1 // pred_region
      %42 = vsyncadd [#allocation9], 0
      %s43 = sshll.u32 %s2, 4
      %s44 = int_to_ptr.hbm [resolvable:$true] %s43
      %s45 = sshll.u32 [#allocation10], 4
      %s46 = int_to_ptr.vmem [resolvable:$true] %s45
      %51 = dma.hbm_to_vmem [thread:$0]  %s44, 16384, %s46, [#allocation9], 512, 512, 32
    $region13: #{tpu_custom_call.1} parent=1 // pred_fallthru
      _
    // Predicated region
    $region14: #{tpu_custom_call.1} parent=1 // pred_check
      _
    $region15: #{tpu_custom_call.1} parent=1 // pred_check_branch
      %53 = sbr.rel (0) target = $region17
    $region16: #{tpu_custom_call.1} parent=1 // pred_region
      _
    $region17: #{tpu_custom_call.1} parent=1 // pred_fallthru
      _
    // Predicated region
    $region18: #{tpu_custom_call.1} parent=1 // pred_check
      _
    $region19: #{tpu_custom_call.1} parent=1 // pred_check_branch
      %55 = sbr.rel (0) target = $region21
    $region20: #{tpu_custom_call.1} parent=1 // pred_region
      _
    $region21: #{tpu_custom_call.1} parent=1 // pred_fallthru
      _
    // Predicated region
    $region22: #{tpu_custom_call.1} parent=1 // pred_check
      _
    $region23: #{tpu_custom_call.1} parent=1 // pred_check_branch
      %57 = sbr.rel (0) target = $region25
    $region24: #{tpu_custom_call.1} parent=1 // pred_region
      %59 = dma.done [#allocation6], 1024
    $region25: #{tpu_custom_call.1} parent=1 // pred_fallthru
      _
    // Predicated region
    $region26: #{tpu_custom_call.1} parent=1 // pred_check
      _
    $region27: #{tpu_custom_call.1} parent=1 // pred_check_branch
      %61 = sbr.rel (0) target = $region29
    $region28: #{tpu_custom_call.1} parent=1 // pred_region
      %63 = dma.done [#allocation9], 16384
    $region29: #{tpu_custom_call.1} parent=1 // pred_fallthru
      _
    // Predicated region
    $region30: #{tpu_custom_call.1} parent=1 // pred_check
      _
    $region31: #{tpu_custom_call.1} parent=1 // pred_check_branch
      %65 = sbr.rel (0) target = $region33
    $region32: #{tpu_custom_call.1} parent=1 // pred_region
      %67 = dma.done [#allocation9], 16384
    $region33: #{tpu_custom_call.1} parent=1 // pred_fallthru
      _
    %p68 = scmp.eq.s32.totalorder 0, 0
    // Predicated region
    $region34: #{tpu_custom_call.1} parent=1 // pred_check
      %p69 = pneg %p68
    $region35: #{tpu_custom_call.1} parent=1 // pred_check_branch
      %71 = sbr.rel (%p69) target = $region37
    $region36: #{tpu_custom_call.1} parent=1 // pred_region
      %72 = vst [vmem:[#allocation3] sm:$0xff] 0.0
      %73 = vst [vmem:[#allocation3 + $0x8] sm:$0xff] 0.0
      %74 = vst [vmem:[#allocation4] sm:$0xff] 0.0
      %75 = vst [vmem:[#allocation4 + $0x8] sm:$0xff] 0.0
    $region37: #{tpu_custom_call.1} parent=1 // pred_fallthru
      _
    %v76 = vld [vmem:[#allocation5] sm:$0xff]
    %v77 = vld [vmem:[#allocation5 + $0x8] sm:$0xff]
    %v78 = vld [vmem:[#allocation5 + $0x10] sm:$0xff]
    %v79 = vld [vmem:[#allocation5 + $0x18] sm:$0xff]
    %v80 = vld [vmem:[#allocation5 + $0x20] sm:$0xff]
    %v81 = vld [vmem:[#allocation5 + $0x28] sm:$0xff]
    %v82 = vld [vmem:[#allocation5 + $0x30] sm:$0xff]
    %v83 = vld [vmem:[#allocation5 + $0x38] sm:$0xff]
    %v84 = vld [vmem:[#allocation8] sm:$0xff]
    %v85 = vld [vmem:[#allocation8 + $0x8] sm:$0xff]
    %v86 = vld [vmem:[#allocation8 + $0x10] sm:$0xff]
    %v87 = vld [vmem:[#allocation8 + $0x18] sm:$0xff]
    %v88 = vld [vmem:[#allocation8 + $0x20] sm:$0xff]
    %v89 = vld [vmem:[#allocation8 + $0x28] sm:$0xff]
    %v90 = vld [vmem:[#allocation8 + $0x30] sm:$0xff]
    %v91 = vld [vmem:[#allocation8 + $0x38] sm:$0xff]
    %v92 = vld [vmem:[#allocation8 + $0x40] sm:$0xff]
    %v93 = vld [vmem:[#allocation8 + $0x48] sm:$0xff]
    %v94 = vld [vmem:[#allocation8 + $0x50] sm:$0xff]
    %v95 = vld [vmem:[#allocation8 + $0x58] sm:$0xff]
    %v96 = vld [vmem:[#allocation8 + $0x60] sm:$0xff]
    %v97 = vld [vmem:[#allocation8 + $0x68] sm:$0xff]
    %v98 = vld [vmem:[#allocation8 + $0x70] sm:$0xff]
    %v99 = vld [vmem:[#allocation8 + $0x78] sm:$0xff]
    %v100 = vld [vmem:[#allocation8 + $0x80] sm:$0xff]
    %v101 = vld [vmem:[#allocation8 + $0x88] sm:$0xff]
    %v102 = vld [vmem:[#allocation8 + $0x90] sm:$0xff]
    %v103 = vld [vmem:[#allocation8 + $0x98] sm:$0xff]
    %v104 = vld [vmem:[#allocation8 + $0xa0] sm:$0xff]
    %v105 = vld [vmem:[#allocation8 + $0xa8] sm:$0xff]
    %v106 = vld [vmem:[#allocation8 + $0xb0] sm:$0xff]
    %v107 = vld [vmem:[#allocation8 + $0xb8] sm:$0xff]
    %v108 = vld [vmem:[#allocation8 + $0xc0] sm:$0xff]
    %v109 = vld [vmem:[#allocation8 + $0xc8] sm:$0xff]
    %v110 = vld [vmem:[#allocation8 + $0xd0] sm:$0xff]
    %v111 = vld [vmem:[#allocation8 + $0xd8] sm:$0xff]
    %v112 = vld [vmem:[#allocation8 + $0xe0] sm:$0xff]
    %v113 = vld [vmem:[#allocation8 + $0xe8] sm:$0xff]
    %v114 = vld [vmem:[#allocation8 + $0xf0] sm:$0xff]
    %v115 = vld [vmem:[#allocation8 + $0xf8] sm:$0xff]
    %v116 = vld [vmem:[#allocation8 + $0x100] sm:$0xff]
    %v117 = vld [vmem:[#allocation8 + $0x108] sm:$0xff]
    %v118 = vld [vmem:[#allocation8 + $0x110] sm:$0xff]
    %v119 = vld [vmem:[#allocation8 + $0x118] sm:$0xff]
    %v120 = vld [vmem:[#allocation8 + $0x120] sm:$0xff]
    %v121 = vld [vmem:[#allocation8 + $0x128] sm:$0xff]
    %v122 = vld [vmem:[#allocation8 + $0x130] sm:$0xff]
    %v123 = vld [vmem:[#allocation8 + $0x138] sm:$0xff]
    %v124 = vld [vmem:[#allocation8 + $0x140] sm:$0xff]
    %v125 = vld [vmem:[#allocation8 + $0x148] sm:$0xff]
    %v126 = vld [vmem:[#allocation8 + $0x150] sm:$0xff]
    %v127 = vld [vmem:[#allocation8 + $0x158] sm:$0xff]
    %v128 = vld [vmem:[#allocation8 + $0x160] sm:$0xff]
    %v129 = vld [vmem:[#allocation8 + $0x168] sm:$0xff]
    %v130 = vld [vmem:[#allocation8 + $0x170] sm:$0xff]
    %v131 = vld [vmem:[#allocation8 + $0x178] sm:$0xff]
    %v132 = vld [vmem:[#allocation8 + $0x180] sm:$0xff]
    %v133 = vld [vmem:[#allocation8 + $0x188] sm:$0xff]
    %v134 = vld [vmem:[#allocation8 + $0x190] sm:$0xff]
    %v135 = vld [vmem:[#allocation8 + $0x198] sm:$0xff]
    %v136 = vld [vmem:[#allocation8 + $0x1a0] sm:$0xff]
    %v137 = vld [vmem:[#allocation8 + $0x1a8] sm:$0xff]
    %v138 = vld [vmem:[#allocation8 + $0x1b0] sm:$0xff]
    %v139 = vld [vmem:[#allocation8 + $0x1b8] sm:$0xff]
    %v140 = vld [vmem:[#allocation8 + $0x1c0] sm:$0xff]
    %v141 = vld [vmem:[#allocation8 + $0x1c8] sm:$0xff]
    %v142 = vld [vmem:[#allocation8 + $0x1d0] sm:$0xff]
    %v143 = vld [vmem:[#allocation8 + $0x1d8] sm:$0xff]
    %v144 = vld [vmem:[#allocation8 + $0x1e0] sm:$0xff]
    %v145 = vld [vmem:[#allocation8 + $0x1e8] sm:$0xff]
    %v146 = vld [vmem:[#allocation8 + $0x1f0] sm:$0xff]
    %v147 = vld [vmem:[#allocation8 + $0x1f8] sm:$0xff]
    %v148 = vld [vmem:[#allocation8 + $0x200] sm:$0xff]
    %v149 = vld [vmem:[#allocation8 + $0x208] sm:$0xff]
    %v150 = vld [vmem:[#allocation8 + $0x210] sm:$0xff]
    %v151 = vld [vmem:[#allocation8 + $0x218] sm:$0xff]
    %v152 = vld [vmem:[#allocation8 + $0x220] sm:$0xff]
    %v153 = vld [vmem:[#allocation8 + $0x228] sm:$0xff]
    %v154 = vld [vmem:[#allocation8 + $0x230] sm:$0xff]
    %v155 = vld [vmem:[#allocation8 + $0x238] sm:$0xff]
    %v156 = vld [vmem:[#allocation8 + $0x240] sm:$0xff]
    %v157 = vld [vmem:[#allocation8 + $0x248] sm:$0xff]
    %v158 = vld [vmem:[#allocation8 + $0x250] sm:$0xff]
    %v159 = vld [vmem:[#allocation8 + $0x258] sm:$0xff]
    %v160 = vld [vmem:[#allocation8 + $0x260] sm:$0xff]
    %v161 = vld [vmem:[#allocation8 + $0x268] sm:$0xff]
    %v162 = vld [vmem:[#allocation8 + $0x270] sm:$0xff]
    %v163 = vld [vmem:[#allocation8 + $0x278] sm:$0xff]
    %v164 = vld [vmem:[#allocation8 + $0x280] sm:$0xff]
    %v165 = vld [vmem:[#allocation8 + $0x288] sm:$0xff]
    %v166 = vld [vmem:[#allocation8 + $0x290] sm:$0xff]
    %v167 = vld [vmem:[#allocation8 + $0x298] sm:$0xff]
    %v168 = vld [vmem:[#allocation8 + $0x2a0] sm:$0xff]
    %v169 = vld [vmem:[#allocation8 + $0x2a8] sm:$0xff]
    %v170 = vld [vmem:[#allocation8 + $0x2b0] sm:$0xff]
    %v171 = vld [vmem:[#allocation8 + $0x2b8] sm:$0xff]
    %v172 = vld [vmem:[#allocation8 + $0x2c0] sm:$0xff]
    %v173 = vld [vmem:[#allocation8 + $0x2c8] sm:$0xff]
    %v174 = vld [vmem:[#allocation8 + $0x2d0] sm:$0xff]
    %v175 = vld [vmem:[#allocation8 + $0x2d8] sm:$0xff]
    %v176 = vld [vmem:[#allocation8 + $0x2e0] sm:$0xff]
    %v177 = vld [vmem:[#allocation8 + $0x2e8] sm:$0xff]
    %v178 = vld [vmem:[#allocation8 + $0x2f0] sm:$0xff]
    %v179 = vld [vmem:[#allocation8 + $0x2f8] sm:$0xff]
    %v180 = vld [vmem:[#allocation8 + $0x300] sm:$0xff]
    %v181 = vld [vmem:[#allocation8 + $0x308] sm:$0xff]
    %v182 = vld [vmem:[#allocation8 + $0x310] sm:$0xff]
    %v183 = vld [vmem:[#allocation8 + $0x318] sm:$0xff]
    %v184 = vld [vmem:[#allocation8 + $0x320] sm:$0xff]
    %v185 = vld [vmem:[#allocation8 + $0x328] sm:$0xff]
    %v186 = vld [vmem:[#allocation8 + $0x330] sm:$0xff]
    %v187 = vld [vmem:[#allocation8 + $0x338] sm:$0xff]
    %v188 = vld [vmem:[#allocation8 + $0x340] sm:$0xff]
    %v189 = vld [vmem:[#allocation8 + $0x348] sm:$0xff]
    %v190 = vld [vmem:[#allocation8 + $0x350] sm:$0xff]
    %v191 = vld [vmem:[#allocation8 + $0x358] sm:$0xff]
    %v192 = vld [vmem:[#allocation8 + $0x360] sm:$0xff]
    %v193 = vld [vmem:[#allocation8 + $0x368] sm:$0xff]
    %v194 = vld [vmem:[#allocation8 + $0x370] sm:$0xff]
    %v195 = vld [vmem:[#allocation8 + $0x378] sm:$0xff]
    %v196 = vld [vmem:[#allocation8 + $0x380] sm:$0xff]
    %v197 = vld [vmem:[#allocation8 + $0x388] sm:$0xff]
    %v198 = vld [vmem:[#allocation8 + $0x390] sm:$0xff]
    %v199 = vld [vmem:[#allocation8 + $0x398] sm:$0xff]
    %v200 = vld [vmem:[#allocation8 + $0x3a0] sm:$0xff]
    %v201 = vld [vmem:[#allocation8 + $0x3a8] sm:$0xff]
    %v202 = vld [vmem:[#allocation8 + $0x3b0] sm:$0xff]
    %v203 = vld [vmem:[#allocation8 + $0x3b8] sm:$0xff]
    %v204 = vld [vmem:[#allocation8 + $0x3c0] sm:$0xff]
    %v205 = vld [vmem:[#allocation8 + $0x3c8] sm:$0xff]
    %v206 = vld [vmem:[#allocation8 + $0x3d0] sm:$0xff]
    %v207 = vld [vmem:[#allocation8 + $0x3d8] sm:$0xff]
    %v208 = vld [vmem:[#allocation8 + $0x3e0] sm:$0xff]
    %v209 = vld [vmem:[#allocation8 + $0x3e8] sm:$0xff]
    %v210 = vld [vmem:[#allocation8 + $0x3f0] sm:$0xff]
    %v211 = vld [vmem:[#allocation8 + $0x3f8] sm:$0xff]
    %v212 = vld [vmem:[%s3] sm:$0xff]
    %v214 = vperm.slane %v212, 0
    %v215 = vperm.slane %v212, 1
    %v216 = vperm.slane %v212, 2
    %v217 = vperm.slane %v212, 3
    %v218 = vperm.slane %v212, 4
    %v219 = vperm.slane %v212, 5
    %v220 = vperm.slane %v212, 6
    %v221 = vperm.slane %v212, 7
    %v238 = vunpack.c.l.b16 %v76
    %v239 = vunpack.c.h.b16 %v76
    %v240 = vunpack.c.l.b16 %v77
    %v241 = vunpack.c.h.b16 %v77
    %v242 = vunpack.c.l.b16 %v78
    %v243 = vunpack.c.h.b16 %v78
    %v244 = vunpack.c.l.b16 %v79
    %v245 = vunpack.c.h.b16 %v79
    %v246 = vunpack.c.l.b16 %v80
    %v247 = vunpack.c.h.b16 %v80
    %v248 = vunpack.c.l.b16 %v81
    %v249 = vunpack.c.h.b16 %v81
    %v250 = vunpack.c.l.b16 %v82
    %v251 = vunpack.c.h.b16 %v82
    %v252 = vunpack.c.l.b16 %v83
    %v253 = vunpack.c.h.b16 %v83
    %v254 = vpack.c.b16 %v240, %v238
    %v255 = vpack.c.b16 %v241, %v239
    %v256 = vpack.c.b16 %v244, %v242
    %v257 = vpack.c.b16 %v245, %v243
    %v258 = vpack.c.b16 %v248, %v246
    %v259 = vpack.c.b16 %v249, %v247
    %v260 = vpack.c.b16 %v252, %v250
    %v261 = vpack.c.b16 %v253, %v251
    %v398 = vunpack.c.l.b16 %v84
    %v399 = vunpack.c.h.b16 %v84
    %v400 = vunpack.c.l.b16 %v85
    %v401 = vunpack.c.h.b16 %v85
    %v402 = vunpack.c.l.b16 %v86
    %v403 = vunpack.c.h.b16 %v86
    %v404 = vunpack.c.l.b16 %v87
    %v405 = vunpack.c.h.b16 %v87
    %v406 = vunpack.c.l.b16 %v88
    %v407 = vunpack.c.h.b16 %v88
    %v408 = vunpack.c.l.b16 %v89
    %v409 = vunpack.c.h.b16 %v89
    %v410 = vunpack.c.l.b16 %v90
    %v411 = vunpack.c.h.b16 %v90
    %v412 = vunpack.c.l.b16 %v91
    %v413 = vunpack.c.h.b16 %v91
    %v414 = vunpack.c.l.b16 %v92
    %v415 = vunpack.c.h.b16 %v92
    %v416 = vunpack.c.l.b16 %v93
    %v417 = vunpack.c.h.b16 %v93
    %v418 = vunpack.c.l.b16 %v94
    %v419 = vunpack.c.h.b16 %v94
    %v420 = vunpack.c.l.b16 %v95
    %v421 = vunpack.c.h.b16 %v95
    %v422 = vunpack.c.l.b16 %v96
    %v423 = vunpack.c.h.b16 %v96
    %v424 = vunpack.c.l.b16 %v97
    %v425 = vunpack.c.h.b16 %v97
    %v426 = vunpack.c.l.b16 %v98
    %v427 = vunpack.c.h.b16 %v98
    %v428 = vunpack.c.l.b16 %v99
    %v429 = vunpack.c.h.b16 %v99
    %v430 = vunpack.c.l.b16 %v100
    %v431 = vunpack.c.h.b16 %v100
    %v432 = vunpack.c.l.b16 %v101
    %v433 = vunpack.c.h.b16 %v101
    %v434 = vunpack.c.l.b16 %v102
    %v435 = vunpack.c.h.b16 %v102
    %v436 = vunpack.c.l.b16 %v103
    %v437 = vunpack.c.h.b16 %v103
    %v438 = vunpack.c.l.b16 %v104
    %v439 = vunpack.c.h.b16 %v104
    %v440 = vunpack.c.l.b16 %v105
    %v441 = vunpack.c.h.b16 %v105
    %v442 = vunpack.c.l.b16 %v106
    %v443 = vunpack.c.h.b16 %v106
    %v444 = vunpack.c.l.b16 %v107
    %v445 = vunpack.c.h.b16 %v107
    %v446 = vunpack.c.l.b16 %v108
    %v447 = vunpack.c.h.b16 %v108
    %v448 = vunpack.c.l.b16 %v109
    %v449 = vunpack.c.h.b16 %v109
    %v450 = vunpack.c.l.b16 %v110
    %v451 = vunpack.c.h.b16 %v110
    %v452 = vunpack.c.l.b16 %v111
    %v453 = vunpack.c.h.b16 %v111
    %v454 = vunpack.c.l.b16 %v112
    %v455 = vunpack.c.h.b16 %v112
    %v456 = vunpack.c.l.b16 %v113
    %v457 = vunpack.c.h.b16 %v113
    %v458 = vunpack.c.l.b16 %v114
    %v459 = vunpack.c.h.b16 %v114
    %v460 = vunpack.c.l.b16 %v115
    %v461 = vunpack.c.h.b16 %v115
    %v462 = vunpack.c.l.b16 %v116
    %v463 = vunpack.c.h.b16 %v116
    %v464 = vunpack.c.l.b16 %v117
    %v465 = vunpack.c.h.b16 %v117
    %v466 = vunpack.c.l.b16 %v118
    %v467 = vunpack.c.h.b16 %v118
    %v468 = vunpack.c.l.b16 %v119
    %v469 = vunpack.c.h.b16 %v119
    %v470 = vunpack.c.l.b16 %v120
    %v471 = vunpack.c.h.b16 %v120
    %v472 = vunpack.c.l.b16 %v121
    %v473 = vunpack.c.h.b16 %v121
    %v474 = vunpack.c.l.b16 %v122
    %v475 = vunpack.c.h.b16 %v122
    %v476 = vunpack.c.l.b16 %v123
    %v477 = vunpack.c.h.b16 %v123
    %v478 = vunpack.c.l.b16 %v124
    %v479 = vunpack.c.h.b16 %v124
    %v480 = vunpack.c.l.b16 %v125
    %v481 = vunpack.c.h.b16 %v125
    %v482 = vunpack.c.l.b16 %v126
    %v483 = vunpack.c.h.b16 %v126
    %v484 = vunpack.c.l.b16 %v127
    %v485 = vunpack.c.h.b16 %v127
    %v486 = vunpack.c.l.b16 %v128
    %v487 = vunpack.c.h.b16 %v128
    %v488 = vunpack.c.l.b16 %v129
    %v489 = vunpack.c.h.b16 %v129
    %v490 = vunpack.c.l.b16 %v130
    %v491 = vunpack.c.h.b16 %v130
    %v492 = vunpack.c.l.b16 %v131
    %v493 = vunpack.c.h.b16 %v131
    %v494 = vunpack.c.l.b16 %v132
    %v495 = vunpack.c.h.b16 %v132
    %v496 = vunpack.c.l.b16 %v133
    %v497 = vunpack.c.h.b16 %v133
    %v498 = vunpack.c.l.b16 %v134
    %v499 = vunpack.c.h.b16 %v134
    %v500 = vunpack.c.l.b16 %v135
    %v501 = vunpack.c.h.b16 %v135
    %v502 = vunpack.c.l.b16 %v136
    %v503 = vunpack.c.h.b16 %v136
    %v504 = vunpack.c.l.b16 %v137
    %v505 = vunpack.c.h.b16 %v137
    %v506 = vunpack.c.l.b16 %v138
    %v507 = vunpack.c.h.b16 %v138
    %v508 = vunpack.c.l.b16 %v139
    %v509 = vunpack.c.h.b16 %v139
    %v510 = vunpack.c.l.b16 %v140
    %v511 = vunpack.c.h.b16 %v140
    %v512 = vunpack.c.l.b16 %v141
    %v513 = vunpack.c.h.b16 %v141
    %v514 = vunpack.c.l.b16 %v142
    %v515 = vunpack.c.h.b16 %v142
    %v516 = vunpack.c.l.b16 %v143
    %v517 = vunpack.c.h.b16 %v143
    %v518 = vunpack.c.l.b16 %v144
    %v519 = vunpack.c.h.b16 %v144
    %v520 = vunpack.c.l.b16 %v145
    %v521 = vunpack.c.h.b16 %v145
    %v522 = vunpack.c.l.b16 %v146
    %v523 = vunpack.c.h.b16 %v146
    %v524 = vunpack.c.l.b16 %v147
    %v525 = vunpack.c.h.b16 %v147
    %v526 = vunpack.c.l.b16 %v148
    %v527 = vunpack.c.h.b16 %v148
    %v528 = vunpack.c.l.b16 %v149
    %v529 = vunpack.c.h.b16 %v149
    %v530 = vunpack.c.l.b16 %v150
    %v531 = vunpack.c.h.b16 %v150
    %v532 = vunpack.c.l.b16 %v151
    %v533 = vunpack.c.h.b16 %v151
    %v534 = vunpack.c.l.b16 %v152
    %v535 = vunpack.c.h.b16 %v152
    %v536 = vunpack.c.l.b16 %v153
    %v537 = vunpack.c.h.b16 %v153
    %v538 = vunpack.c.l.b16 %v154
    %v539 = vunpack.c.h.b16 %v154
    %v540 = vunpack.c.l.b16 %v155
    %v541 = vunpack.c.h.b16 %v155
    %v542 = vunpack.c.l.b16 %v156
    %v543 = vunpack.c.h.b16 %v156
    %v544 = vunpack.c.l.b16 %v157
    %v545 = vunpack.c.h.b16 %v157
    %v546 = vunpack.c.l.b16 %v158
    %v547 = vunpack.c.h.b16 %v158
    %v548 = vunpack.c.l.b16 %v159
    %v549 = vunpack.c.h.b16 %v159
    %v550 = vunpack.c.l.b16 %v160
    %v551 = vunpack.c.h.b16 %v160
    %v552 = vunpack.c.l.b16 %v161
    %v553 = vunpack.c.h.b16 %v161
    %v554 = vunpack.c.l.b16 %v162
    %v555 = vunpack.c.h.b16 %v162
    %v556 = vunpack.c.l.b16 %v163
    %v557 = vunpack.c.h.b16 %v163
    %v558 = vunpack.c.l.b16 %v164
    %v559 = vunpack.c.h.b16 %v164
    %v560 = vunpack.c.l.b16 %v165
    %v561 = vunpack.c.h.b16 %v165
    %v562 = vunpack.c.l.b16 %v166
    %v563 = vunpack.c.h.b16 %v166
    %v564 = vunpack.c.l.b16 %v167
    %v565 = vunpack.c.h.b16 %v167
    %v566 = vunpack.c.l.b16 %v168
    %v567 = vunpack.c.h.b16 %v168
    %v568 = vunpack.c.l.b16 %v169
    %v569 = vunpack.c.h.b16 %v169
    %v570 = vunpack.c.l.b16 %v170
    %v571 = vunpack.c.h.b16 %v170
    %v572 = vunpack.c.l.b16 %v171
    %v573 = vunpack.c.h.b16 %v171
    %v574 = vunpack.c.l.b16 %v172
    %v575 = vunpack.c.h.b16 %v172
    %v576 = vunpack.c.l.b16 %v173
    %v577 = vunpack.c.h.b16 %v173
    %v578 = vunpack.c.l.b16 %v174
    %v579 = vunpack.c.h.b16 %v174
    %v580 = vunpack.c.l.b16 %v175
    %v581 = vunpack.c.h.b16 %v175
    %v582 = vunpack.c.l.b16 %v176
    %v583 = vunpack.c.h.b16 %v176
    %v584 = vunpack.c.l.b16 %v177
    %v585 = vunpack.c.h.b16 %v177
    %v586 = vunpack.c.l.b16 %v178
    %v587 = vunpack.c.h.b16 %v178
    %v588 = vunpack.c.l.b16 %v179
    %v589 = vunpack.c.h.b16 %v179
    %v590 = vunpack.c.l.b16 %v180
    %v591 = vunpack.c.h.b16 %v180
    %v592 = vunpack.c.l.b16 %v181
    %v593 = vunpack.c.h.b16 %v181
    %v594 = vunpack.c.l.b16 %v182
    %v595 = vunpack.c.h.b16 %v182
    %v596 = vunpack.c.l.b16 %v183
    %v597 = vunpack.c.h.b16 %v183
    %v598 = vunpack.c.l.b16 %v184
    %v599 = vunpack.c.h.b16 %v184
    %v600 = vunpack.c.l.b16 %v185
    %v601 = vunpack.c.h.b16 %v185
    %v602 = vunpack.c.l.b16 %v186
    %v603 = vunpack.c.h.b16 %v186
    %v604 = vunpack.c.l.b16 %v187
    %v605 = vunpack.c.h.b16 %v187
    %v606 = vunpack.c.l.b16 %v188
    %v607 = vunpack.c.h.b16 %v188
    %v608 = vunpack.c.l.b16 %v189
    %v609 = vunpack.c.h.b16 %v189
    %v610 = vunpack.c.l.b16 %v190
    %v611 = vunpack.c.h.b16 %v190
    %v612 = vunpack.c.l.b16 %v191
    %v613 = vunpack.c.h.b16 %v191
    %v614 = vunpack.c.l.b16 %v192
    %v615 = vunpack.c.h.b16 %v192
    %v616 = vunpack.c.l.b16 %v193
    %v617 = vunpack.c.h.b16 %v193
    %v618 = vunpack.c.l.b16 %v194
    %v619 = vunpack.c.h.b16 %v194
    %v620 = vunpack.c.l.b16 %v195
    %v621 = vunpack.c.h.b16 %v195
    %v622 = vunpack.c.l.b16 %v196
    %v623 = vunpack.c.h.b16 %v196
    %v624 = vunpack.c.l.b16 %v197
    %v625 = vunpack.c.h.b16 %v197
    %v626 = vunpack.c.l.b16 %v198
    %v627 = vunpack.c.h.b16 %v198
    %v628 = vunpack.c.l.b16 %v199
    %v629 = vunpack.c.h.b16 %v199
    %v630 = vunpack.c.l.b16 %v200
    %v631 = vunpack.c.h.b16 %v200
    %v632 = vunpack.c.l.b16 %v201
    %v633 = vunpack.c.h.b16 %v201
    %v634 = vunpack.c.l.b16 %v202
    %v635 = vunpack.c.h.b16 %v202
    %v636 = vunpack.c.l.b16 %v203
    %v637 = vunpack.c.h.b16 %v203
    %v638 = vunpack.c.l.b16 %v204
    %v639 = vunpack.c.h.b16 %v204
    %v640 = vunpack.c.l.b16 %v205
    %v641 = vunpack.c.h.b16 %v205
    %v642 = vunpack.c.l.b16 %v206
    %v643 = vunpack.c.h.b16 %v206
    %v644 = vunpack.c.l.b16 %v207
    %v645 = vunpack.c.h.b16 %v207
    %v646 = vunpack.c.l.b16 %v208
    %v647 = vunpack.c.h.b16 %v208
    %v648 = vunpack.c.l.b16 %v209
    %v649 = vunpack.c.h.b16 %v209
    %v650 = vunpack.c.l.b16 %v210
    %v651 = vunpack.c.h.b16 %v210
    %v652 = vunpack.c.l.b16 %v211
    %v653 = vunpack.c.h.b16 %v211
    %v654 = vpack.c.b16 %v406, %v398
    %v655 = vpack.c.b16 %v407, %v399
    %v656 = vpack.c.b16 %v408, %v400
    %v657 = vpack.c.b16 %v409, %v401
    %v658 = vpack.c.b16 %v410, %v402
    %v659 = vpack.c.b16 %v411, %v403
    %v660 = vpack.c.b16 %v412, %v404
    %v661 = vpack.c.b16 %v413, %v405
    %v662 = vpack.c.b16 %v422, %v414
    %v663 = vpack.c.b16 %v423, %v415
    %v664 = vpack.c.b16 %v424, %v416
    %v665 = vpack.c.b16 %v425, %v417
    %v666 = vpack.c.b16 %v426, %v418
    %v667 = vpack.c.b16 %v427, %v419
    %v668 = vpack.c.b16 %v428, %v420
    %v669 = vpack.c.b16 %v429, %v421
    %v670 = vpack.c.b16 %v438, %v430
    %v671 = vpack.c.b16 %v439, %v431
    %v672 = vpack.c.b16 %v440, %v432
    %v673 = vpack.c.b16 %v441, %v433
    %v674 = vpack.c.b16 %v442, %v434
    %v675 = vpack.c.b16 %v443, %v435
    %v676 = vpack.c.b16 %v444, %v436
    %v677 = vpack.c.b16 %v445, %v437
    %v678 = vpack.c.b16 %v454, %v446
    %v679 = vpack.c.b16 %v455, %v447
    %v680 = vpack.c.b16 %v456, %v448
    %v681 = vpack.c.b16 %v457, %v449
    %v682 = vpack.c.b16 %v458, %v450
    %v683 = vpack.c.b16 %v459, %v451
    %v684 = vpack.c.b16 %v460, %v452
    %v685 = vpack.c.b16 %v461, %v453
    %v686 = vpack.c.b16 %v470, %v462
    %v687 = vpack.c.b16 %v471, %v463
    %v688 = vpack.c.b16 %v472, %v464
    %v689 = vpack.c.b16 %v473, %v465
    %v690 = vpack.c.b16 %v474, %v466
    %v691 = vpack.c.b16 %v475, %v467
    %v692 = vpack.c.b16 %v476, %v468
    %v693 = vpack.c.b16 %v477, %v469
    %v694 = vpack.c.b16 %v486, %v478
    %v695 = vpack.c.b16 %v487, %v479
    %v696 = vpack.c.b16 %v488, %v480
    %v697 = vpack.c.b16 %v489, %v481
    %v698 = vpack.c.b16 %v490, %v482
    %v699 = vpack.c.b16 %v491, %v483
    %v700 = vpack.c.b16 %v492, %v484
    %v701 = vpack.c.b16 %v493, %v485
    %v702 = vpack.c.b16 %v502, %v494
    %v703 = vpack.c.b16 %v503, %v495
    %v704 = vpack.c.b16 %v504, %v496
    %v705 = vpack.c.b16 %v505, %v497
    %v706 = vpack.c.b16 %v506, %v498
    %v707 = vpack.c.b16 %v507, %v499
    %v708 = vpack.c.b16 %v508, %v500
    %v709 = vpack.c.b16 %v509, %v501
    %v710 = vpack.c.b16 %v518, %v510
    %v711 = vpack.c.b16 %v519, %v511
    %v712 = vpack.c.b16 %v520, %v512
    %v713 = vpack.c.b16 %v521, %v513
    %v714 = vpack.c.b16 %v522, %v514
    %v715 = vpack.c.b16 %v523, %v515
    %v716 = vpack.c.b16 %v524, %v516
    %v717 = vpack.c.b16 %v525, %v517
    %v718 = vpack.c.b16 %v534, %v526
    %v719 = vpack.c.b16 %v535, %v527
    %v720 = vpack.c.b16 %v536, %v528
    %v721 = vpack.c.b16 %v537, %v529
    %v722 = vpack.c.b16 %v538, %v530
    %v723 = vpack.c.b16 %v539, %v531
    %v724 = vpack.c.b16 %v540, %v532
    %v725 = vpack.c.b16 %v541, %v533
    %v726 = vpack.c.b16 %v550, %v542
    %v727 = vpack.c.b16 %v551, %v543
    %v728 = vpack.c.b16 %v552, %v544
    %v729 = vpack.c.b16 %v553, %v545
    %v730 = vpack.c.b16 %v554, %v546
    %v731 = vpack.c.b16 %v555, %v547
    %v732 = vpack.c.b16 %v556, %v548
    %v733 = vpack.c.b16 %v557, %v549
    %v734 = vpack.c.b16 %v566, %v558
    %v735 = vpack.c.b16 %v567, %v559
    %v736 = vpack.c.b16 %v568, %v560
    %v737 = vpack.c.b16 %v569, %v561
    %v738 = vpack.c.b16 %v570, %v562
    %v739 = vpack.c.b16 %v571, %v563
    %v740 = vpack.c.b16 %v572, %v564
    %v741 = vpack.c.b16 %v573, %v565
    %v742 = vpack.c.b16 %v582, %v574
    %v743 = vpack.c.b16 %v583, %v575
    %v744 = vpack.c.b16 %v584, %v576
    %v745 = vpack.c.b16 %v585, %v577
    %v746 = vpack.c.b16 %v586, %v578
    %v747 = vpack.c.b16 %v587, %v579
    %v748 = vpack.c.b16 %v588, %v580
    %v749 = vpack.c.b16 %v589, %v581
    %v750 = vpack.c.b16 %v598, %v590
    %v751 = vpack.c.b16 %v599, %v591
    %v752 = vpack.c.b16 %v600, %v592
    %v753 = vpack.c.b16 %v601, %v593
    %v754 = vpack.c.b16 %v602, %v594
    %v755 = vpack.c.b16 %v603, %v595
    %v756 = vpack.c.b16 %v604, %v596
    %v757 = vpack.c.b16 %v605, %v597
    %v758 = vpack.c.b16 %v614, %v606
    %v759 = vpack.c.b16 %v615, %v607
    %v760 = vpack.c.b16 %v616, %v608
    %v761 = vpack.c.b16 %v617, %v609
    %v762 = vpack.c.b16 %v618, %v610
    %v763 = vpack.c.b16 %v619, %v611
    %v764 = vpack.c.b16 %v620, %v612
    %v765 = vpack.c.b16 %v621, %v613
    %v766 = vpack.c.b16 %v630, %v622
    %v767 = vpack.c.b16 %v631, %v623
    %v768 = vpack.c.b16 %v632, %v624
    %v769 = vpack.c.b16 %v633, %v625
    %v770 = vpack.c.b16 %v634, %v626
    %v771 = vpack.c.b16 %v635, %v627
    %v772 = vpack.c.b16 %v636, %v628
    %v773 = vpack.c.b16 %v637, %v629
    %v774 = vpack.c.b16 %v646, %v638
    %v775 = vpack.c.b16 %v647, %v639
    %v776 = vpack.c.b16 %v648, %v640
    %v777 = vpack.c.b16 %v649, %v641
    %v778 = vpack.c.b16 %v650, %v642
    %v779 = vpack.c.b16 %v651, %v643
    %v780 = vpack.c.b16 %v652, %v644
    %v781 = vpack.c.b16 %v653, %v645
    %910 = vmatpush.bf16.msra.mxu0 %v710
    %911 = vmatpush.bf16.msra.mxu0 %v702
    %912 = vmatpush.bf16.msra.mxu0 %v694
    %913 = vmatpush.bf16.msra.mxu0 %v686
    %914 = vmatpush.bf16.msra.mxu0 %v678
    %915 = vmatpush.bf16.msra.mxu0 %v670
    %916 = vmatpush.bf16.msra.mxu0 %v662
    %917 = vmatpush.bf16.msra.mxu0 %v654
    %918 = vmatmul.bf16.gmra.mxu0 %v254
    %v919 = vpop.f32.mrf.mxu0
    %v920 = vadd.f32 %v214, %v919
    %v921 = vpop.f32.mrf.mxu0
    %v922 = vadd.f32 %v214, %v921
    %923 = vmatmul.bf16.gmra.mxu0 %v256
    %v924 = vpop.f32.mrf.mxu0
    %v925 = vadd.f32 %v214, %v924
    %v926 = vpop.f32.mrf.mxu0
    %v927 = vadd.f32 %v214, %v926
    %928 = vmatmul.bf16.gmra.mxu0 %v258
    %v929 = vpop.f32.mrf.mxu0
    %v930 = vadd.f32 %v214, %v929
    %v931 = vpop.f32.mrf.mxu0
    %v932 = vadd.f32 %v214, %v931
    %933 = vmatmul.bf16.gmra.mxu0 %v260
    %v934 = vpop.f32.mrf.mxu0
    %v935 = vadd.f32 %v214, %v934
    %v936 = vpop.f32.mrf.mxu0
    %v937 = vadd.f32 %v214, %v936
    %938 = vdwg.mxu0
    %939 = vmatpush.bf16.msra.mxu0 %v774
    %940 = vmatpush.bf16.msra.mxu0 %v766
    %941 = vmatpush.bf16.msra.mxu0 %v758
    %942 = vmatpush.bf16.msra.mxu0 %v750
    %943 = vmatpush.bf16.msra.mxu0 %v742
    %944 = vmatpush.bf16.msra.mxu0 %v734
    %945 = vmatpush.bf16.msra.mxu0 %v726
    %946 = vmatpush.bf16.msra.mxu0 %v718
    %947 = vmatmul.bf16.gmra.mxu0 %v255
    %v948 = vpop.f32.mrf.mxu0
    %v949 = vadd.f32 %v920, %v948
    %v950 = vpop.f32.mrf.mxu0
    %v951 = vadd.f32 %v922, %v950
    %952 = vmatmul.bf16.gmra.mxu0 %v257
    %v953 = vpop.f32.mrf.mxu0
    %v954 = vadd.f32 %v925, %v953
    %v955 = vpop.f32.mrf.mxu0
    %v956 = vadd.f32 %v927, %v955
    %957 = vmatmul.bf16.gmra.mxu0 %v259
    %v958 = vpop.f32.mrf.mxu0
    %v959 = vadd.f32 %v930, %v958
    %v960 = vpop.f32.mrf.mxu0
    %v961 = vadd.f32 %v932, %v960
    %962 = vmatmul.bf16.gmra.mxu0 %v261
    %v963 = vpop.f32.mrf.mxu0
    %v964 = vadd.f32 %v935, %v963
    %v965 = vpop.f32.mrf.mxu0
    %v966 = vadd.f32 %v937, %v965
    %967 = vdwg.mxu0
    %968 = vmatpush.bf16.msra.mxu0 %v711
    %969 = vmatpush.bf16.msra.mxu0 %v703
    %970 = vmatpush.bf16.msra.mxu0 %v695
    %971 = vmatpush.bf16.msra.mxu0 %v687
    %972 = vmatpush.bf16.msra.mxu0 %v679
    %973 = vmatpush.bf16.msra.mxu0 %v671
    %974 = vmatpush.bf16.msra.mxu0 %v663
    %975 = vmatpush.bf16.msra.mxu0 %v655
    %976 = vmatmul.bf16.gmra.mxu0 %v254
    %v977 = vpop.f32.mrf.mxu0
    %v978 = vadd.f32 %v215, %v977
    %v979 = vpop.f32.mrf.mxu0
    %v980 = vadd.f32 %v215, %v979
    %981 = vmatmul.bf16.gmra.mxu0 %v256
    %v982 = vpop.f32.mrf.mxu0
    %v983 = vadd.f32 %v215, %v982
    %v984 = vpop.f32.mrf.mxu0
    %v985 = vadd.f32 %v215, %v984
    %986 = vmatmul.bf16.gmra.mxu0 %v258
    %v987 = vpop.f32.mrf.mxu0
    %v988 = vadd.f32 %v215, %v987
    %v989 = vpop.f32.mrf.mxu0
    %v990 = vadd.f32 %v215, %v989
    %991 = vmatmul.bf16.gmra.mxu0 %v260
    %v992 = vpop.f32.mrf.mxu0
    %v993 = vadd.f32 %v215, %v992
    %v994 = vpop.f32.mrf.mxu0
    %v995 = vadd.f32 %v215, %v994
    %996 = vdwg.mxu0
    %997 = vmatpush.bf16.msra.mxu0 %v775
    %998 = vmatpush.bf16.msra.mxu0 %v767
    %999 = vmatpush.bf16.msra.mxu0 %v759
    %1000 = vmatpush.bf16.msra.mxu0 %v751
    %1001 = vmatpush.bf16.msra.mxu0 %v743
    %1002 = vmatpush.bf16.msra.mxu0 %v735
    %1003 = vmatpush.bf16.msra.mxu0 %v727
    %1004 = vmatpush.bf16.msra.mxu0 %v719
    %1005 = vmatmul.bf16.gmra.mxu0 %v255
    %v1006 = vpop.f32.mrf.mxu0
    %v1007 = vadd.f32 %v978, %v1006
    %v1008 = vpop.f32.mrf.mxu0
    %v1009 = vadd.f32 %v980, %v1008
    %1010 = vmatmul.bf16.gmra.mxu0 %v257
    %v1011 = vpop.f32.mrf.mxu0
    %v1012 = vadd.f32 %v983, %v1011
    %v1013 = vpop.f32.mrf.mxu0
    %v1014 = vadd.f32 %v985, %v1013
    %1015 = vmatmul.bf16.gmra.mxu0 %v259
    %v1016 = vpop.f32.mrf.mxu0
    %v1017 = vadd.f32 %v988, %v1016
    %v1018 = vpop.f32.mrf.mxu0
    %v1019 = vadd.f32 %v990, %v1018
    %1020 = vmatmul.bf16.gmra.mxu0 %v261
    %v1021 = vpop.f32.mrf.mxu0
    %v1022 = vadd.f32 %v993, %v1021
    %v1023 = vpop.f32.mrf.mxu0
    %v1024 = vadd.f32 %v995, %v1023
    %1025 = vdwg.mxu0
    %1026 = vmatpush.bf16.msra.mxu0 %v712
    %1027 = vmatpush.bf16.msra.mxu0 %v704
    %1028 = vmatpush.bf16.msra.mxu0 %v696
    %1029 = vmatpush.bf16.msra.mxu0 %v688
    %1030 = vmatpush.bf16.msra.mxu0 %v680
    %1031 = vmatpush.bf16.msra.mxu0 %v672
    %1032 = vmatpush.bf16.msra.mxu0 %v664
    %1033 = vmatpush.bf16.msra.mxu0 %v656
    %1034 = vmatmul.bf16.gmra.mxu0 %v254
    %v1035 = vpop.f32.mrf.mxu0
    %v1036 = vadd.f32 %v216, %v1035
    %v1037 = vpop.f32.mrf.mxu0
    %v1038 = vadd.f32 %v216, %v1037
    %1039 = vmatmul.bf16.gmra.mxu0 %v256
    %v1040 = vpop.f32.mrf.mxu0
    %v1041 = vadd.f32 %v216, %v1040
    %v1042 = vpop.f32.mrf.mxu0
    %v1043 = vadd.f32 %v216, %v1042
    %1044 = vmatmul.bf16.gmra.mxu0 %v258
    %v1045 = vpop.f32.mrf.mxu0
    %v1046 = vadd.f32 %v216, %v1045
    %v1047 = vpop.f32.mrf.mxu0
    %v1048 = vadd.f32 %v216, %v1047
    %1049 = vmatmul.bf16.gmra.mxu0 %v260
    %v1050 = vpop.f32.mrf.mxu0
    %v1051 = vadd.f32 %v216, %v1050
    %v1052 = vpop.f32.mrf.mxu0
    %v1053 = vadd.f32 %v216, %v1052
    %1054 = vdwg.mxu0
    %1055 = vmatpush.bf16.msra.mxu0 %v776
    %1056 = vmatpush.bf16.msra.mxu0 %v768
    %1057 = vmatpush.bf16.msra.mxu0 %v760
    %1058 = vmatpush.bf16.msra.mxu0 %v752
    %1059 = vmatpush.bf16.msra.mxu0 %v744
    %1060 = vmatpush.bf16.msra.mxu0 %v736
    %1061 = vmatpush.bf16.msra.mxu0 %v728
    %1062 = vmatpush.bf16.msra.mxu0 %v720
    %1063 = vmatmul.bf16.gmra.mxu0 %v255
    %v1064 = vpop.f32.mrf.mxu0
    %v1065 = vadd.f32 %v1036, %v1064
    %v1066 = vpop.f32.mrf.mxu0
    %v1067 = vadd.f32 %v1038, %v1066
    %1068 = vmatmul.bf16.gmra.mxu0 %v257
    %v1069 = vpop.f32.mrf.mxu0
    %v1070 = vadd.f32 %v1041, %v1069
    %v1071 = vpop.f32.mrf.mxu0
    %v1072 = vadd.f32 %v1043, %v1071
    %1073 = vmatmul.bf16.gmra.mxu0 %v259
    %v1074 = vpop.f32.mrf.mxu0
    %v1075 = vadd.f32 %v1046, %v1074
    %v1076 = vpop.f32.mrf.mxu0
    %v1077 = vadd.f32 %v1048, %v1076
    %1078 = vmatmul.bf16.gmra.mxu0 %v261
    %v1079 = vpop.f32.mrf.mxu0
    %v1080 = vadd.f32 %v1051, %v1079
    %v1081 = vpop.f32.mrf.mxu0
    %v1082 = vadd.f32 %v1053, %v1081
    %1083 = vdwg.mxu0
    %1084 = vmatpush.bf16.msra.mxu0 %v713
    %1085 = vmatpush.bf16.msra.mxu0 %v705
    %1086 = vmatpush.bf16.msra.mxu0 %v697
    %1087 = vmatpush.bf16.msra.mxu0 %v689
    %1088 = vmatpush.bf16.msra.mxu0 %v681
    %1089 = vmatpush.bf16.msra.mxu0 %v673
    %1090 = vmatpush.bf16.msra.mxu0 %v665
    %1091 = vmatpush.bf16.msra.mxu0 %v657
    %1092 = vmatmul.bf16.gmra.mxu0 %v254
    %v1093 = vpop.f32.mrf.mxu0
    %v1094 = vadd.f32 %v217, %v1093
    %v1095 = vpop.f32.mrf.mxu0
    %v1096 = vadd.f32 %v217, %v1095
    %1097 = vmatmul.bf16.gmra.mxu0 %v256
    %v1098 = vpop.f32.mrf.mxu0
    %v1099 = vadd.f32 %v217, %v1098
    %v1100 = vpop.f32.mrf.mxu0
    %v1101 = vadd.f32 %v217, %v1100
    %1102 = vmatmul.bf16.gmra.mxu0 %v258
    %v1103 = vpop.f32.mrf.mxu0
    %v1104 = vadd.f32 %v217, %v1103
    %v1105 = vpop.f32.mrf.mxu0
    %v1106 = vadd.f32 %v217, %v1105
    %1107 = vmatmul.bf16.gmra.mxu0 %v260
    %v1108 = vpop.f32.mrf.mxu0
    %v1109 = vadd.f32 %v217, %v1108
    %v1110 = vpop.f32.mrf.mxu0
    %v1111 = vadd.f32 %v217, %v1110
    %1112 = vdwg.mxu0
    %1113 = vmatpush.bf16.msra.mxu0 %v777
    %1114 = vmatpush.bf16.msra.mxu0 %v769
    %1115 = vmatpush.bf16.msra.mxu0 %v761
    %1116 = vmatpush.bf16.msra.mxu0 %v753
    %1117 = vmatpush.bf16.msra.mxu0 %v745
    %1118 = vmatpush.bf16.msra.mxu0 %v737
    %1119 = vmatpush.bf16.msra.mxu0 %v729
    %1120 = vmatpush.bf16.msra.mxu0 %v721
    %1121 = vmatmul.bf16.gmra.mxu0 %v255
    %v1122 = vpop.f32.mrf.mxu0
    %v1123 = vadd.f32 %v1094, %v1122
    %v1124 = vpop.f32.mrf.mxu0
    %v1125 = vadd.f32 %v1096, %v1124
    %1126 = vmatmul.bf16.gmra.mxu0 %v257
    %v1127 = vpop.f32.mrf.mxu0
    %v1128 = vadd.f32 %v1099, %v1127
    %v1129 = vpop.f32.mrf.mxu0
    %v1130 = vadd.f32 %v1101, %v1129
    %1131 = vmatmul.bf16.gmra.mxu0 %v259
    %v1132 = vpop.f32.mrf.mxu0
    %v1133 = vadd.f32 %v1104, %v1132
    %v1134 = vpop.f32.mrf.mxu0
    %v1135 = vadd.f32 %v1106, %v1134
    %1136 = vmatmul.bf16.gmra.mxu0 %v261
    %v1137 = vpop.f32.mrf.mxu0
    %v1138 = vadd.f32 %v1109, %v1137
    %v1139 = vpop.f32.mrf.mxu0
    %v1140 = vadd.f32 %v1111, %v1139
    %1141 = vdwg.mxu0
    %1142 = vmatpush.bf16.msra.mxu0 %v714
    %1143 = vmatpush.bf16.msra.mxu0 %v706
    %1144 = vmatpush.bf16.msra.mxu0 %v698
    %1145 = vmatpush.bf16.msra.mxu0 %v690
    %1146 = vmatpush.bf16.msra.mxu0 %v682
    %1147 = vmatpush.bf16.msra.mxu0 %v674
    %1148 = vmatpush.bf16.msra.mxu0 %v666
    %1149 = vmatpush.bf16.msra.mxu0 %v658
    %1150 = vmatmul.bf16.gmra.mxu0 %v254
    %v1151 = vpop.f32.mrf.mxu0
    %v1152 = vadd.f32 %v218, %v1151
    %v1153 = vpop.f32.mrf.mxu0
    %v1154 = vadd.f32 %v218, %v1153
    %1155 = vmatmul.bf16.gmra.mxu0 %v256
    %v1156 = vpop.f32.mrf.mxu0
    %v1157 = vadd.f32 %v218, %v1156
    %v1158 = vpop.f32.mrf.mxu0
    %v1159 = vadd.f32 %v218, %v1158
    %1160 = vmatmul.bf16.gmra.mxu0 %v258
    %v1161 = vpop.f32.mrf.mxu0
    %v1162 = vadd.f32 %v218, %v1161
    %v1163 = vpop.f32.mrf.mxu0
    %v1164 = vadd.f32 %v218, %v1163
    %1165 = vmatmul.bf16.gmra.mxu0 %v260
    %v1166 = vpop.f32.mrf.mxu0
    %v1167 = vadd.f32 %v218, %v1166
    %v1168 = vpop.f32.mrf.mxu0
    %v1169 = vadd.f32 %v218, %v1168
    %1170 = vdwg.mxu0
    %1171 = vmatpush.bf16.msra.mxu0 %v778
    %1172 = vmatpush.bf16.msra.mxu0 %v770
    %1173 = vmatpush.bf16.msra.mxu0 %v762
    %1174 = vmatpush.bf16.msra.mxu0 %v754
    %1175 = vmatpush.bf16.msra.mxu0 %v746
    %1176 = vmatpush.bf16.msra.mxu0 %v738
    %1177 = vmatpush.bf16.msra.mxu0 %v730
    %1178 = vmatpush.bf16.msra.mxu0 %v722
    %1179 = vmatmul.bf16.gmra.mxu0 %v255
    %v1180 = vpop.f32.mrf.mxu0
    %v1181 = vadd.f32 %v1152, %v1180
    %v1182 = vpop.f32.mrf.mxu0
    %v1183 = vadd.f32 %v1154, %v1182
    %1184 = vmatmul.bf16.gmra.mxu0 %v257
    %v1185 = vpop.f32.mrf.mxu0
    %v1186 = vadd.f32 %v1157, %v1185
    %v1187 = vpop.f32.mrf.mxu0
    %v1188 = vadd.f32 %v1159, %v1187
    %1189 = vmatmul.bf16.gmra.mxu0 %v259
    %v1190 = vpop.f32.mrf.mxu0
    %v1191 = vadd.f32 %v1162, %v1190
    %v1192 = vpop.f32.mrf.mxu0
    %v1193 = vadd.f32 %v1164, %v1192
    %1194 = vmatmul.bf16.gmra.mxu0 %v261
    %v1195 = vpop.f32.mrf.mxu0
    %v1196 = vadd.f32 %v1167, %v1195
    %v1197 = vpop.f32.mrf.mxu0
    %v1198 = vadd.f32 %v1169, %v1197
    %1199 = vdwg.mxu0
    %1200 = vmatpush.bf16.msra.mxu0 %v715
    %1201 = vmatpush.bf16.msra.mxu0 %v707
    %1202 = vmatpush.bf16.msra.mxu0 %v699
    %1203 = vmatpush.bf16.msra.mxu0 %v691
    %1204 = vmatpush.bf16.msra.mxu0 %v683
    %1205 = vmatpush.bf16.msra.mxu0 %v675
    %1206 = vmatpush.bf16.msra.mxu0 %v667
    %1207 = vmatpush.bf16.msra.mxu0 %v659
    %1208 = vmatmul.bf16.gmra.mxu0 %v254
    %v1209 = vpop.f32.mrf.mxu0
    %v1210 = vadd.f32 %v219, %v1209
    %v1211 = vpop.f32.mrf.mxu0
    %v1212 = vadd.f32 %v219, %v1211
    %1213 = vmatmul.bf16.gmra.mxu0 %v256
    %v1214 = vpop.f32.mrf.mxu0
    %v1215 = vadd.f32 %v219, %v1214
    %v1216 = vpop.f32.mrf.mxu0
    %v1217 = vadd.f32 %v219, %v1216
    %1218 = vmatmul.bf16.gmra.mxu0 %v258
    %v1219 = vpop.f32.mrf.mxu0
    %v1220 = vadd.f32 %v219, %v1219
    %v1221 = vpop.f32.mrf.mxu0
    %v1222 = vadd.f32 %v219, %v1221
    %1223 = vmatmul.bf16.gmra.mxu0 %v260
    %v1224 = vpop.f32.mrf.mxu0
    %v1225 = vadd.f32 %v219, %v1224
    %v1226 = vpop.f32.mrf.mxu0
    %v1227 = vadd.f32 %v219, %v1226
    %1228 = vdwg.mxu0
    %1229 = vmatpush.bf16.msra.mxu0 %v779
    %1230 = vmatpush.bf16.msra.mxu0 %v771
    %1231 = vmatpush.bf16.msra.mxu0 %v763
    %1232 = vmatpush.bf16.msra.mxu0 %v755
    %1233 = vmatpush.bf16.msra.mxu0 %v747
    %1234 = vmatpush.bf16.msra.mxu0 %v739
    %1235 = vmatpush.bf16.msra.mxu0 %v731
    %1236 = vmatpush.bf16.msra.mxu0 %v723
    %1237 = vmatmul.bf16.gmra.mxu0 %v255
    %v1238 = vpop.f32.mrf.mxu0
    %v1239 = vadd.f32 %v1210, %v1238
    %v1240 = vpop.f32.mrf.mxu0
    %v1241 = vadd.f32 %v1212, %v1240
    %1242 = vmatmul.bf16.gmra.mxu0 %v257
    %v1243 = vpop.f32.mrf.mxu0
    %v1244 = vadd.f32 %v1215, %v1243
    %v1245 = vpop.f32.mrf.mxu0
    %v1246 = vadd.f32 %v1217, %v1245
    %1247 = vmatmul.bf16.gmra.mxu0 %v259
    %v1248 = vpop.f32.mrf.mxu0
    %v1249 = vadd.f32 %v1220, %v1248
    %v1250 = vpop.f32.mrf.mxu0
    %v1251 = vadd.f32 %v1222, %v1250
    %1252 = vmatmul.bf16.gmra.mxu0 %v261
    %v1253 = vpop.f32.mrf.mxu0
    %v1254 = vadd.f32 %v1225, %v1253
    %v1255 = vpop.f32.mrf.mxu0
    %v1256 = vadd.f32 %v1227, %v1255
    %1257 = vdwg.mxu0
    %1258 = vmatpush.bf16.msra.mxu0 %v716
    %1259 = vmatpush.bf16.msra.mxu0 %v708
    %1260 = vmatpush.bf16.msra.mxu0 %v700
    %1261 = vmatpush.bf16.msra.mxu0 %v692
    %1262 = vmatpush.bf16.msra.mxu0 %v684
    %1263 = vmatpush.bf16.msra.mxu0 %v676
    %1264 = vmatpush.bf16.msra.mxu0 %v668
    %1265 = vmatpush.bf16.msra.mxu0 %v660
    %1266 = vmatmul.bf16.gmra.mxu0 %v254
    %v1267 = vpop.f32.mrf.mxu0
    %v1268 = vadd.f32 %v220, %v1267
    %v1269 = vpop.f32.mrf.mxu0
    %v1270 = vadd.f32 %v220, %v1269
    %1271 = vmatmul.bf16.gmra.mxu0 %v256
    %v1272 = vpop.f32.mrf.mxu0
    %v1273 = vadd.f32 %v220, %v1272
    %v1274 = vpop.f32.mrf.mxu0
    %v1275 = vadd.f32 %v220, %v1274
    %1276 = vmatmul.bf16.gmra.mxu0 %v258
    %v1277 = vpop.f32.mrf.mxu0
    %v1278 = vadd.f32 %v220, %v1277
    %v1279 = vpop.f32.mrf.mxu0
    %v1280 = vadd.f32 %v220, %v1279
    %1281 = vmatmul.bf16.gmra.mxu0 %v260
    %v1282 = vpop.f32.mrf.mxu0
    %v1283 = vadd.f32 %v220, %v1282
    %v1284 = vpop.f32.mrf.mxu0
    %v1285 = vadd.f32 %v220, %v1284
    %1286 = vdwg.mxu0
    %1287 = vmatpush.bf16.msra.mxu0 %v780
    %1288 = vmatpush.bf16.msra.mxu0 %v772
    %1289 = vmatpush.bf16.msra.mxu0 %v764
    %1290 = vmatpush.bf16.msra.mxu0 %v756
    %1291 = vmatpush.bf16.msra.mxu0 %v748
    %1292 = vmatpush.bf16.msra.mxu0 %v740
    %1293 = vmatpush.bf16.msra.mxu0 %v732
    %1294 = vmatpush.bf16.msra.mxu0 %v724
    %1295 = vmatmul.bf16.gmra.mxu0 %v255
    %v1296 = vpop.f32.mrf.mxu0
    %v1297 = vadd.f32 %v1268, %v1296
    %v1298 = vpop.f32.mrf.mxu0
    %v1299 = vadd.f32 %v1270, %v1298
    %1300 = vmatmul.bf16.gmra.mxu0 %v257
    %v1301 = vpop.f32.mrf.mxu0
    %v1302 = vadd.f32 %v1273, %v1301
    %v1303 = vpop.f32.mrf.mxu0
    %v1304 = vadd.f32 %v1275, %v1303
    %1305 = vmatmul.bf16.gmra.mxu0 %v259
    %v1306 = vpop.f32.mrf.mxu0
    %v1307 = vadd.f32 %v1278, %v1306
    %v1308 = vpop.f32.mrf.mxu0
    %v1309 = vadd.f32 %v1280, %v1308
    %1310 = vmatmul.bf16.gmra.mxu0 %v261
    %v1311 = vpop.f32.mrf.mxu0
    %v1312 = vadd.f32 %v1283, %v1311
    %v1313 = vpop.f32.mrf.mxu0
    %v1314 = vadd.f32 %v1285, %v1313
    %1315 = vdwg.mxu0
    %1316 = vmatpush.bf16.msra.mxu0 %v717
    %1317 = vmatpush.bf16.msra.mxu0 %v709
    %1318 = vmatpush.bf16.msra.mxu0 %v701
    %1319 = vmatpush.bf16.msra.mxu0 %v693
    %1320 = vmatpush.bf16.msra.mxu0 %v685
    %1321 = vmatpush.bf16.msra.mxu0 %v677
    %1322 = vmatpush.bf16.msra.mxu0 %v669
    %1323 = vmatpush.bf16.msra.mxu0 %v661
    %1324 = vmatmul.bf16.gmra.mxu0 %v254
    %v1325 = vpop.f32.mrf.mxu0
    %v1326 = vadd.f32 %v221, %v1325
    %v1327 = vpop.f32.mrf.mxu0
    %v1328 = vadd.f32 %v221, %v1327
    %1329 = vmatmul.bf16.gmra.mxu0 %v256
    %v1330 = vpop.f32.mrf.mxu0
    %v1331 = vadd.f32 %v221, %v1330
    %v1332 = vpop.f32.mrf.mxu0
    %v1333 = vadd.f32 %v221, %v1332
    %1334 = vmatmul.bf16.gmra.mxu0 %v258
    %v1335 = vpop.f32.mrf.mxu0
    %v1336 = vadd.f32 %v221, %v1335
    %v1337 = vpop.f32.mrf.mxu0
    %v1338 = vadd.f32 %v221, %v1337
    %1339 = vmatmul.bf16.gmra.mxu0 %v260
    %v1340 = vpop.f32.mrf.mxu0
    %v1341 = vadd.f32 %v221, %v1340
    %v1342 = vpop.f32.mrf.mxu0
    %v1343 = vadd.f32 %v221, %v1342
    %1344 = vdwg.mxu0
    %1345 = vmatpush.bf16.msra.mxu0 %v781
    %1346 = vmatpush.bf16.msra.mxu0 %v773
    %1347 = vmatpush.bf16.msra.mxu0 %v765
    %1348 = vmatpush.bf16.msra.mxu0 %v757
    %1349 = vmatpush.bf16.msra.mxu0 %v749
    %1350 = vmatpush.bf16.msra.mxu0 %v741
    %1351 = vmatpush.bf16.msra.mxu0 %v733
    %1352 = vmatpush.bf16.msra.mxu0 %v725
    %1353 = vmatmul.bf16.gmra.mxu0 %v255
    %v1354 = vpop.f32.mrf.mxu0
    %v1355 = vadd.f32 %v1326, %v1354
    %v1356 = vpop.f32.mrf.mxu0
    %v1357 = vadd.f32 %v1328, %v1356
    %1358 = vmatmul.bf16.gmra.mxu0 %v257
    %v1359 = vpop.f32.mrf.mxu0
    %v1360 = vadd.f32 %v1331, %v1359
    %v1361 = vpop.f32.mrf.mxu0
    %v1362 = vadd.f32 %v1333, %v1361
    %1363 = vmatmul.bf16.gmra.mxu0 %v259
    %v1364 = vpop.f32.mrf.mxu0
    %v1365 = vadd.f32 %v1336, %v1364
    %v1366 = vpop.f32.mrf.mxu0
    %v1367 = vadd.f32 %v1338, %v1366
    %1368 = vmatmul.bf16.gmra.mxu0 %v261
    %v1369 = vpop.f32.mrf.mxu0
    %v1370 = vadd.f32 %v1341, %v1369
    %v1371 = vpop.f32.mrf.mxu0
    %v1372 = vadd.f32 %v1343, %v1371
    %1373 = vdwg.mxu0
    %1374 = vst [vmem:[#allocation2] sm:$0xff] %v949
    %1375 = vst [vmem:[#allocation2 + $0x8] sm:$0xff] %v1007
    %1376 = vst [vmem:[#allocation2 + $0x10] sm:$0xff] %v1065
    %1377 = vst [vmem:[#allocation2 + $0x18] sm:$0xff] %v1123
    %1378 = vst [vmem:[#allocation2 + $0x20] sm:$0xff] %v1181
    %1379 = vst [vmem:[#allocation2 + $0x28] sm:$0xff] %v1239
    %1380 = vst [vmem:[#allocation2 + $0x30] sm:$0xff] %v1297
    %1381 = vst [vmem:[#allocation2 + $0x38] sm:$0xff] %v1355
    %1382 = vst [vmem:[#allocation2 + $0x40] sm:$0xff] %v951
    %1383 = vst [vmem:[#allocation2 + $0x48] sm:$0xff] %v1009
    %1384 = vst [vmem:[#allocation2 + $0x50] sm:$0xff] %v1067
    %1385 = vst [vmem:[#allocation2 + $0x58] sm:$0xff] %v1125
    %1386 = vst [vmem:[#allocation2 + $0x60] sm:$0xff] %v1183
    %1387 = vst [vmem:[#allocation2 + $0x68] sm:$0xff] %v1241
    %1388 = vst [vmem:[#allocation2 + $0x70] sm:$0xff] %v1299
    %1389 = vst [vmem:[#allocation2 + $0x78] sm:$0xff] %v1357
    %1390 = vst [vmem:[#allocation2 + $0x80] sm:$0xff] %v954
    %1391 = vst [vmem:[#allocation2 + $0x88] sm:$0xff] %v1012
    %1392 = vst [vmem:[#allocation2 + $0x90] sm:$0xff] %v1070
    %1393 = vst [vmem:[#allocation2 + $0x98] sm:$0xff] %v1128
    %1394 = vst [vmem:[#allocation2 + $0xa0] sm:$0xff] %v1186
    %1395 = vst [vmem:[#allocation2 + $0xa8] sm:$0xff] %v1244
    %1396 = vst [vmem:[#allocation2 + $0xb0] sm:$0xff] %v1302
    %1397 = vst [vmem:[#allocation2 + $0xb8] sm:$0xff] %v1360
    %1398 = vst [vmem:[#allocation2 + $0xc0] sm:$0xff] %v956
    %1399 = vst [vmem:[#allocation2 + $0xc8] sm:$0xff] %v1014
    %1400 = vst [vmem:[#allocation2 + $0xd0] sm:$0xff] %v1072
    %1401 = vst [vmem:[#allocation2 + $0xd8] sm:$0xff] %v1130
    %1402 = vst [vmem:[#allocation2 + $0xe0] sm:$0xff] %v1188
    %1403 = vst [vmem:[#allocation2 + $0xe8] sm:$0xff] %v1246
    %1404 = vst [vmem:[#allocation2 + $0xf0] sm:$0xff] %v1304
    %1405 = vst [vmem:[#allocation2 + $0xf8] sm:$0xff] %v1362
    %1406 = vst [vmem:[#allocation2 + $0x100] sm:$0xff] %v959
    %1407 = vst [vmem:[#allocation2 + $0x108] sm:$0xff] %v1017
    %1408 = vst [vmem:[#allocation2 + $0x110] sm:$0xff] %v1075
    %1409 = vst [vmem:[#allocation2 + $0x118] sm:$0xff] %v1133
    %1410 = vst [vmem:[#allocation2 + $0x120] sm:$0xff] %v1191
    %1411 = vst [vmem:[#allocation2 + $0x128] sm:$0xff] %v1249
    %1412 = vst [vmem:[#allocation2 + $0x130] sm:$0xff] %v1307
    %1413 = vst [vmem:[#allocation2 + $0x138] sm:$0xff] %v1365
    %1414 = vst [vmem:[#allocation2 + $0x140] sm:$0xff] %v961
    %1415 = vst [vmem:[#allocation2 + $0x148] sm:$0xff] %v1019
    %1416 = vst [vmem:[#allocation2 + $0x150] sm:$0xff] %v1077
    %1417 = vst [vmem:[#allocation2 + $0x158] sm:$0xff] %v1135
    %1418 = vst [vmem:[#allocation2 + $0x160] sm:$0xff] %v1193
    %1419 = vst [vmem:[#allocation2 + $0x168] sm:$0xff] %v1251
    %1420 = vst [vmem:[#allocation2 + $0x170] sm:$0xff] %v1309
    %1421 = vst [vmem:[#allocation2 + $0x178] sm:$0xff] %v1367
    %1422 = vst [vmem:[#allocation2 + $0x180] sm:$0xff] %v964
    %1423 = vst [vmem:[#allocation2 + $0x188] sm:$0xff] %v1022
    %1424 = vst [vmem:[#allocation2 + $0x190] sm:$0xff] %v1080
    %1425 = vst [vmem:[#allocation2 + $0x198] sm:$0xff] %v1138
    %1426 = vst [vmem:[#allocation2 + $0x1a0] sm:$0xff] %v1196
    %1427 = vst [vmem:[#allocation2 + $0x1a8] sm:$0xff] %v1254
    %1428 = vst [vmem:[#allocation2 + $0x1b0] sm:$0xff] %v1312
    %1429 = vst [vmem:[#allocation2 + $0x1b8] sm:$0xff] %v1370
    %1430 = vst [vmem:[#allocation2 + $0x1c0] sm:$0xff] %v966
    %1431 = vst [vmem:[#allocation2 + $0x1c8] sm:$0xff] %v1024
    %1432 = vst [vmem:[#allocation2 + $0x1d0] sm:$0xff] %v1082
    %1433 = vst [vmem:[#allocation2 + $0x1d8] sm:$0xff] %v1140
    %1434 = vst [vmem:[#allocation2 + $0x1e0] sm:$0xff] %v1198
    %1435 = vst [vmem:[#allocation2 + $0x1e8] sm:$0xff] %v1256
    %1436 = vst [vmem:[#allocation2 + $0x1f0] sm:$0xff] %v1314
    %1437 = vst [vmem:[#allocation2 + $0x1f8] sm:$0xff] %v1372
    %v1438 = vld [vmem:[#allocation10] sm:$0xff]
    %v1439 = vld [vmem:[#allocation10 + $0x8] sm:$0xff]
    %v1440 = vld [vmem:[#allocation10 + $0x10] sm:$0xff]
    %v1441 = vld [vmem:[#allocation10 + $0x18] sm:$0xff]
    %v1442 = vld [vmem:[#allocation10 + $0x20] sm:$0xff]
    %v1443 = vld [vmem:[#allocation10 + $0x28] sm:$0xff]
    %v1444 = vld [vmem:[#allocation10 + $0x30] sm:$0xff]
    %v1445 = vld [vmem:[#allocation10 + $0x38] sm:$0xff]
    %v1446 = vld [vmem:[#allocation10 + $0x40] sm:$0xff]
    %v1447 = vld [vmem:[#allocation10 + $0x48] sm:$0xff]
    %v1448 = vld [vmem:[#allocation10 + $0x50] sm:$0xff]
    %v1449 = vld [vmem:[#allocation10 + $0x58] sm:$0xff]
    %v1450 = vld [vmem:[#allocation10 + $0x60] sm:$0xff]
    %v1451 = vld [vmem:[#allocation10 + $0x68] sm:$0xff]
    %v1452 = vld [vmem:[#allocation10 + $0x70] sm:$0xff]
    %v1453 = vld [vmem:[#allocation10 + $0x78] sm:$0xff]
    %v1454 = vld [vmem:[#allocation10 + $0x80] sm:$0xff]
    %v1455 = vld [vmem:[#allocation10 + $0x88] sm:$0xff]
    %v1456 = vld [vmem:[#allocation10 + $0x90] sm:$0xff]
    %v1457 = vld [vmem:[#allocation10 + $0x98] sm:$0xff]
    %v1458 = vld [vmem:[#allocation10 + $0xa0] sm:$0xff]
    %v1459 = vld [vmem:[#allocation10 + $0xa8] sm:$0xff]
    %v1460 = vld [vmem:[#allocation10 + $0xb0] sm:$0xff]
    %v1461 = vld [vmem:[#allocation10 + $0xb8] sm:$0xff]
    %v1462 = vld [vmem:[#allocation10 + $0xc0] sm:$0xff]
    %v1463 = vld [vmem:[#allocation10 + $0xc8] sm:$0xff]
    %v1464 = vld [vmem:[#allocation10 + $0xd0] sm:$0xff]
    %v1465 = vld [vmem:[#allocation10 + $0xd8] sm:$0xff]
    %v1466 = vld [vmem:[#allocation10 + $0xe0] sm:$0xff]
    %v1467 = vld [vmem:[#allocation10 + $0xe8] sm:$0xff]
    %v1468 = vld [vmem:[#allocation10 + $0xf0] sm:$0xff]
    %v1469 = vld [vmem:[#allocation10 + $0xf8] sm:$0xff]
    %v1470 = vld [vmem:[#allocation10 + $0x100] sm:$0xff]
    %v1471 = vld [vmem:[#allocation10 + $0x108] sm:$0xff]
    %v1472 = vld [vmem:[#allocation10 + $0x110] sm:$0xff]
    %v1473 = vld [vmem:[#allocation10 + $0x118] sm:$0xff]
    %v1474 = vld [vmem:[#allocation10 + $0x120] sm:$0xff]
    %v1475 = vld [vmem:[#allocation10 + $0x128] sm:$0xff]
    %v1476 = vld [vmem:[#allocation10 + $0x130] sm:$0xff]
    %v1477 = vld [vmem:[#allocation10 + $0x138] sm:$0xff]
    %v1478 = vld [vmem:[#allocation10 + $0x140] sm:$0xff]
    %v1479 = vld [vmem:[#allocation10 + $0x148] sm:$0xff]
    %v1480 = vld [vmem:[#allocation10 + $0x150] sm:$0xff]
    %v1481 = vld [vmem:[#allocation10 + $0x158] sm:$0xff]
    %v1482 = vld [vmem:[#allocation10 + $0x160] sm:$0xff]
    %v1483 = vld [vmem:[#allocation10 + $0x168] sm:$0xff]
    %v1484 = vld [vmem:[#allocation10 + $0x170] sm:$0xff]
    %v1485 = vld [vmem:[#allocation10 + $0x178] sm:$0xff]
    %v1486 = vld [vmem:[#allocation10 + $0x180] sm:$0xff]
    %v1487 = vld [vmem:[#allocation10 + $0x188] sm:$0xff]
    %v1488 = vld [vmem:[#allocation10 + $0x190] sm:$0xff]
    %v1489 = vld [vmem:[#allocation10 + $0x198] sm:$0xff]
    %v1490 = vld [vmem:[#allocation10 + $0x1a0] sm:$0xff]
    %v1491 = vld [vmem:[#allocation10 + $0x1a8] sm:$0xff]
    %v1492 = vld [vmem:[#allocation10 + $0x1b0] sm:$0xff]
    %v1493 = vld [vmem:[#allocation10 + $0x1b8] sm:$0xff]
    %v1494 = vld [vmem:[#allocation10 + $0x1c0] sm:$0xff]
    %v1495 = vld [vmem:[#allocation10 + $0x1c8] sm:$0xff]
    %v1496 = vld [vmem:[#allocation10 + $0x1d0] sm:$0xff]
    %v1497 = vld [vmem:[#allocation10 + $0x1d8] sm:$0xff]
    %v1498 = vld [vmem:[#allocation10 + $0x1e0] sm:$0xff]
    %v1499 = vld [vmem:[#allocation10 + $0x1e8] sm:$0xff]
    %v1500 = vld [vmem:[#allocation10 + $0x1f0] sm:$0xff]
    %v1501 = vld [vmem:[#allocation10 + $0x1f8] sm:$0xff]
    %v1502 = vld [vmem:[#allocation10 + $0x200] sm:$0xff]
    %v1503 = vld [vmem:[#allocation10 + $0x208] sm:$0xff]
    %v1504 = vld [vmem:[#allocation10 + $0x210] sm:$0xff]
    %v1505 = vld [vmem:[#allocation10 + $0x218] sm:$0xff]
    %v1506 = vld [vmem:[#allocation10 + $0x220] sm:$0xff]
    %v1507 = vld [vmem:[#allocation10 + $0x228] sm:$0xff]
    %v1508 = vld [vmem:[#allocation10 + $0x230] sm:$0xff]
    %v1509 = vld [vmem:[#allocation10 + $0x238] sm:$0xff]
    %v1510 = vld [vmem:[#allocation10 + $0x240] sm:$0xff]
    %v1511 = vld [vmem:[#allocation10 + $0x248] sm:$0xff]
    %v1512 = vld [vmem:[#allocation10 + $0x250] sm:$0xff]
    %v1513 = vld [vmem:[#allocation10 + $0x258] sm:$0xff]
    %v1514 = vld [vmem:[#allocation10 + $0x260] sm:$0xff]
    %v1515 = vld [vmem:[#allocation10 + $0x268] sm:$0xff]
    %v1516 = vld [vmem:[#allocation10 + $0x270] sm:$0xff]
    %v1517 = vld [vmem:[#allocation10 + $0x278] sm:$0xff]
    %v1518 = vld [vmem:[#allocation10 + $0x280] sm:$0xff]
    %v1519 = vld [vmem:[#allocation10 + $0x288] sm:$0xff]
    %v1520 = vld [vmem:[#allocation10 + $0x290] sm:$0xff]
    %v1521 = vld [vmem:[#allocation10 + $0x298] sm:$0xff]
    %v1522 = vld [vmem:[#allocation10 + $0x2a0] sm:$0xff]
    %v1523 = vld [vmem:[#allocation10 + $0x2a8] sm:$0xff]
    %v1524 = vld [vmem:[#allocation10 + $0x2b0] sm:$0xff]
    %v1525 = vld [vmem:[#allocation10 + $0x2b8] sm:$0xff]
    %v1526 = vld [vmem:[#allocation10 + $0x2c0] sm:$0xff]
    %v1527 = vld [vmem:[#allocation10 + $0x2c8] sm:$0xff]
    %v1528 = vld [vmem:[#allocation10 + $0x2d0] sm:$0xff]
    %v1529 = vld [vmem:[#allocation10 + $0x2d8] sm:$0xff]
    %v1530 = vld [vmem:[#allocation10 + $0x2e0] sm:$0xff]
    %v1531 = vld [vmem:[#allocation10 + $0x2e8] sm:$0xff]
    %v1532 = vld [vmem:[#allocation10 + $0x2f0] sm:$0xff]
    %v1533 = vld [vmem:[#allocation10 + $0x2f8] sm:$0xff]
    %v1534 = vld [vmem:[#allocation10 + $0x300] sm:$0xff]
    %v1535 = vld [vmem:[#allocation10 + $0x308] sm:$0xff]
    %v1536 = vld [vmem:[#allocation10 + $0x310] sm:$0xff]
    %v1537 = vld [vmem:[#allocation10 + $0x318] sm:$0xff]
    %v1538 = vld [vmem:[#allocation10 + $0x320] sm:$0xff]
    %v1539 = vld [vmem:[#allocation10 + $0x328] sm:$0xff]
    %v1540 = vld [vmem:[#allocation10 + $0x330] sm:$0xff]
    %v1541 = vld [vmem:[#allocation10 + $0x338] sm:$0xff]
    %v1542 = vld [vmem:[#allocation10 + $0x340] sm:$0xff]
    %v1543 = vld [vmem:[#allocation10 + $0x348] sm:$0xff]
    %v1544 = vld [vmem:[#allocation10 + $0x350] sm:$0xff]
    %v1545 = vld [vmem:[#allocation10 + $0x358] sm:$0xff]
    %v1546 = vld [vmem:[#allocation10 + $0x360] sm:$0xff]
    %v1547 = vld [vmem:[#allocation10 + $0x368] sm:$0xff]
    %v1548 = vld [vmem:[#allocation10 + $0x370] sm:$0xff]
    %v1549 = vld [vmem:[#allocation10 + $0x378] sm:$0xff]
    %v1550 = vld [vmem:[#allocation10 + $0x380] sm:$0xff]
    %v1551 = vld [vmem:[#allocation10 + $0x388] sm:$0xff]
    %v1552 = vld [vmem:[#allocation10 + $0x390] sm:$0xff]
    %v1553 = vld [vmem:[#allocation10 + $0x398] sm:$0xff]
    %v1554 = vld [vmem:[#allocation10 + $0x3a0] sm:$0xff]
    %v1555 = vld [vmem:[#allocation10 + $0x3a8] sm:$0xff]
    %v1556 = vld [vmem:[#allocation10 + $0x3b0] sm:$0xff]
    %v1557 = vld [vmem:[#allocation10 + $0x3b8] sm:$0xff]
    %v1558 = vld [vmem:[#allocation10 + $0x3c0] sm:$0xff]
    %v1559 = vld [vmem:[#allocation10 + $0x3c8] sm:$0xff]
    %v1560 = vld [vmem:[#allocation10 + $0x3d0] sm:$0xff]
    %v1561 = vld [vmem:[#allocation10 + $0x3d8] sm:$0xff]
    %v1562 = vld [vmem:[#allocation10 + $0x3e0] sm:$0xff]
    %v1563 = vld [vmem:[#allocation10 + $0x3e8] sm:$0xff]
    %v1564 = vld [vmem:[#allocation10 + $0x3f0] sm:$0xff]
    %v1565 = vld [vmem:[#allocation10 + $0x3f8] sm:$0xff]
    %v1566 = vld [vmem:[%s4] sm:$0xff]
    %s1567 = smul.u32 0, 8
    %v1568 = vld [vmem:[#allocation3] sm:$0xff]
    %v1569 = vld [vmem:[#allocation3 + $0x8] sm:$0xff]
    %v1570 = vld [vmem:[#allocation4] sm:$0xff]
    %v1571 = vld [vmem:[#allocation4 + $0x8] sm:$0xff]
    %v1572 = vld [vmem:[#allocation2] sm:$0xff]
    %v1573 = vld [vmem:[#allocation2 + $0x8] sm:$0xff]
    %v1574 = vld [vmem:[#allocation2 + $0x10] sm:$0xff]
    %v1575 = vld [vmem:[#allocation2 + $0x18] sm:$0xff]
    %v1576 = vld [vmem:[#allocation2 + $0x20] sm:$0xff]
    %v1577 = vld [vmem:[#allocation2 + $0x28] sm:$0xff]
    %v1578 = vld [vmem:[#allocation2 + $0x30] sm:$0xff]
    %v1579 = vld [vmem:[#allocation2 + $0x38] sm:$0xff]
    %v1580 = vpack.c.bf16 %v1568, %v1568
    %v1581 = vpack.c.bf16 %v1569, %v1569
    %v1710 = vunpack.c.l.b16 %v1438
    %v1711 = vunpack.c.h.b16 %v1438
    %v1712 = vunpack.c.l.b16 %v1439
    %v1713 = vunpack.c.h.b16 %v1439
    %v1714 = vunpack.c.l.b16 %v1440
    %v1715 = vunpack.c.h.b16 %v1440
    %v1716 = vunpack.c.l.b16 %v1441
    %v1717 = vunpack.c.h.b16 %v1441
    %v1718 = vunpack.c.l.b16 %v1442
    %v1719 = vunpack.c.h.b16 %v1442
    %v1720 = vunpack.c.l.b16 %v1443
    %v1721 = vunpack.c.h.b16 %v1443
    %v1722 = vunpack.c.l.b16 %v1444
    %v1723 = vunpack.c.h.b16 %v1444
    %v1724 = vunpack.c.l.b16 %v1445
    %v1725 = vunpack.c.h.b16 %v1445
    %v1726 = vunpack.c.l.b16 %v1446
    %v1727 = vunpack.c.h.b16 %v1446
    %v1728 = vunpack.c.l.b16 %v1447
    %v1729 = vunpack.c.h.b16 %v1447
    %v1730 = vunpack.c.l.b16 %v1448
    %v1731 = vunpack.c.h.b16 %v1448
    %v1732 = vunpack.c.l.b16 %v1449
    %v1733 = vunpack.c.h.b16 %v1449
    %v1734 = vunpack.c.l.b16 %v1450
    %v1735 = vunpack.c.h.b16 %v1450
    %v1736 = vunpack.c.l.b16 %v1451
    %v1737 = vunpack.c.h.b16 %v1451
    %v1738 = vunpack.c.l.b16 %v1452
    %v1739 = vunpack.c.h.b16 %v1452
    %v1740 = vunpack.c.l.b16 %v1453
    %v1741 = vunpack.c.h.b16 %v1453
    %v1742 = vunpack.c.l.b16 %v1454
    %v1743 = vunpack.c.h.b16 %v1454
    %v1744 = vunpack.c.l.b16 %v1455
    %v1745 = vunpack.c.h.b16 %v1455
    %v1746 = vunpack.c.l.b16 %v1456
    %v1747 = vunpack.c.h.b16 %v1456
    %v1748 = vunpack.c.l.b16 %v1457
    %v1749 = vunpack.c.h.b16 %v1457
    %v1750 = vunpack.c.l.b16 %v1458
    %v1751 = vunpack.c.h.b16 %v1458
    %v1752 = vunpack.c.l.b16 %v1459
    %v1753 = vunpack.c.h.b16 %v1459
    %v1754 = vunpack.c.l.b16 %v1460
    %v1755 = vunpack.c.h.b16 %v1460
    %v1756 = vunpack.c.l.b16 %v1461
    %v1757 = vunpack.c.h.b16 %v1461
    %v1758 = vunpack.c.l.b16 %v1462
    %v1759 = vunpack.c.h.b16 %v1462
    %v1760 = vunpack.c.l.b16 %v1463
    %v1761 = vunpack.c.h.b16 %v1463
    %v1762 = vunpack.c.l.b16 %v1464
    %v1763 = vunpack.c.h.b16 %v1464
    %v1764 = vunpack.c.l.b16 %v1465
    %v1765 = vunpack.c.h.b16 %v1465
    %v1766 = vunpack.c.l.b16 %v1466
    %v1767 = vunpack.c.h.b16 %v1466
    %v1768 = vunpack.c.l.b16 %v1467
    %v1769 = vunpack.c.h.b16 %v1467
    %v1770 = vunpack.c.l.b16 %v1468
    %v1771 = vunpack.c.h.b16 %v1468
    %v1772 = vunpack.c.l.b16 %v1469
    %v1773 = vunpack.c.h.b16 %v1469
    %v1774 = vunpack.c.l.b16 %v1470
    %v1775 = vunpack.c.h.b16 %v1470
    %v1776 = vunpack.c.l.b16 %v1471
    %v1777 = vunpack.c.h.b16 %v1471
    %v1778 = vunpack.c.l.b16 %v1472
    %v1779 = vunpack.c.h.b16 %v1472
    %v1780 = vunpack.c.l.b16 %v1473
    %v1781 = vunpack.c.h.b16 %v1473
    %v1782 = vunpack.c.l.b16 %v1474
    %v1783 = vunpack.c.h.b16 %v1474
    %v1784 = vunpack.c.l.b16 %v1475
    %v1785 = vunpack.c.h.b16 %v1475
    %v1786 = vunpack.c.l.b16 %v1476
    %v1787 = vunpack.c.h.b16 %v1476
    %v1788 = vunpack.c.l.b16 %v1477
    %v1789 = vunpack.c.h.b16 %v1477
    %v1790 = vunpack.c.l.b16 %v1478
    %v1791 = vunpack.c.h.b16 %v1478
    %v1792 = vunpack.c.l.b16 %v1479
    %v1793 = vunpack.c.h.b16 %v1479
    %v1794 = vunpack.c.l.b16 %v1480
    %v1795 = vunpack.c.h.b16 %v1480
    %v1796 = vunpack.c.l.b16 %v1481
    %v1797 = vunpack.c.h.b16 %v1481
    %v1798 = vunpack.c.l.b16 %v1482
    %v1799 = vunpack.c.h.b16 %v1482
    %v1800 = vunpack.c.l.b16 %v1483
    %v1801 = vunpack.c.h.b16 %v1483
    %v1802 = vunpack.c.l.b16 %v1484
    %v1803 = vunpack.c.h.b16 %v1484
    %v1804 = vunpack.c.l.b16 %v1485
    %v1805 = vunpack.c.h.b16 %v1485
    %v1806 = vunpack.c.l.b16 %v1486
    %v1807 = vunpack.c.h.b16 %v1486
    %v1808 = vunpack.c.l.b16 %v1487
    %v1809 = vunpack.c.h.b16 %v1487
    %v1810 = vunpack.c.l.b16 %v1488
    %v1811 = vunpack.c.h.b16 %v1488
    %v1812 = vunpack.c.l.b16 %v1489
    %v1813 = vunpack.c.h.b16 %v1489
    %v1814 = vunpack.c.l.b16 %v1490
    %v1815 = vunpack.c.h.b16 %v1490
    %v1816 = vunpack.c.l.b16 %v1491
    %v1817 = vunpack.c.h.b16 %v1491
    %v1818 = vunpack.c.l.b16 %v1492
    %v1819 = vunpack.c.h.b16 %v1492
    %v1820 = vunpack.c.l.b16 %v1493
    %v1821 = vunpack.c.h.b16 %v1493
    %v1822 = vunpack.c.l.b16 %v1494
    %v1823 = vunpack.c.h.b16 %v1494
    %v1824 = vunpack.c.l.b16 %v1495
    %v1825 = vunpack.c.h.b16 %v1495
    %v1826 = vunpack.c.l.b16 %v1496
    %v1827 = vunpack.c.h.b16 %v1496
    %v1828 = vunpack.c.l.b16 %v1497
    %v1829 = vunpack.c.h.b16 %v1497
    %v1830 = vunpack.c.l.b16 %v1498
    %v1831 = vunpack.c.h.b16 %v1498
    %v1832 = vunpack.c.l.b16 %v1499
    %v1833 = vunpack.c.h.b16 %v1499
    %v1834 = vunpack.c.l.b16 %v1500
    %v1835 = vunpack.c.h.b16 %v1500
    %v1836 = vunpack.c.l.b16 %v1501
    %v1837 = vunpack.c.h.b16 %v1501
    %v1838 = vunpack.c.l.b16 %v1502
    %v1839 = vunpack.c.h.b16 %v1502
    %v1840 = vunpack.c.l.b16 %v1503
    %v1841 = vunpack.c.h.b16 %v1503
    %v1842 = vunpack.c.l.b16 %v1504
    %v1843 = vunpack.c.h.b16 %v1504
    %v1844 = vunpack.c.l.b16 %v1505
    %v1845 = vunpack.c.h.b16 %v1505
    %v1846 = vunpack.c.l.b16 %v1506
    %v1847 = vunpack.c.h.b16 %v1506
    %v1848 = vunpack.c.l.b16 %v1507
    %v1849 = vunpack.c.h.b16 %v1507
    %v1850 = vunpack.c.l.b16 %v1508
    %v1851 = vunpack.c.h.b16 %v1508
    %v1852 = vunpack.c.l.b16 %v1509
    %v1853 = vunpack.c.h.b16 %v1509
    %v1854 = vunpack.c.l.b16 %v1510
    %v1855 = vunpack.c.h.b16 %v1510
    %v1856 = vunpack.c.l.b16 %v1511
    %v1857 = vunpack.c.h.b16 %v1511
    %v1858 = vunpack.c.l.b16 %v1512
    %v1859 = vunpack.c.h.b16 %v1512
    %v1860 = vunpack.c.l.b16 %v1513
    %v1861 = vunpack.c.h.b16 %v1513
    %v1862 = vunpack.c.l.b16 %v1514
    %v1863 = vunpack.c.h.b16 %v1514
    %v1864 = vunpack.c.l.b16 %v1515
    %v1865 = vunpack.c.h.b16 %v1515
    %v1866 = vunpack.c.l.b16 %v1516
    %v1867 = vunpack.c.h.b16 %v1516
    %v1868 = vunpack.c.l.b16 %v1517
    %v1869 = vunpack.c.h.b16 %v1517
    %v1870 = vunpack.c.l.b16 %v1518
    %v1871 = vunpack.c.h.b16 %v1518
    %v1872 = vunpack.c.l.b16 %v1519
    %v1873 = vunpack.c.h.b16 %v1519
    %v1874 = vunpack.c.l.b16 %v1520
    %v1875 = vunpack.c.h.b16 %v1520
    %v1876 = vunpack.c.l.b16 %v1521
    %v1877 = vunpack.c.h.b16 %v1521
    %v1878 = vunpack.c.l.b16 %v1522
    %v1879 = vunpack.c.h.b16 %v1522
    %v1880 = vunpack.c.l.b16 %v1523
    %v1881 = vunpack.c.h.b16 %v1523
    %v1882 = vunpack.c.l.b16 %v1524
    %v1883 = vunpack.c.h.b16 %v1524
    %v1884 = vunpack.c.l.b16 %v1525
    %v1885 = vunpack.c.h.b16 %v1525
    %v1886 = vunpack.c.l.b16 %v1526
    %v1887 = vunpack.c.h.b16 %v1526
    %v1888 = vunpack.c.l.b16 %v1527
    %v1889 = vunpack.c.h.b16 %v1527
    %v1890 = vunpack.c.l.b16 %v1528
    %v1891 = vunpack.c.h.b16 %v1528
    %v1892 = vunpack.c.l.b16 %v1529
    %v1893 = vunpack.c.h.b16 %v1529
    %v1894 = vunpack.c.l.b16 %v1530
    %v1895 = vunpack.c.h.b16 %v1530
    %v1896 = vunpack.c.l.b16 %v1531
    %v1897 = vunpack.c.h.b16 %v1531
    %v1898 = vunpack.c.l.b16 %v1532
    %v1899 = vunpack.c.h.b16 %v1532
    %v1900 = vunpack.c.l.b16 %v1533
    %v1901 = vunpack.c.h.b16 %v1533
    %v1902 = vunpack.c.l.b16 %v1534
    %v1903 = vunpack.c.h.b16 %v1534
    %v1904 = vunpack.c.l.b16 %v1535
    %v1905 = vunpack.c.h.b16 %v1535
    %v1906 = vunpack.c.l.b16 %v1536
    %v1907 = vunpack.c.h.b16 %v1536
    %v1908 = vunpack.c.l.b16 %v1537
    %v1909 = vunpack.c.h.b16 %v1537
    %v1910 = vunpack.c.l.b16 %v1538
    %v1911 = vunpack.c.h.b16 %v1538
    %v1912 = vunpack.c.l.b16 %v1539
    %v1913 = vunpack.c.h.b16 %v1539
    %v1914 = vunpack.c.l.b16 %v1540
    %v1915 = vunpack.c.h.b16 %v1540
    %v1916 = vunpack.c.l.b16 %v1541
    %v1917 = vunpack.c.h.b16 %v1541
    %v1918 = vunpack.c.l.b16 %v1542
    %v1919 = vunpack.c.h.b16 %v1542
    %v1920 = vunpack.c.l.b16 %v1543
    %v1921 = vunpack.c.h.b16 %v1543
    %v1922 = vunpack.c.l.b16 %v1544
    %v1923 = vunpack.c.h.b16 %v1544
    %v1924 = vunpack.c.l.b16 %v1545
    %v1925 = vunpack.c.h.b16 %v1545
    %v1926 = vunpack.c.l.b16 %v1546
    %v1927 = vunpack.c.h.b16 %v1546
    %v1928 = vunpack.c.l.b16 %v1547
    %v1929 = vunpack.c.h.b16 %v1547
    %v1930 = vunpack.c.l.b16 %v1548
    %v1931 = vunpack.c.h.b16 %v1548
    %v1932 = vunpack.c.l.b16 %v1549
    %v1933 = vunpack.c.h.b16 %v1549
    %v1934 = vunpack.c.l.b16 %v1550
    %v1935 = vunpack.c.h.b16 %v1550
    %v1936 = vunpack.c.l.b16 %v1551
    %v1937 = vunpack.c.h.b16 %v1551
    %v1938 = vunpack.c.l.b16 %v1552
    %v1939 = vunpack.c.h.b16 %v1552
    %v1940 = vunpack.c.l.b16 %v1553
    %v1941 = vunpack.c.h.b16 %v1553
    %v1942 = vunpack.c.l.b16 %v1554
    %v1943 = vunpack.c.h.b16 %v1554
    %v1944 = vunpack.c.l.b16 %v1555
    %v1945 = vunpack.c.h.b16 %v1555
    %v1946 = vunpack.c.l.b16 %v1556
    %v1947 = vunpack.c.h.b16 %v1556
    %v1948 = vunpack.c.l.b16 %v1557
    %v1949 = vunpack.c.h.b16 %v1557
    %v1950 = vunpack.c.l.b16 %v1558
    %v1951 = vunpack.c.h.b16 %v1558
    %v1952 = vunpack.c.l.b16 %v1559
    %v1953 = vunpack.c.h.b16 %v1559
    %v1954 = vunpack.c.l.b16 %v1560
    %v1955 = vunpack.c.h.b16 %v1560
    %v1956 = vunpack.c.l.b16 %v1561
    %v1957 = vunpack.c.h.b16 %v1561
    %v1958 = vunpack.c.l.b16 %v1562
    %v1959 = vunpack.c.h.b16 %v1562
    %v1960 = vunpack.c.l.b16 %v1563
    %v1961 = vunpack.c.h.b16 %v1563
    %v1962 = vunpack.c.l.b16 %v1564
    %v1963 = vunpack.c.h.b16 %v1564
    %v1964 = vunpack.c.l.b16 %v1565
    %v1965 = vunpack.c.h.b16 %v1565
    %v1966 = vpack.c.b16 %v1718, %v1710
    %v1967 = vpack.c.b16 %v1719, %v1711
    %v1968 = vpack.c.b16 %v1720, %v1712
    %v1969 = vpack.c.b16 %v1721, %v1713
    %v1970 = vpack.c.b16 %v1722, %v1714
    %v1971 = vpack.c.b16 %v1723, %v1715
    %v1972 = vpack.c.b16 %v1724, %v1716
    %v1973 = vpack.c.b16 %v1725, %v1717
    %v1974 = vpack.c.b16 %v1734, %v1726
    %v1975 = vpack.c.b16 %v1735, %v1727
    %v1976 = vpack.c.b16 %v1736, %v1728
    %v1977 = vpack.c.b16 %v1737, %v1729
    %v1978 = vpack.c.b16 %v1738, %v1730
    %v1979 = vpack.c.b16 %v1739, %v1731
    %v1980 = vpack.c.b16 %v1740, %v1732
    %v1981 = vpack.c.b16 %v1741, %v1733
    %v1982 = vpack.c.b16 %v1750, %v1742
    %v1983 = vpack.c.b16 %v1751, %v1743
    %v1984 = vpack.c.b16 %v1752, %v1744
    %v1985 = vpack.c.b16 %v1753, %v1745
    %v1986 = vpack.c.b16 %v1754, %v1746
    %v1987 = vpack.c.b16 %v1755, %v1747
    %v1988 = vpack.c.b16 %v1756, %v1748
    %v1989 = vpack.c.b16 %v1757, %v1749
    %v1990 = vpack.c.b16 %v1766, %v1758
    %v1991 = vpack.c.b16 %v1767, %v1759
    %v1992 = vpack.c.b16 %v1768, %v1760
    %v1993 = vpack.c.b16 %v1769, %v1761
    %v1994 = vpack.c.b16 %v1770, %v1762
    %v1995 = vpack.c.b16 %v1771, %v1763
    %v1996 = vpack.c.b16 %v1772, %v1764
    %v1997 = vpack.c.b16 %v1773, %v1765
    %v1998 = vpack.c.b16 %v1782, %v1774
    %v1999 = vpack.c.b16 %v1783, %v1775
    %v2000 = vpack.c.b16 %v1784, %v1776
    %v2001 = vpack.c.b16 %v1785, %v1777
    %v2002 = vpack.c.b16 %v1786, %v1778
    %v2003 = vpack.c.b16 %v1787, %v1779
    %v2004 = vpack.c.b16 %v1788, %v1780
    %v2005 = vpack.c.b16 %v1789, %v1781
    %v2006 = vpack.c.b16 %v1798, %v1790
    %v2007 = vpack.c.b16 %v1799, %v1791
    %v2008 = vpack.c.b16 %v1800, %v1792
    %v2009 = vpack.c.b16 %v1801, %v1793
    %v2010 = vpack.c.b16 %v1802, %v1794
    %v2011 = vpack.c.b16 %v1803, %v1795
    %v2012 = vpack.c.b16 %v1804, %v1796
    %v2013 = vpack.c.b16 %v1805, %v1797
    %v2014 = vpack.c.b16 %v1814, %v1806
    %v2015 = vpack.c.b16 %v1815, %v1807
    %v2016 = vpack.c.b16 %v1816, %v1808
    %v2017 = vpack.c.b16 %v1817, %v1809
    %v2018 = vpack.c.b16 %v1818, %v1810
    %v2019 = vpack.c.b16 %v1819, %v1811
    %v2020 = vpack.c.b16 %v1820, %v1812
    %v2021 = vpack.c.b16 %v1821, %v1813
    %v2022 = vpack.c.b16 %v1830, %v1822
    %v2023 = vpack.c.b16 %v1831, %v1823
    %v2024 = vpack.c.b16 %v1832, %v1824
    %v2025 = vpack.c.b16 %v1833, %v1825
    %v2026 = vpack.c.b16 %v1834, %v1826
    %v2027 = vpack.c.b16 %v1835, %v1827
    %v2028 = vpack.c.b16 %v1836, %v1828
    %v2029 = vpack.c.b16 %v1837, %v1829
    %v2030 = vpack.c.b16 %v1846, %v1838
    %v2031 = vpack.c.b16 %v1847, %v1839
    %v2032 = vpack.c.b16 %v1848, %v1840
    %v2033 = vpack.c.b16 %v1849, %v1841
    %v2034 = vpack.c.b16 %v1850, %v1842
    %v2035 = vpack.c.b16 %v1851, %v1843
    %v2036 = vpack.c.b16 %v1852, %v1844
    %v2037 = vpack.c.b16 %v1853, %v1845
    %v2038 = vpack.c.b16 %v1862, %v1854
    %v2039 = vpack.c.b16 %v1863, %v1855
    %v2040 = vpack.c.b16 %v1864, %v1856
    %v2041 = vpack.c.b16 %v1865, %v1857
    %v2042 = vpack.c.b16 %v1866, %v1858
    %v2043 = vpack.c.b16 %v1867, %v1859
    %v2044 = vpack.c.b16 %v1868, %v1860
    %v2045 = vpack.c.b16 %v1869, %v1861
    %v2046 = vpack.c.b16 %v1878, %v1870
    %v2047 = vpack.c.b16 %v1879, %v1871
    %v2048 = vpack.c.b16 %v1880, %v1872
    %v2049 = vpack.c.b16 %v1881, %v1873
    %v2050 = vpack.c.b16 %v1882, %v1874
    %v2051 = vpack.c.b16 %v1883, %v1875
    %v2052 = vpack.c.b16 %v1884, %v1876
    %v2053 = vpack.c.b16 %v1885, %v1877
    %v2054 = vpack.c.b16 %v1894, %v1886
    %v2055 = vpack.c.b16 %v1895, %v1887
    %v2056 = vpack.c.b16 %v1896, %v1888
    %v2057 = vpack.c.b16 %v1897, %v1889
    %v2058 = vpack.c.b16 %v1898, %v1890
    %v2059 = vpack.c.b16 %v1899, %v1891
    %v2060 = vpack.c.b16 %v1900, %v1892
    %v2061 = vpack.c.b16 %v1901, %v1893
    %v2062 = vpack.c.b16 %v1910, %v1902
    %v2063 = vpack.c.b16 %v1911, %v1903
    %v2064 = vpack.c.b16 %v1912, %v1904
    %v2065 = vpack.c.b16 %v1913, %v1905
    %v2066 = vpack.c.b16 %v1914, %v1906
    %v2067 = vpack.c.b16 %v1915, %v1907
    %v2068 = vpack.c.b16 %v1916, %v1908
    %v2069 = vpack.c.b16 %v1917, %v1909
    %v2070 = vpack.c.b16 %v1926, %v1918
    %v2071 = vpack.c.b16 %v1927, %v1919
    %v2072 = vpack.c.b16 %v1928, %v1920
    %v2073 = vpack.c.b16 %v1929, %v1921
    %v2074 = vpack.c.b16 %v1930, %v1922
    %v2075 = vpack.c.b16 %v1931, %v1923
    %v2076 = vpack.c.b16 %v1932, %v1924
    %v2077 = vpack.c.b16 %v1933, %v1925
    %v2078 = vpack.c.b16 %v1942, %v1934
    %v2079 = vpack.c.b16 %v1943, %v1935
    %v2080 = vpack.c.b16 %v1944, %v1936
    %v2081 = vpack.c.b16 %v1945, %v1937
    %v2082 = vpack.c.b16 %v1946, %v1938
    %v2083 = vpack.c.b16 %v1947, %v1939
    %v2084 = vpack.c.b16 %v1948, %v1940
    %v2085 = vpack.c.b16 %v1949, %v1941
    %v2086 = vpack.c.b16 %v1958, %v1950
    %v2087 = vpack.c.b16 %v1959, %v1951
    %v2088 = vpack.c.b16 %v1960, %v1952
    %v2089 = vpack.c.b16 %v1961, %v1953
    %v2090 = vpack.c.b16 %v1962, %v1954
    %v2091 = vpack.c.b16 %v1963, %v1955
    %v2092 = vpack.c.b16 %v1964, %v1956
    %v2093 = vpack.c.b16 %v1965, %v1957
    %2222 = vmatpush.bf16.msra.mxu0 %v2022
    %2223 = vmatpush.bf16.msra.mxu0 %v2014
    %2224 = vmatpush.bf16.msra.mxu0 %v2006
    %2225 = vmatpush.bf16.msra.mxu0 %v1998
    %2226 = vmatpush.bf16.msra.mxu0 %v1990
    %2227 = vmatpush.bf16.msra.mxu0 %v1982
    %2228 = vmatpush.bf16.msra.mxu0 %v1974
    %2229 = vmatpush.bf16.msra.mxu0 %v1966
    %2230 = vmatmul.bf16.gmra.mxu0 %v1580
    %v2231 = vpop.f32.mrf.mxu0
    %v2232 = vadd.f32 0.0, %v2231
    %v2233 = vpop.f32.mrf.mxu0
    %2234 = vdwg.mxu0
    %2235 = vmatpush.bf16.msra.mxu0 %v2086
    %2236 = vmatpush.bf16.msra.mxu0 %v2078
    %2237 = vmatpush.bf16.msra.mxu0 %v2070
    %2238 = vmatpush.bf16.msra.mxu0 %v2062
    %2239 = vmatpush.bf16.msra.mxu0 %v2054
    %2240 = vmatpush.bf16.msra.mxu0 %v2046
    %2241 = vmatpush.bf16.msra.mxu0 %v2038
    %2242 = vmatpush.bf16.msra.mxu0 %v2030
    %2243 = vmatmul.bf16.gmra.mxu0 %v1581
    %v2244 = vpop.f32.mrf.mxu0
    %v2245 = vadd.f32 %v2232, %v2244
    %v2246 = vpop.f32.mrf.mxu0
    %2247 = vdwg.mxu0
    %2248 = vmatpush.bf16.msra.mxu0 %v2023
    %2249 = vmatpush.bf16.msra.mxu0 %v2015
    %2250 = vmatpush.bf16.msra.mxu0 %v2007
    %2251 = vmatpush.bf16.msra.mxu0 %v1999
    %2252 = vmatpush.bf16.msra.mxu0 %v1991
    %2253 = vmatpush.bf16.msra.mxu0 %v1983
    %2254 = vmatpush.bf16.msra.mxu0 %v1975
    %2255 = vmatpush.bf16.msra.mxu0 %v1967
    %2256 = vmatmul.bf16.gmra.mxu0 %v1580
    %v2257 = vpop.f32.mrf.mxu0
    %v2258 = vadd.f32 0.0, %v2257
    %v2259 = vpop.f32.mrf.mxu0
    %2260 = vdwg.mxu0
    %2261 = vmatpush.bf16.msra.mxu0 %v2087
    %2262 = vmatpush.bf16.msra.mxu0 %v2079
    %2263 = vmatpush.bf16.msra.mxu0 %v2071
    %2264 = vmatpush.bf16.msra.mxu0 %v2063
    %2265 = vmatpush.bf16.msra.mxu0 %v2055
    %2266 = vmatpush.bf16.msra.mxu0 %v2047
    %2267 = vmatpush.bf16.msra.mxu0 %v2039
    %2268 = vmatpush.bf16.msra.mxu0 %v2031
    %2269 = vmatmul.bf16.gmra.mxu0 %v1581
    %v2270 = vpop.f32.mrf.mxu0
    %v2271 = vadd.f32 %v2258, %v2270
    %v2272 = vpop.f32.mrf.mxu0
    %2273 = vdwg.mxu0
    %2274 = vmatpush.bf16.msra.mxu0 %v2024
    %2275 = vmatpush.bf16.msra.mxu0 %v2016
    %2276 = vmatpush.bf16.msra.mxu0 %v2008
    %2277 = vmatpush.bf16.msra.mxu0 %v2000
    %2278 = vmatpush.bf16.msra.mxu0 %v1992
    %2279 = vmatpush.bf16.msra.mxu0 %v1984
    %2280 = vmatpush.bf16.msra.mxu0 %v1976
    %2281 = vmatpush.bf16.msra.mxu0 %v1968
    %2282 = vmatmul.bf16.gmra.mxu0 %v1580
    %v2283 = vpop.f32.mrf.mxu0
    %v2284 = vadd.f32 0.0, %v2283
    %v2285 = vpop.f32.mrf.mxu0
    %2286 = vdwg.mxu0
    %2287 = vmatpush.bf16.msra.mxu0 %v2088
    %2288 = vmatpush.bf16.msra.mxu0 %v2080
    %2289 = vmatpush.bf16.msra.mxu0 %v2072
    %2290 = vmatpush.bf16.msra.mxu0 %v2064
    %2291 = vmatpush.bf16.msra.mxu0 %v2056
    %2292 = vmatpush.bf16.msra.mxu0 %v2048
    %2293 = vmatpush.bf16.msra.mxu0 %v2040
    %2294 = vmatpush.bf16.msra.mxu0 %v2032
    %2295 = vmatmul.bf16.gmra.mxu0 %v1581
    %v2296 = vpop.f32.mrf.mxu0
    %v2297 = vadd.f32 %v2284, %v2296
    %v2298 = vpop.f32.mrf.mxu0
    %2299 = vdwg.mxu0
    %2300 = vmatpush.bf16.msra.mxu0 %v2025
    %2301 = vmatpush.bf16.msra.mxu0 %v2017
    %2302 = vmatpush.bf16.msra.mxu0 %v2009
    %2303 = vmatpush.bf16.msra.mxu0 %v2001
    %2304 = vmatpush.bf16.msra.mxu0 %v1993
    %2305 = vmatpush.bf16.msra.mxu0 %v1985
    %2306 = vmatpush.bf16.msra.mxu0 %v1977
    %2307 = vmatpush.bf16.msra.mxu0 %v1969
    %2308 = vmatmul.bf16.gmra.mxu0 %v1580
    %v2309 = vpop.f32.mrf.mxu0
    %v2310 = vadd.f32 0.0, %v2309
    %v2311 = vpop.f32.mrf.mxu0
    %2312 = vdwg.mxu0
    %2313 = vmatpush.bf16.msra.mxu0 %v2089
    %2314 = vmatpush.bf16.msra.mxu0 %v2081
    %2315 = vmatpush.bf16.msra.mxu0 %v2073
    %2316 = vmatpush.bf16.msra.mxu0 %v2065
    %2317 = vmatpush.bf16.msra.mxu0 %v2057
    %2318 = vmatpush.bf16.msra.mxu0 %v2049
    %2319 = vmatpush.bf16.msra.mxu0 %v2041
    %2320 = vmatpush.bf16.msra.mxu0 %v2033
    %2321 = vmatmul.bf16.gmra.mxu0 %v1581
    %v2322 = vpop.f32.mrf.mxu0
    %v2323 = vadd.f32 %v2310, %v2322
    %v2324 = vpop.f32.mrf.mxu0
    %2325 = vdwg.mxu0
    %2326 = vmatpush.bf16.msra.mxu0 %v2026
    %2327 = vmatpush.bf16.msra.mxu0 %v2018
    %2328 = vmatpush.bf16.msra.mxu0 %v2010
    %2329 = vmatpush.bf16.msra.mxu0 %v2002
    %2330 = vmatpush.bf16.msra.mxu0 %v1994
    %2331 = vmatpush.bf16.msra.mxu0 %v1986
    %2332 = vmatpush.bf16.msra.mxu0 %v1978
    %2333 = vmatpush.bf16.msra.mxu0 %v1970
    %2334 = vmatmul.bf16.gmra.mxu0 %v1580
    %v2335 = vpop.f32.mrf.mxu0
    %v2336 = vadd.f32 0.0, %v2335
    %v2337 = vpop.f32.mrf.mxu0
    %2338 = vdwg.mxu0
    %2339 = vmatpush.bf16.msra.mxu0 %v2090
    %2340 = vmatpush.bf16.msra.mxu0 %v2082
    %2341 = vmatpush.bf16.msra.mxu0 %v2074
    %2342 = vmatpush.bf16.msra.mxu0 %v2066
    %2343 = vmatpush.bf16.msra.mxu0 %v2058
    %2344 = vmatpush.bf16.msra.mxu0 %v2050
    %2345 = vmatpush.bf16.msra.mxu0 %v2042
    %2346 = vmatpush.bf16.msra.mxu0 %v2034
    %2347 = vmatmul.bf16.gmra.mxu0 %v1581
    %v2348 = vpop.f32.mrf.mxu0
    %v2349 = vadd.f32 %v2336, %v2348
    %v2350 = vpop.f32.mrf.mxu0
    %2351 = vdwg.mxu0
    %2352 = vmatpush.bf16.msra.mxu0 %v2027
    %2353 = vmatpush.bf16.msra.mxu0 %v2019
    %2354 = vmatpush.bf16.msra.mxu0 %v2011
    %2355 = vmatpush.bf16.msra.mxu0 %v2003
    %2356 = vmatpush.bf16.msra.mxu0 %v1995
    %2357 = vmatpush.bf16.msra.mxu0 %v1987
    %2358 = vmatpush.bf16.msra.mxu0 %v1979
    %2359 = vmatpush.bf16.msra.mxu0 %v1971
    %2360 = vmatmul.bf16.gmra.mxu0 %v1580
    %v2361 = vpop.f32.mrf.mxu0
    %v2362 = vadd.f32 0.0, %v2361
    %v2363 = vpop.f32.mrf.mxu0
    %2364 = vdwg.mxu0
    %2365 = vmatpush.bf16.msra.mxu0 %v2091
    %2366 = vmatpush.bf16.msra.mxu0 %v2083
    %2367 = vmatpush.bf16.msra.mxu0 %v2075
    %2368 = vmatpush.bf16.msra.mxu0 %v2067
    %2369 = vmatpush.bf16.msra.mxu0 %v2059
    %2370 = vmatpush.bf16.msra.mxu0 %v2051
    %2371 = vmatpush.bf16.msra.mxu0 %v2043
    %2372 = vmatpush.bf16.msra.mxu0 %v2035
    %2373 = vmatmul.bf16.gmra.mxu0 %v1581
    %v2374 = vpop.f32.mrf.mxu0
    %v2375 = vadd.f32 %v2362, %v2374
    %v2376 = vpop.f32.mrf.mxu0
    %2377 = vdwg.mxu0
    %2378 = vmatpush.bf16.msra.mxu0 %v2028
    %2379 = vmatpush.bf16.msra.mxu0 %v2020
    %2380 = vmatpush.bf16.msra.mxu0 %v2012
    %2381 = vmatpush.bf16.msra.mxu0 %v2004
    %2382 = vmatpush.bf16.msra.mxu0 %v1996
    %2383 = vmatpush.bf16.msra.mxu0 %v1988
    %2384 = vmatpush.bf16.msra.mxu0 %v1980
    %2385 = vmatpush.bf16.msra.mxu0 %v1972
    %2386 = vmatmul.bf16.gmra.mxu0 %v1580
    %v2387 = vpop.f32.mrf.mxu0
    %v2388 = vadd.f32 0.0, %v2387
    %v2389 = vpop.f32.mrf.mxu0
    %2390 = vdwg.mxu0
    %2391 = vmatpush.bf16.msra.mxu0 %v2092
    %2392 = vmatpush.bf16.msra.mxu0 %v2084
    %2393 = vmatpush.bf16.msra.mxu0 %v2076
    %2394 = vmatpush.bf16.msra.mxu0 %v2068
    %2395 = vmatpush.bf16.msra.mxu0 %v2060
    %2396 = vmatpush.bf16.msra.mxu0 %v2052
    %2397 = vmatpush.bf16.msra.mxu0 %v2044
    %2398 = vmatpush.bf16.msra.mxu0 %v2036
    %2399 = vmatmul.bf16.gmra.mxu0 %v1581
    %v2400 = vpop.f32.mrf.mxu0
    %v2401 = vadd.f32 %v2388, %v2400
    %v2402 = vpop.f32.mrf.mxu0
    %2403 = vdwg.mxu0
    %2404 = vmatpush.bf16.msra.mxu0 %v2029
    %2405 = vmatpush.bf16.msra.mxu0 %v2021
    %2406 = vmatpush.bf16.msra.mxu0 %v2013
    %2407 = vmatpush.bf16.msra.mxu0 %v2005
    %2408 = vmatpush.bf16.msra.mxu0 %v1997
    %2409 = vmatpush.bf16.msra.mxu0 %v1989
    %2410 = vmatpush.bf16.msra.mxu0 %v1981
    %2411 = vmatpush.bf16.msra.mxu0 %v1973
    %2412 = vmatmul.bf16.gmra.mxu0 %v1580
    %v2413 = vpop.f32.mrf.mxu0
    %v2414 = vadd.f32 0.0, %v2413
    %v2415 = vpop.f32.mrf.mxu0
    %2416 = vdwg.mxu0
    %2417 = vmatpush.bf16.msra.mxu0 %v2093
    %2418 = vmatpush.bf16.msra.mxu0 %v2085
    %2419 = vmatpush.bf16.msra.mxu0 %v2077
    %2420 = vmatpush.bf16.msra.mxu0 %v2069
    %2421 = vmatpush.bf16.msra.mxu0 %v2061
    %2422 = vmatpush.bf16.msra.mxu0 %v2053
    %2423 = vmatpush.bf16.msra.mxu0 %v2045
    %2424 = vmatpush.bf16.msra.mxu0 %v2037
    %2425 = vmatmul.bf16.gmra.mxu0 %v1581
    %v2426 = vpop.f32.mrf.mxu0
    %v2427 = vadd.f32 %v2414, %v2426
    %v2428 = vpop.f32.mrf.mxu0
    %2429 = vdwg.mxu0
    %v2430 = vadd.f32 %v1572, %v2245
    %v2431 = vadd.f32 %v1573, %v2271
    %v2432 = vadd.f32 %v1574, %v2297
    %v2433 = vadd.f32 %v1575, %v2323
    %v2434 = vadd.f32 %v1576, %v2349
    %v2435 = vadd.f32 %v1577, %v2375
    %v2436 = vadd.f32 %v1578, %v2401
    %v2437 = vadd.f32 %v1579, %v2427
    %v2438 = vxor.u32 %v2430, 2147483648
    %v2439 = vxor.u32 %v2431, 2147483648
    %v2440 = vmul.f32 %v2438, 1.442695
    %v2441 = vpow.pop %v2440
    %v2442 = vmul.f32 %v2439, 1.442695
    %v2443 = vpow.pop %v2442
    %v2444 = vadd.f32 %v2441, 1.0
    %v2445 = vadd.f32 %v2443, 1.0
    %v2446 = vrcp.pop %v2444
    %v2447 = vmul.f32 %v2444, %v2446
    %v2448 = vsub.f32 1.0, %v2447
    %v2449 = vmul.f32 %v2446, %v2448
    %v2450 = vadd.f32 %v2446, %v2449
    %vm2451 = vweird.f32 %v2444
    %vm2452 = vweird.f32 %v2446
    %vm2453 = vmor %vm2451, %vm2452
    %v2454 = vsel %vm2453, %v2446, %v2450
    %v2455 = vand.u32 2147483647, %v2444
    %vm2456 = vcmp.eq.f32.partialorder %v2455, 8.507059e+37
    %v2457 = vand.u32 %v2444, 2147483648
    %v2458 = vor.u32 1.1754944e-38, %v2457
    %v2459 = vsel %vm2456, %v2458, %v2454
    %v2460 = vmul.f32 1.0, %v2459
    %v2461 = vrcp.pop %v2445
    %v2462 = vmul.f32 %v2445, %v2461
    %v2463 = vsub.f32 1.0, %v2462
    %v2464 = vmul.f32 %v2461, %v2463
    %v2465 = vadd.f32 %v2461, %v2464
    %vm2466 = vweird.f32 %v2445
    %vm2467 = vweird.f32 %v2461
    %vm2468 = vmor %vm2466, %vm2467
    %v2469 = vsel %vm2468, %v2461, %v2465
    %v2470 = vand.u32 2147483647, %v2445
    %vm2471 = vcmp.eq.f32.partialorder %v2470, 8.507059e+37
    %v2472 = vand.u32 %v2445, 2147483648
    %v2473 = vor.u32 1.1754944e-38, %v2472
    %v2474 = vsel %vm2471, %v2473, %v2469
    %v2475 = vmul.f32 1.0, %v2474
    %v2476 = vxor.u32 %v2432, 2147483648
    %v2477 = vxor.u32 %v2433, 2147483648
    %v2478 = vmul.f32 %v2476, 1.442695
    %v2479 = vpow.pop %v2478
    %v2480 = vmul.f32 %v2477, 1.442695
    %v2481 = vpow.pop %v2480
    %v2482 = vadd.f32 %v2479, 1.0
    %v2483 = vadd.f32 %v2481, 1.0
    %v2484 = vrcp.pop %v2482
    %v2485 = vmul.f32 %v2482, %v2484
    %v2486 = vsub.f32 1.0, %v2485
    %v2487 = vmul.f32 %v2484, %v2486
    %v2488 = vadd.f32 %v2484, %v2487
    %vm2489 = vweird.f32 %v2482
    %vm2490 = vweird.f32 %v2484
    %vm2491 = vmor %vm2489, %vm2490
    %v2492 = vsel %vm2491, %v2484, %v2488
    %v2493 = vand.u32 2147483647, %v2482
    %vm2494 = vcmp.eq.f32.partialorder %v2493, 8.507059e+37
    %v2495 = vand.u32 %v2482, 2147483648
    %v2496 = vor.u32 1.1754944e-38, %v2495
    %v2497 = vsel %vm2494, %v2496, %v2492
    %v2498 = vmul.f32 1.0, %v2497
    %v2499 = vrcp.pop %v2483
    %v2500 = vmul.f32 %v2483, %v2499
    %v2501 = vsub.f32 1.0, %v2500
    %v2502 = vmul.f32 %v2499, %v2501
    %v2503 = vadd.f32 %v2499, %v2502
    %vm2504 = vweird.f32 %v2483
    %vm2505 = vweird.f32 %v2499
    %vm2506 = vmor %vm2504, %vm2505
    %v2507 = vsel %vm2506, %v2499, %v2503
    %v2508 = vand.u32 2147483647, %v2483
    %vm2509 = vcmp.eq.f32.partialorder %v2508, 8.507059e+37
    %v2510 = vand.u32 %v2483, 2147483648
    %v2511 = vor.u32 1.1754944e-38, %v2510
    %v2512 = vsel %vm2509, %v2511, %v2507
    %v2513 = vmul.f32 1.0, %v2512
    %v2514 = vtanh.pop %v2434
    %v2515 = vtanh.pop %v2435
    %v2516 = vxor.u32 %v2436, 2147483648
    %v2517 = vxor.u32 %v2437, 2147483648
    %v2518 = vmul.f32 %v2516, 1.442695
    %v2519 = vpow.pop %v2518
    %v2520 = vmul.f32 %v2517, 1.442695
    %v2521 = vpow.pop %v2520
    %v2522 = vadd.f32 %v2519, 1.0
    %v2523 = vadd.f32 %v2521, 1.0
    %v2524 = vrcp.pop %v2522
    %v2525 = vmul.f32 %v2522, %v2524
    %v2526 = vsub.f32 1.0, %v2525
    %v2527 = vmul.f32 %v2524, %v2526
    %v2528 = vadd.f32 %v2524, %v2527
    %vm2529 = vweird.f32 %v2522
    %vm2530 = vweird.f32 %v2524
    %vm2531 = vmor %vm2529, %vm2530
    %v2532 = vsel %vm2531, %v2524, %v2528
    %v2533 = vand.u32 2147483647, %v2522
    %vm2534 = vcmp.eq.f32.partialorder %v2533, 8.507059e+37
    %v2535 = vand.u32 %v2522, 2147483648
    %v2536 = vor.u32 1.1754944e-38, %v2535
    %v2537 = vsel %vm2534, %v2536, %v2532
    %v2538 = vmul.f32 1.0, %v2537
    %v2539 = vrcp.pop %v2523
    %v2540 = vmul.f32 %v2523, %v2539
    %v2541 = vsub.f32 1.0, %v2540
    %v2542 = vmul.f32 %v2539, %v2541
    %v2543 = vadd.f32 %v2539, %v2542
    %vm2544 = vweird.f32 %v2523
    %vm2545 = vweird.f32 %v2539
    %vm2546 = vmor %vm2544, %vm2545
    %v2547 = vsel %vm2546, %v2539, %v2543
    %v2548 = vand.u32 2147483647, %v2523
    %vm2549 = vcmp.eq.f32.partialorder %v2548, 8.507059e+37
    %v2550 = vand.u32 %v2523, 2147483648
    %v2551 = vor.u32 1.1754944e-38, %v2550
    %v2552 = vsel %vm2549, %v2551, %v2547
    %v2553 = vmul.f32 1.0, %v2552
    %v2554 = vmul.f32 %v2498, %v1570
    %v2555 = vmul.f32 %v2513, %v1571
    %v2556 = vmul.f32 %v2460, %v2514
    %v2557 = vmul.f32 %v2475, %v2515
    %v2558 = vadd.f32 %v2554, %v2556
    %v2559 = vadd.f32 %v2555, %v2557
    %v2560 = vtanh.pop %v2558
    %v2561 = vtanh.pop %v2559
    %v2562 = vmul.f32 %v2538, %v2560
    %v2563 = vmul.f32 %v2553, %v2561
    %v2564 = vstv %s1567
    %vm2565 = vcmp.lt.s32.totalorder %v2564, %v1566
    %v2566 = vsel %vm2565, 1, 0
    %2567 = vset.pattern.permute.xlu0 0
    %2568 = vperm.xlu0 %2567, %v2566
    %v2569 = vpop.permute.xlu0 %2568
    %vm2570 = vcmp.eq.s32.totalorder %v2569, 1
    %v2571 = vsel %vm2570, %v2562, 0.0
    %v2572 = vsel %vm2570, %v2563, 0.0
    %v2573 = vpack.c.bf16 %v2572, %v2571
    %2574 = vst [vmem:[#allocation11] sm:$0xff] %v2573
    %s2575 = scalar_lea.vmem [#allocation2], 64
    %v2576 = vld [vmem:[%s2575] sm:$0xff]
    %v2577 = vld [vmem:[%s2575 + $0x8] sm:$0xff]
    %v2578 = vld [vmem:[%s2575 + $0x10] sm:$0xff]
    %v2579 = vld [vmem:[%s2575 + $0x18] sm:$0xff]
    %v2580 = vld [vmem:[%s2575 + $0x20] sm:$0xff]
    %v2581 = vld [vmem:[%s2575 + $0x28] sm:$0xff]
    %v2582 = vld [vmem:[%s2575 + $0x30] sm:$0xff]
    %v2583 = vld [vmem:[%s2575 + $0x38] sm:$0xff]
    %v2584 = vpack.c.bf16 %v2562, %v2562
    %v2585 = vpack.c.bf16 %v2563, %v2563
    %2586 = vmatpush.bf16.msra.mxu0 %v2022
    %2587 = vmatpush.bf16.msra.mxu0 %v2014
    %2588 = vmatpush.bf16.msra.mxu0 %v2006
    %2589 = vmatpush.bf16.msra.mxu0 %v1998
    %2590 = vmatpush.bf16.msra.mxu0 %v1990
    %2591 = vmatpush.bf16.msra.mxu0 %v1982
    %2592 = vmatpush.bf16.msra.mxu0 %v1974
    %2593 = vmatpush.bf16.msra.mxu0 %v1966
    %2594 = vmatmul.bf16.gmra.mxu0 %v2584
    %v2595 = vpop.f32.mrf.mxu0
    %v2596 = vadd.f32 0.0, %v2595
    %v2597 = vpop.f32.mrf.mxu0
    %2598 = vdwg.mxu0
    %2599 = vmatpush.bf16.msra.mxu0 %v2086
    %2600 = vmatpush.bf16.msra.mxu0 %v2078
    %2601 = vmatpush.bf16.msra.mxu0 %v2070
    %2602 = vmatpush.bf16.msra.mxu0 %v2062
    %2603 = vmatpush.bf16.msra.mxu0 %v2054
    %2604 = vmatpush.bf16.msra.mxu0 %v2046
    %2605 = vmatpush.bf16.msra.mxu0 %v2038
    %2606 = vmatpush.bf16.msra.mxu0 %v2030
    %2607 = vmatmul.bf16.gmra.mxu0 %v2585
    %v2608 = vpop.f32.mrf.mxu0
    %v2609 = vadd.f32 %v2596, %v2608
    %v2610 = vpop.f32.mrf.mxu0
    %2611 = vdwg.mxu0
    %2612 = vmatpush.bf16.msra.mxu0 %v2023
    %2613 = vmatpush.bf16.msra.mxu0 %v2015
    %2614 = vmatpush.bf16.msra.mxu0 %v2007
    %2615 = vmatpush.bf16.msra.mxu0 %v1999
    %2616 = vmatpush.bf16.msra.mxu0 %v1991
    %2617 = vmatpush.bf16.msra.mxu0 %v1983
    %2618 = vmatpush.bf16.msra.mxu0 %v1975
    %2619 = vmatpush.bf16.msra.mxu0 %v1967
    %2620 = vmatmul.bf16.gmra.mxu0 %v2584
    %v2621 = vpop.f32.mrf.mxu0
    %v2622 = vadd.f32 0.0, %v2621
    %v2623 = vpop.f32.mrf.mxu0
    %2624 = vdwg.mxu0
    %2625 = vmatpush.bf16.msra.mxu0 %v2087
    %2626 = vmatpush.bf16.msra.mxu0 %v2079
    %2627 = vmatpush.bf16.msra.mxu0 %v2071
    %2628 = vmatpush.bf16.msra.mxu0 %v2063
    %2629 = vmatpush.bf16.msra.mxu0 %v2055
    %2630 = vmatpush.bf16.msra.mxu0 %v2047
    %2631 = vmatpush.bf16.msra.mxu0 %v2039
    %2632 = vmatpush.bf16.msra.mxu0 %v2031
    %2633 = vmatmul.bf16.gmra.mxu0 %v2585
    %v2634 = vpop.f32.mrf.mxu0
    %v2635 = vadd.f32 %v2622, %v2634
    %v2636 = vpop.f32.mrf.mxu0
    %2637 = vdwg.mxu0
    %2638 = vmatpush.bf16.msra.mxu0 %v2024
    %2639 = vmatpush.bf16.msra.mxu0 %v2016
    %2640 = vmatpush.bf16.msra.mxu0 %v2008
    %2641 = vmatpush.bf16.msra.mxu0 %v2000
    %2642 = vmatpush.bf16.msra.mxu0 %v1992
    %2643 = vmatpush.bf16.msra.mxu0 %v1984
    %2644 = vmatpush.bf16.msra.mxu0 %v1976
    %2645 = vmatpush.bf16.msra.mxu0 %v1968
    %2646 = vmatmul.bf16.gmra.mxu0 %v2584
    %v2647 = vpop.f32.mrf.mxu0
    %v2648 = vadd.f32 0.0, %v2647
    %v2649 = vpop.f32.mrf.mxu0
    %2650 = vdwg.mxu0
    %2651 = vmatpush.bf16.msra.mxu0 %v2088
    %2652 = vmatpush.bf16.msra.mxu0 %v2080
    %2653 = vmatpush.bf16.msra.mxu0 %v2072
    %2654 = vmatpush.bf16.msra.mxu0 %v2064
    %2655 = vmatpush.bf16.msra.mxu0 %v2056
    %2656 = vmatpush.bf16.msra.mxu0 %v2048
    %2657 = vmatpush.bf16.msra.mxu0 %v2040
    %2658 = vmatpush.bf16.msra.mxu0 %v2032
    %2659 = vmatmul.bf16.gmra.mxu0 %v2585
    %v2660 = vpop.f32.mrf.mxu0
    %v2661 = vadd.f32 %v2648, %v2660
    %v2662 = vpop.f32.mrf.mxu0
    %2663 = vdwg.mxu0
    %2664 = vmatpush.bf16.msra.mxu0 %v2025
    %2665 = vmatpush.bf16.msra.mxu0 %v2017
    %2666 = vmatpush.bf16.msra.mxu0 %v2009
    %2667 = vmatpush.bf16.msra.mxu0 %v2001
    %2668 = vmatpush.bf16.msra.mxu0 %v1993
    %2669 = vmatpush.bf16.msra.mxu0 %v1985
    %2670 = vmatpush.bf16.msra.mxu0 %v1977
    %2671 = vmatpush.bf16.msra.mxu0 %v1969
    %2672 = vmatmul.bf16.gmra.mxu0 %v2584
    %v2673 = vpop.f32.mrf.mxu0
    %v2674 = vadd.f32 0.0, %v2673
    %v2675 = vpop.f32.mrf.mxu0
    %2676 = vdwg.mxu0
    %2677 = vmatpush.bf16.msra.mxu0 %v2089
    %2678 = vmatpush.bf16.msra.mxu0 %v2081
    %2679 = vmatpush.bf16.msra.mxu0 %v2073
    %2680 = vmatpush.bf16.msra.mxu0 %v2065
    %2681 = vmatpush.bf16.msra.mxu0 %v2057
    %2682 = vmatpush.bf16.msra.mxu0 %v2049
    %2683 = vmatpush.bf16.msra.mxu0 %v2041
    %2684 = vmatpush.bf16.msra.mxu0 %v2033
    %2685 = vmatmul.bf16.gmra.mxu0 %v2585
    %v2686 = vpop.f32.mrf.mxu0
    %v2687 = vadd.f32 %v2674, %v2686
    %v2688 = vpop.f32.mrf.mxu0
    %2689 = vdwg.mxu0
    %2690 = vmatpush.bf16.msra.mxu0 %v2026
    %2691 = vmatpush.bf16.msra.mxu0 %v2018
    %2692 = vmatpush.bf16.msra.mxu0 %v2010
    %2693 = vmatpush.bf16.msra.mxu0 %v2002
    %2694 = vmatpush.bf16.msra.mxu0 %v1994
    %2695 = vmatpush.bf16.msra.mxu0 %v1986
    %2696 = vmatpush.bf16.msra.mxu0 %v1978
    %2697 = vmatpush.bf16.msra.mxu0 %v1970
    %2698 = vmatmul.bf16.gmra.mxu0 %v2584
    %v2699 = vpop.f32.mrf.mxu0
    %v2700 = vadd.f32 0.0, %v2699
    %v2701 = vpop.f32.mrf.mxu0
    %2702 = vdwg.mxu0
    %2703 = vmatpush.bf16.msra.mxu0 %v2090
    %2704 = vmatpush.bf16.msra.mxu0 %v2082
    %2705 = vmatpush.bf16.msra.mxu0 %v2074
    %2706 = vmatpush.bf16.msra.mxu0 %v2066
    %2707 = vmatpush.bf16.msra.mxu0 %v2058
    %2708 = vmatpush.bf16.msra.mxu0 %v2050
    %2709 = vmatpush.bf16.msra.mxu0 %v2042
    %2710 = vmatpush.bf16.msra.mxu0 %v2034
    %2711 = vmatmul.bf16.gmra.mxu0 %v2585
    %v2712 = vpop.f32.mrf.mxu0
    %v2713 = vadd.f32 %v2700, %v2712
    %v2714 = vpop.f32.mrf.mxu0
    %2715 = vdwg.mxu0
    %2716 = vmatpush.bf16.msra.mxu0 %v2027
    %2717 = vmatpush.bf16.msra.mxu0 %v2019
    %2718 = vmatpush.bf16.msra.mxu0 %v2011
    %2719 = vmatpush.bf16.msra.mxu0 %v2003
    %2720 = vmatpush.bf16.msra.mxu0 %v1995
    %2721 = vmatpush.bf16.msra.mxu0 %v1987
    %2722 = vmatpush.bf16.msra.mxu0 %v1979
    %2723 = vmatpush.bf16.msra.mxu0 %v1971
    %2724 = vmatmul.bf16.gmra.mxu0 %v2584
    %v2725 = vpop.f32.mrf.mxu0
    %v2726 = vadd.f32 0.0, %v2725
    %v2727 = vpop.f32.mrf.mxu0
    %2728 = vdwg.mxu0
    %2729 = vmatpush.bf16.msra.mxu0 %v2091
    %2730 = vmatpush.bf16.msra.mxu0 %v2083
    %2731 = vmatpush.bf16.msra.mxu0 %v2075
    %2732 = vmatpush.bf16.msra.mxu0 %v2067
    %2733 = vmatpush.bf16.msra.mxu0 %v2059
    %2734 = vmatpush.bf16.msra.mxu0 %v2051
    %2735 = vmatpush.bf16.msra.mxu0 %v2043
    %2736 = vmatpush.bf16.msra.mxu0 %v2035
    %2737 = vmatmul.bf16.gmra.mxu0 %v2585
    %v2738 = vpop.f32.mrf.mxu0
    %v2739 = vadd.f32 %v2726, %v2738
    %v2740 = vpop.f32.mrf.mxu0
    %2741 = vdwg.mxu0
    %2742 = vmatpush.bf16.msra.mxu0 %v2028
    %2743 = vmatpush.bf16.msra.mxu0 %v2020
    %2744 = vmatpush.bf16.msra.mxu0 %v2012
    %2745 = vmatpush.bf16.msra.mxu0 %v2004
    %2746 = vmatpush.bf16.msra.mxu0 %v1996
    %2747 = vmatpush.bf16.msra.mxu0 %v1988
    %2748 = vmatpush.bf16.msra.mxu0 %v1980
    %2749 = vmatpush.bf16.msra.mxu0 %v1972
    %2750 = vmatmul.bf16.gmra.mxu0 %v2584
    %v2751 = vpop.f32.mrf.mxu0
    %v2752 = vadd.f32 0.0, %v2751
    %v2753 = vpop.f32.mrf.mxu0
    %2754 = vdwg.mxu0
    %2755 = vmatpush.bf16.msra.mxu0 %v2092
    %2756 = vmatpush.bf16.msra.mxu0 %v2084
    %2757 = vmatpush.bf16.msra.mxu0 %v2076
    %2758 = vmatpush.bf16.msra.mxu0 %v2068
    %2759 = vmatpush.bf16.msra.mxu0 %v2060
    %2760 = vmatpush.bf16.msra.mxu0 %v2052
    %2761 = vmatpush.bf16.msra.mxu0 %v2044
    %2762 = vmatpush.bf16.msra.mxu0 %v2036
    %2763 = vmatmul.bf16.gmra.mxu0 %v2585
    %v2764 = vpop.f32.mrf.mxu0
    %v2765 = vadd.f32 %v2752, %v2764
    %v2766 = vpop.f32.mrf.mxu0
    %2767 = vdwg.mxu0
    %2768 = vmatpush.bf16.msra.mxu0 %v2029
    %2769 = vmatpush.bf16.msra.mxu0 %v2021
    %2770 = vmatpush.bf16.msra.mxu0 %v2013
    %2771 = vmatpush.bf16.msra.mxu0 %v2005
    %2772 = vmatpush.bf16.msra.mxu0 %v1997
    %2773 = vmatpush.bf16.msra.mxu0 %v1989
    %2774 = vmatpush.bf16.msra.mxu0 %v1981
    %2775 = vmatpush.bf16.msra.mxu0 %v1973
    %2776 = vmatmul.bf16.gmra.mxu0 %v2584
    %v2777 = vpop.f32.mrf.mxu0
    %v2778 = vadd.f32 0.0, %v2777
    %v2779 = vpop.f32.mrf.mxu0
    %2780 = vdwg.mxu0
    %2781 = vmatpush.bf16.msra.mxu0 %v2093
    %2782 = vmatpush.bf16.msra.mxu0 %v2085
    %2783 = vmatpush.bf16.msra.mxu0 %v2077
    %2784 = vmatpush.bf16.msra.mxu0 %v2069
    %2785 = vmatpush.bf16.msra.mxu0 %v2061
    %2786 = vmatpush.bf16.msra.mxu0 %v2053
    %2787 = vmatpush.bf16.msra.mxu0 %v2045
    %2788 = vmatpush.bf16.msra.mxu0 %v2037
    %2789 = vmatmul.bf16.gmra.mxu0 %v2585
    %v2790 = vpop.f32.mrf.mxu0
    %v2791 = vadd.f32 %v2778, %v2790
    %v2792 = vpop.f32.mrf.mxu0
    %2793 = vdwg.mxu0
    %v2794 = vadd.f32 %v2576, %v2609
    %v2795 = vadd.f32 %v2577, %v2635
    %v2796 = vadd.f32 %v2578, %v2661
    %v2797 = vadd.f32 %v2579, %v2687
    %v2798 = vadd.f32 %v2580, %v2713
    %v2799 = vadd.f32 %v2581, %v2739
    %v2800 = vadd.f32 %v2582, %v2765
    %v2801 = vadd.f32 %v2583, %v2791
    %v2802 = vxor.u32 %v2794, 2147483648
    %v2803 = vxor.u32 %v2795, 2147483648
    %v2804 = vmul.f32 %v2802, 1.442695
    %v2805 = vpow.pop %v2804
    %v2806 = vmul.f32 %v2803, 1.442695
    %v2807 = vpow.pop %v2806
    %v2808 = vadd.f32 %v2805, 1.0
    %v2809 = vadd.f32 %v2807, 1.0
    %v2810 = vrcp.pop %v2808
    %v2811 = vmul.f32 %v2808, %v2810
    %v2812 = vsub.f32 1.0, %v2811
    %v2813 = vmul.f32 %v2810, %v2812
    %v2814 = vadd.f32 %v2810, %v2813
    %vm2815 = vweird.f32 %v2808
    %vm2816 = vweird.f32 %v2810
    %vm2817 = vmor %vm2815, %vm2816
    %v2818 = vsel %vm2817, %v2810, %v2814
    %v2819 = vand.u32 2147483647, %v2808
    %vm2820 = vcmp.eq.f32.partialorder %v2819, 8.507059e+37
    %v2821 = vand.u32 %v2808, 2147483648
    %v2822 = vor.u32 1.1754944e-38, %v2821
    %v2823 = vsel %vm2820, %v2822, %v2818
    %v2824 = vmul.f32 1.0, %v2823
    %v2825 = vrcp.pop %v2809
    %v2826 = vmul.f32 %v2809, %v2825
    %v2827 = vsub.f32 1.0, %v2826
    %v2828 = vmul.f32 %v2825, %v2827
    %v2829 = vadd.f32 %v2825, %v2828
    %vm2830 = vweird.f32 %v2809
    %vm2831 = vweird.f32 %v2825
    %vm2832 = vmor %vm2830, %vm2831
    %v2833 = vsel %vm2832, %v2825, %v2829
    %v2834 = vand.u32 2147483647, %v2809
    %vm2835 = vcmp.eq.f32.partialorder %v2834, 8.507059e+37
    %v2836 = vand.u32 %v2809, 2147483648
    %v2837 = vor.u32 1.1754944e-38, %v2836
    %v2838 = vsel %vm2835, %v2837, %v2833
    %v2839 = vmul.f32 1.0, %v2838
    %v2840 = vxor.u32 %v2796, 2147483648
    %v2841 = vxor.u32 %v2797, 2147483648
    %v2842 = vmul.f32 %v2840, 1.442695
    %v2843 = vpow.pop %v2842
    %v2844 = vmul.f32 %v2841, 1.442695
    %v2845 = vpow.pop %v2844
    %v2846 = vadd.f32 %v2843, 1.0
    %v2847 = vadd.f32 %v2845, 1.0
    %v2848 = vrcp.pop %v2846
    %v2849 = vmul.f32 %v2846, %v2848
    %v2850 = vsub.f32 1.0, %v2849
    %v2851 = vmul.f32 %v2848, %v2850
    %v2852 = vadd.f32 %v2848, %v2851
    %vm2853 = vweird.f32 %v2846
    %vm2854 = vweird.f32 %v2848
    %vm2855 = vmor %vm2853, %vm2854
    %v2856 = vsel %vm2855, %v2848, %v2852
    %v2857 = vand.u32 2147483647, %v2846
    %vm2858 = vcmp.eq.f32.partialorder %v2857, 8.507059e+37
    %v2859 = vand.u32 %v2846, 2147483648
    %v2860 = vor.u32 1.1754944e-38, %v2859
    %v2861 = vsel %vm2858, %v2860, %v2856
    %v2862 = vmul.f32 1.0, %v2861
    %v2863 = vrcp.pop %v2847
    %v2864 = vmul.f32 %v2847, %v2863
    %v2865 = vsub.f32 1.0, %v2864
    %v2866 = vmul.f32 %v2863, %v2865
    %v2867 = vadd.f32 %v2863, %v2866
    %vm2868 = vweird.f32 %v2847
    %vm2869 = vweird.f32 %v2863
    %vm2870 = vmor %vm2868, %vm2869
    %v2871 = vsel %vm2870, %v2863, %v2867
    %v2872 = vand.u32 2147483647, %v2847
    %vm2873 = vcmp.eq.f32.partialorder %v2872, 8.507059e+37
    %v2874 = vand.u32 %v2847, 2147483648
    %v2875 = vor.u32 1.1754944e-38, %v2874
    %v2876 = vsel %vm2873, %v2875, %v2871
    %v2877 = vmul.f32 1.0, %v2876
    %v2878 = vtanh.pop %v2798
    %v2879 = vtanh.pop %v2799
    %v2880 = vxor.u32 %v2800, 2147483648
    %v2881 = vxor.u32 %v2801, 2147483648
    %v2882 = vmul.f32 %v2880, 1.442695
    %v2883 = vpow.pop %v2882
    %v2884 = vmul.f32 %v2881, 1.442695
    %v2885 = vpow.pop %v2884
    %v2886 = vadd.f32 %v2883, 1.0
    %v2887 = vadd.f32 %v2885, 1.0
    %v2888 = vrcp.pop %v2886
    %v2889 = vmul.f32 %v2886, %v2888
    %v2890 = vsub.f32 1.0, %v2889
    %v2891 = vmul.f32 %v2888, %v2890
    %v2892 = vadd.f32 %v2888, %v2891
    %vm2893 = vweird.f32 %v2886
    %vm2894 = vweird.f32 %v2888
    %vm2895 = vmor %vm2893, %vm2894
    %v2896 = vsel %vm2895, %v2888, %v2892
    %v2897 = vand.u32 2147483647, %v2886
    %vm2898 = vcmp.eq.f32.partialorder %v2897, 8.507059e+37
    %v2899 = vand.u32 %v2886, 2147483648
    %v2900 = vor.u32 1.1754944e-38, %v2899
    %v2901 = vsel %vm2898, %v2900, %v2896
    %v2902 = vmul.f32 1.0, %v2901
    %v2903 = vrcp.pop %v2887
    %v2904 = vmul.f32 %v2887, %v2903
    %v2905 = vsub.f32 1.0, %v2904
    %v2906 = vmul.f32 %v2903, %v2905
    %v2907 = vadd.f32 %v2903, %v2906
    %vm2908 = vweird.f32 %v2887
    %vm2909 = vweird.f32 %v2903
    %vm2910 = vmor %vm2908, %vm2909
    %v2911 = vsel %vm2910, %v2903, %v2907
    %v2912 = vand.u32 2147483647, %v2887
    %vm2913 = vcmp.eq.f32.partialorder %v2912, 8.507059e+37
    %v2914 = vand.u32 %v2887, 2147483648
    %v2915 = vor.u32 1.1754944e-38, %v2914
    %v2916 = vsel %vm2913, %v2915, %v2911
    %v2917 = vmul.f32 1.0, %v2916
    %v2918 = vmul.f32 %v2862, %v2558
    %v2919 = vmul.f32 %v2877, %v2559
    %v2920 = vmul.f32 %v2824, %v2878
    %v2921 = vmul.f32 %v2839, %v2879
    %v2922 = vadd.f32 %v2918, %v2920
    %v2923 = vadd.f32 %v2919, %v2921
    %v2924 = vtanh.pop %v2922
    %v2925 = vtanh.pop %v2923
    %v2926 = vmul.f32 %v2902, %v2924
    %v2927 = vmul.f32 %v2917, %v2925
    %s2928 = sadd.s32 %s1567, 1
    %v2929 = vstv %s2928
    %vm2930 = vcmp.lt.s32.totalorder %v2929, %v1566
    %v2931 = vsel %vm2930, 1, 0
    %2932 = vset.pattern.permute.xlu0 0
    %2933 = vperm.xlu0 %2932, %v2931
    %v2934 = vpop.permute.xlu0 %2933
    %vm2935 = vcmp.eq.s32.totalorder %v2934, 1
    %v2936 = vsel %vm2935, %v2926, 0.0
    %v2937 = vsel %vm2935, %v2927, 0.0
    %v2938 = vpack.c.bf16 %v2937, %v2936
    %s2939 = scalar_lea.vmem [#allocation11], 8
    %2940 = vst [vmem:[%s2939] sm:$0xff] %v2938
    %s2941 = scalar_lea.vmem [#allocation2], 128
    %v2942 = vld [vmem:[%s2941] sm:$0xff]
    %v2943 = vld [vmem:[%s2941 + $0x8] sm:$0xff]
    %v2944 = vld [vmem:[%s2941 + $0x10] sm:$0xff]
    %v2945 = vld [vmem:[%s2941 + $0x18] sm:$0xff]
    %v2946 = vld [vmem:[%s2941 + $0x20] sm:$0xff]
    %v2947 = vld [vmem:[%s2941 + $0x28] sm:$0xff]
    %v2948 = vld [vmem:[%s2941 + $0x30] sm:$0xff]
    %v2949 = vld [vmem:[%s2941 + $0x38] sm:$0xff]
    %v2950 = vpack.c.bf16 %v2926, %v2926
    %v2951 = vpack.c.bf16 %v2927, %v2927
    %2952 = vmatpush.bf16.msra.mxu0 %v2022
    %2953 = vmatpush.bf16.msra.mxu0 %v2014
    %2954 = vmatpush.bf16.msra.mxu0 %v2006
    %2955 = vmatpush.bf16.msra.mxu0 %v1998
    %2956 = vmatpush.bf16.msra.mxu0 %v1990
    %2957 = vmatpush.bf16.msra.mxu0 %v1982
    %2958 = vmatpush.bf16.msra.mxu0 %v1974
    %2959 = vmatpush.bf16.msra.mxu0 %v1966
    %2960 = vmatmul.bf16.gmra.mxu0 %v2950
    %v2961 = vpop.f32.mrf.mxu0
    %v2962 = vadd.f32 0.0, %v2961
    %v2963 = vpop.f32.mrf.mxu0
    %2964 = vdwg.mxu0
    %2965 = vmatpush.bf16.msra.mxu0 %v2086
    %2966 = vmatpush.bf16.msra.mxu0 %v2078
    %2967 = vmatpush.bf16.msra.mxu0 %v2070
    %2968 = vmatpush.bf16.msra.mxu0 %v2062
    %2969 = vmatpush.bf16.msra.mxu0 %v2054
    %2970 = vmatpush.bf16.msra.mxu0 %v2046
    %2971 = vmatpush.bf16.msra.mxu0 %v2038
    %2972 = vmatpush.bf16.msra.mxu0 %v2030
    %2973 = vmatmul.bf16.gmra.mxu0 %v2951
    %v2974 = vpop.f32.mrf.mxu0
    %v2975 = vadd.f32 %v2962, %v2974
    %v2976 = vpop.f32.mrf.mxu0
    %2977 = vdwg.mxu0
    %2978 = vmatpush.bf16.msra.mxu0 %v2023
    %2979 = vmatpush.bf16.msra.mxu0 %v2015
    %2980 = vmatpush.bf16.msra.mxu0 %v2007
    %2981 = vmatpush.bf16.msra.mxu0 %v1999
    %2982 = vmatpush.bf16.msra.mxu0 %v1991
    %2983 = vmatpush.bf16.msra.mxu0 %v1983
    %2984 = vmatpush.bf16.msra.mxu0 %v1975
    %2985 = vmatpush.bf16.msra.mxu0 %v1967
    %2986 = vmatmul.bf16.gmra.mxu0 %v2950
    %v2987 = vpop.f32.mrf.mxu0
    %v2988 = vadd.f32 0.0, %v2987
    %v2989 = vpop.f32.mrf.mxu0
    %2990 = vdwg.mxu0
    %2991 = vmatpush.bf16.msra.mxu0 %v2087
    %2992 = vmatpush.bf16.msra.mxu0 %v2079
    %2993 = vmatpush.bf16.msra.mxu0 %v2071
    %2994 = vmatpush.bf16.msra.mxu0 %v2063
    %2995 = vmatpush.bf16.msra.mxu0 %v2055
    %2996 = vmatpush.bf16.msra.mxu0 %v2047
    %2997 = vmatpush.bf16.msra.mxu0 %v2039
    %2998 = vmatpush.bf16.msra.mxu0 %v2031
    %2999 = vmatmul.bf16.gmra.mxu0 %v2951
    %v3000 = vpop.f32.mrf.mxu0
    %v3001 = vadd.f32 %v2988, %v3000
    %v3002 = vpop.f32.mrf.mxu0
    %3003 = vdwg.mxu0
    %3004 = vmatpush.bf16.msra.mxu0 %v2024
    %3005 = vmatpush.bf16.msra.mxu0 %v2016
    %3006 = vmatpush.bf16.msra.mxu0 %v2008
    %3007 = vmatpush.bf16.msra.mxu0 %v2000
    %3008 = vmatpush.bf16.msra.mxu0 %v1992
    %3009 = vmatpush.bf16.msra.mxu0 %v1984
    %3010 = vmatpush.bf16.msra.mxu0 %v1976
    %3011 = vmatpush.bf16.msra.mxu0 %v1968
    %3012 = vmatmul.bf16.gmra.mxu0 %v2950
    %v3013 = vpop.f32.mrf.mxu0
    %v3014 = vadd.f32 0.0, %v3013
    %v3015 = vpop.f32.mrf.mxu0
    %3016 = vdwg.mxu0
    %3017 = vmatpush.bf16.msra.mxu0 %v2088
    %3018 = vmatpush.bf16.msra.mxu0 %v2080
    %3019 = vmatpush.bf16.msra.mxu0 %v2072
    %3020 = vmatpush.bf16.msra.mxu0 %v2064
    %3021 = vmatpush.bf16.msra.mxu0 %v2056
    %3022 = vmatpush.bf16.msra.mxu0 %v2048
    %3023 = vmatpush.bf16.msra.mxu0 %v2040
    %3024 = vmatpush.bf16.msra.mxu0 %v2032
    %3025 = vmatmul.bf16.gmra.mxu0 %v2951
    %v3026 = vpop.f32.mrf.mxu0
    %v3027 = vadd.f32 %v3014, %v3026
    %v3028 = vpop.f32.mrf.mxu0
    %3029 = vdwg.mxu0
    %3030 = vmatpush.bf16.msra.mxu0 %v2025
    %3031 = vmatpush.bf16.msra.mxu0 %v2017
    %3032 = vmatpush.bf16.msra.mxu0 %v2009
    %3033 = vmatpush.bf16.msra.mxu0 %v2001
    %3034 = vmatpush.bf16.msra.mxu0 %v1993
    %3035 = vmatpush.bf16.msra.mxu0 %v1985
    %3036 = vmatpush.bf16.msra.mxu0 %v1977
    %3037 = vmatpush.bf16.msra.mxu0 %v1969
    %3038 = vmatmul.bf16.gmra.mxu0 %v2950
    %v3039 = vpop.f32.mrf.mxu0
    %v3040 = vadd.f32 0.0, %v3039
    %v3041 = vpop.f32.mrf.mxu0
    %3042 = vdwg.mxu0
    %3043 = vmatpush.bf16.msra.mxu0 %v2089
    %3044 = vmatpush.bf16.msra.mxu0 %v2081
    %3045 = vmatpush.bf16.msra.mxu0 %v2073
    %3046 = vmatpush.bf16.msra.mxu0 %v2065
    %3047 = vmatpush.bf16.msra.mxu0 %v2057
    %3048 = vmatpush.bf16.msra.mxu0 %v2049
    %3049 = vmatpush.bf16.msra.mxu0 %v2041
    %3050 = vmatpush.bf16.msra.mxu0 %v2033
    %3051 = vmatmul.bf16.gmra.mxu0 %v2951
    %v3052 = vpop.f32.mrf.mxu0
    %v3053 = vadd.f32 %v3040, %v3052
    %v3054 = vpop.f32.mrf.mxu0
    %3055 = vdwg.mxu0
    %3056 = vmatpush.bf16.msra.mxu0 %v2026
    %3057 = vmatpush.bf16.msra.mxu0 %v2018
    %3058 = vmatpush.bf16.msra.mxu0 %v2010
    %3059 = vmatpush.bf16.msra.mxu0 %v2002
    %3060 = vmatpush.bf16.msra.mxu0 %v1994
    %3061 = vmatpush.bf16.msra.mxu0 %v1986
    %3062 = vmatpush.bf16.msra.mxu0 %v1978
    %3063 = vmatpush.bf16.msra.mxu0 %v1970
    %3064 = vmatmul.bf16.gmra.mxu0 %v2950
    %v3065 = vpop.f32.mrf.mxu0
    %v3066 = vadd.f32 0.0, %v3065
    %v3067 = vpop.f32.mrf.mxu0
    %3068 = vdwg.mxu0
    %3069 = vmatpush.bf16.msra.mxu0 %v2090
    %3070 = vmatpush.bf16.msra.mxu0 %v2082
    %3071 = vmatpush.bf16.msra.mxu0 %v2074
    %3072 = vmatpush.bf16.msra.mxu0 %v2066
    %3073 = vmatpush.bf16.msra.mxu0 %v2058
    %3074 = vmatpush.bf16.msra.mxu0 %v2050
    %3075 = vmatpush.bf16.msra.mxu0 %v2042
    %3076 = vmatpush.bf16.msra.mxu0 %v2034
    %3077 = vmatmul.bf16.gmra.mxu0 %v2951
    %v3078 = vpop.f32.mrf.mxu0
    %v3079 = vadd.f32 %v3066, %v3078
    %v3080 = vpop.f32.mrf.mxu0
    %3081 = vdwg.mxu0
    %3082 = vmatpush.bf16.msra.mxu0 %v2027
    %3083 = vmatpush.bf16.msra.mxu0 %v2019
    %3084 = vmatpush.bf16.msra.mxu0 %v2011
    %3085 = vmatpush.bf16.msra.mxu0 %v2003
    %3086 = vmatpush.bf16.msra.mxu0 %v1995
    %3087 = vmatpush.bf16.msra.mxu0 %v1987
    %3088 = vmatpush.bf16.msra.mxu0 %v1979
    %3089 = vmatpush.bf16.msra.mxu0 %v1971
    %3090 = vmatmul.bf16.gmra.mxu0 %v2950
    %v3091 = vpop.f32.mrf.mxu0
    %v3092 = vadd.f32 0.0, %v3091
    %v3093 = vpop.f32.mrf.mxu0
    %3094 = vdwg.mxu0
    %3095 = vmatpush.bf16.msra.mxu0 %v2091
    %3096 = vmatpush.bf16.msra.mxu0 %v2083
    %3097 = vmatpush.bf16.msra.mxu0 %v2075
    %3098 = vmatpush.bf16.msra.mxu0 %v2067
    %3099 = vmatpush.bf16.msra.mxu0 %v2059
    %3100 = vmatpush.bf16.msra.mxu0 %v2051
    %3101 = vmatpush.bf16.msra.mxu0 %v2043
    %3102 = vmatpush.bf16.msra.mxu0 %v2035
    %3103 = vmatmul.bf16.gmra.mxu0 %v2951
    %v3104 = vpop.f32.mrf.mxu0
    %v3105 = vadd.f32 %v3092, %v3104
    %v3106 = vpop.f32.mrf.mxu0
    %3107 = vdwg.mxu0
    %3108 = vmatpush.bf16.msra.mxu0 %v2028
    %3109 = vmatpush.bf16.msra.mxu0 %v2020
    %3110 = vmatpush.bf16.msra.mxu0 %v2012
    %3111 = vmatpush.bf16.msra.mxu0 %v2004
    %3112 = vmatpush.bf16.msra.mxu0 %v1996
    %3113 = vmatpush.bf16.msra.mxu0 %v1988
    %3114 = vmatpush.bf16.msra.mxu0 %v1980
    %3115 = vmatpush.bf16.msra.mxu0 %v1972
    %3116 = vmatmul.bf16.gmra.mxu0 %v2950
    %v3117 = vpop.f32.mrf.mxu0
    %v3118 = vadd.f32 0.0, %v3117
    %v3119 = vpop.f32.mrf.mxu0
    %3120 = vdwg.mxu0
    %3121 = vmatpush.bf16.msra.mxu0 %v2092
    %3122 = vmatpush.bf16.msra.mxu0 %v2084
    %3123 = vmatpush.bf16.msra.mxu0 %v2076
    %3124 = vmatpush.bf16.msra.mxu0 %v2068
    %3125 = vmatpush.bf16.msra.mxu0 %v2060
    %3126 = vmatpush.bf16.msra.mxu0 %v2052
    %3127 = vmatpush.bf16.msra.mxu0 %v2044
    %3128 = vmatpush.bf16.msra.mxu0 %v2036
    %3129 = vmatmul.bf16.gmra.mxu0 %v2951
    %v3130 = vpop.f32.mrf.mxu0
    %v3131 = vadd.f32 %v3118, %v3130
    %v3132 = vpop.f32.mrf.mxu0
    %3133 = vdwg.mxu0
    %3134 = vmatpush.bf16.msra.mxu0 %v2029
    %3135 = vmatpush.bf16.msra.mxu0 %v2021
    %3136 = vmatpush.bf16.msra.mxu0 %v2013
    %3137 = vmatpush.bf16.msra.mxu0 %v2005
    %3138 = vmatpush.bf16.msra.mxu0 %v1997
    %3139 = vmatpush.bf16.msra.mxu0 %v1989
    %3140 = vmatpush.bf16.msra.mxu0 %v1981
    %3141 = vmatpush.bf16.msra.mxu0 %v1973
    %3142 = vmatmul.bf16.gmra.mxu0 %v2950
    %v3143 = vpop.f32.mrf.mxu0
    %v3144 = vadd.f32 0.0, %v3143
    %v3145 = vpop.f32.mrf.mxu0
    %3146 = vdwg.mxu0
    %3147 = vmatpush.bf16.msra.mxu0 %v2093
    %3148 = vmatpush.bf16.msra.mxu0 %v2085
    %3149 = vmatpush.bf16.msra.mxu0 %v2077
    %3150 = vmatpush.bf16.msra.mxu0 %v2069
    %3151 = vmatpush.bf16.msra.mxu0 %v2061
    %3152 = vmatpush.bf16.msra.mxu0 %v2053
    %3153 = vmatpush.bf16.msra.mxu0 %v2045
    %3154 = vmatpush.bf16.msra.mxu0 %v2037
    %3155 = vmatmul.bf16.gmra.mxu0 %v2951
    %v3156 = vpop.f32.mrf.mxu0
    %v3157 = vadd.f32 %v3144, %v3156
    %v3158 = vpop.f32.mrf.mxu0
    %3159 = vdwg.mxu0
    %v3160 = vadd.f32 %v2942, %v2975
    %v3161 = vadd.f32 %v2943, %v3001
    %v3162 = vadd.f32 %v2944, %v3027
    %v3163 = vadd.f32 %v2945, %v3053
    %v3164 = vadd.f32 %v2946, %v3079
    %v3165 = vadd.f32 %v2947, %v3105
    %v3166 = vadd.f32 %v2948, %v3131
    %v3167 = vadd.f32 %v2949, %v3157
    %v3168 = vxor.u32 %v3160, 2147483648
    %v3169 = vxor.u32 %v3161, 2147483648
    %v3170 = vmul.f32 %v3168, 1.442695
    %v3171 = vpow.pop %v3170
    %v3172 = vmul.f32 %v3169, 1.442695
    %v3173 = vpow.pop %v3172
    %v3174 = vadd.f32 %v3171, 1.0
    %v3175 = vadd.f32 %v3173, 1.0
    %v3176 = vrcp.pop %v3174
    %v3177 = vmul.f32 %v3174, %v3176
    %v3178 = vsub.f32 1.0, %v3177
    %v3179 = vmul.f32 %v3176, %v3178
    %v3180 = vadd.f32 %v3176, %v3179
    %vm3181 = vweird.f32 %v3174
    %vm3182 = vweird.f32 %v3176
    %vm3183 = vmor %vm3181, %vm3182
    %v3184 = vsel %vm3183, %v3176, %v3180
    %v3185 = vand.u32 2147483647, %v3174
    %vm3186 = vcmp.eq.f32.partialorder %v3185, 8.507059e+37
    %v3187 = vand.u32 %v3174, 2147483648
    %v3188 = vor.u32 1.1754944e-38, %v3187
    %v3189 = vsel %vm3186, %v3188, %v3184
    %v3190 = vmul.f32 1.0, %v3189
    %v3191 = vrcp.pop %v3175
    %v3192 = vmul.f32 %v3175, %v3191
    %v3193 = vsub.f32 1.0, %v3192
    %v3194 = vmul.f32 %v3191, %v3193
    %v3195 = vadd.f32 %v3191, %v3194
    %vm3196 = vweird.f32 %v3175
    %vm3197 = vweird.f32 %v3191
    %vm3198 = vmor %vm3196, %vm3197
    %v3199 = vsel %vm3198, %v3191, %v3195
    %v3200 = vand.u32 2147483647, %v3175
    %vm3201 = vcmp.eq.f32.partialorder %v3200, 8.507059e+37
    %v3202 = vand.u32 %v3175, 2147483648
    %v3203 = vor.u32 1.1754944e-38, %v3202
    %v3204 = vsel %vm3201, %v3203, %v3199
    %v3205 = vmul.f32 1.0, %v3204
    %v3206 = vxor.u32 %v3162, 2147483648
    %v3207 = vxor.u32 %v3163, 2147483648
    %v3208 = vmul.f32 %v3206, 1.442695
    %v3209 = vpow.pop %v3208
    %v3210 = vmul.f32 %v3207, 1.442695
    %v3211 = vpow.pop %v3210
    %v3212 = vadd.f32 %v3209, 1.0
    %v3213 = vadd.f32 %v3211, 1.0
    %v3214 = vrcp.pop %v3212
    %v3215 = vmul.f32 %v3212, %v3214
    %v3216 = vsub.f32 1.0, %v3215
    %v3217 = vmul.f32 %v3214, %v3216
    %v3218 = vadd.f32 %v3214, %v3217
    %vm3219 = vweird.f32 %v3212
    %vm3220 = vweird.f32 %v3214
    %vm3221 = vmor %vm3219, %vm3220
    %v3222 = vsel %vm3221, %v3214, %v3218
    %v3223 = vand.u32 2147483647, %v3212
    %vm3224 = vcmp.eq.f32.partialorder %v3223, 8.507059e+37
    %v3225 = vand.u32 %v3212, 2147483648
    %v3226 = vor.u32 1.1754944e-38, %v3225
    %v3227 = vsel %vm3224, %v3226, %v3222
    %v3228 = vmul.f32 1.0, %v3227
    %v3229 = vrcp.pop %v3213
    %v3230 = vmul.f32 %v3213, %v3229
    %v3231 = vsub.f32 1.0, %v3230
    %v3232 = vmul.f32 %v3229, %v3231
    %v3233 = vadd.f32 %v3229, %v3232
    %vm3234 = vweird.f32 %v3213
    %vm3235 = vweird.f32 %v3229
    %vm3236 = vmor %vm3234, %vm3235
    %v3237 = vsel %vm3236, %v3229, %v3233
    %v3238 = vand.u32 2147483647, %v3213
    %vm3239 = vcmp.eq.f32.partialorder %v3238, 8.507059e+37
    %v3240 = vand.u32 %v3213, 2147483648
    %v3241 = vor.u32 1.1754944e-38, %v3240
    %v3242 = vsel %vm3239, %v3241, %v3237
    %v3243 = vmul.f32 1.0, %v3242
    %v3244 = vtanh.pop %v3164
    %v3245 = vtanh.pop %v3165
    %v3246 = vxor.u32 %v3166, 2147483648
    %v3247 = vxor.u32 %v3167, 2147483648
    %v3248 = vmul.f32 %v3246, 1.442695
    %v3249 = vpow.pop %v3248
    %v3250 = vmul.f32 %v3247, 1.442695
    %v3251 = vpow.pop %v3250
    %v3252 = vadd.f32 %v3249, 1.0
    %v3253 = vadd.f32 %v3251, 1.0
    %v3254 = vrcp.pop %v3252
    %v3255 = vmul.f32 %v3252, %v3254
    %v3256 = vsub.f32 1.0, %v3255
    %v3257 = vmul.f32 %v3254, %v3256
    %v3258 = vadd.f32 %v3254, %v3257
    %vm3259 = vweird.f32 %v3252
    %vm3260 = vweird.f32 %v3254
    %vm3261 = vmor %vm3259, %vm3260
    %v3262 = vsel %vm3261, %v3254, %v3258
    %v3263 = vand.u32 2147483647, %v3252
    %vm3264 = vcmp.eq.f32.partialorder %v3263, 8.507059e+37
    %v3265 = vand.u32 %v3252, 2147483648
    %v3266 = vor.u32 1.1754944e-38, %v3265
    %v3267 = vsel %vm3264, %v3266, %v3262
    %v3268 = vmul.f32 1.0, %v3267
    %v3269 = vrcp.pop %v3253
    %v3270 = vmul.f32 %v3253, %v3269
    %v3271 = vsub.f32 1.0, %v3270
    %v3272 = vmul.f32 %v3269, %v3271
    %v3273 = vadd.f32 %v3269, %v3272
    %vm3274 = vweird.f32 %v3253
    %vm3275 = vweird.f32 %v3269
    %vm3276 = vmor %vm3274, %vm3275
    %v3277 = vsel %vm3276, %v3269, %v3273
    %v3278 = vand.u32 2147483647, %v3253
    %vm3279 = vcmp.eq.f32.partialorder %v3278, 8.507059e+37
    %v3280 = vand.u32 %v3253, 2147483648
    %v3281 = vor.u32 1.1754944e-38, %v3280
    %v3282 = vsel %vm3279, %v3281, %v3277
    %v3283 = vmul.f32 1.0, %v3282
    %v3284 = vmul.f32 %v3228, %v2922
    %v3285 = vmul.f32 %v3243, %v2923
    %v3286 = vmul.f32 %v3190, %v3244
    %v3287 = vmul.f32 %v3205, %v3245
    %v3288 = vadd.f32 %v3284, %v3286
    %v3289 = vadd.f32 %v3285, %v3287
    %v3290 = vtanh.pop %v3288
    %v3291 = vtanh.pop %v3289
    %v3292 = vmul.f32 %v3268, %v3290
    %v3293 = vmul.f32 %v3283, %v3291
    %s3294 = sadd.s32 %s1567, 2
    %v3295 = vstv %s3294
    %vm3296 = vcmp.lt.s32.totalorder %v3295, %v1566
    %v3297 = vsel %vm3296, 1, 0
    %3298 = vset.pattern.permute.xlu0 0
    %3299 = vperm.xlu0 %3298, %v3297
    %v3300 = vpop.permute.xlu0 %3299
    %vm3301 = vcmp.eq.s32.totalorder %v3300, 1
    %v3302 = vsel %vm3301, %v3292, 0.0
    %v3303 = vsel %vm3301, %v3293, 0.0
    %v3304 = vpack.c.bf16 %v3303, %v3302
    %s3305 = scalar_lea.vmem [#allocation11], 16
    %3306 = vst [vmem:[%s3305] sm:$0xff] %v3304
    %s3307 = scalar_lea.vmem [#allocation2], 192
    %v3308 = vld [vmem:[%s3307] sm:$0xff]
    %v3309 = vld [vmem:[%s3307 + $0x8] sm:$0xff]
    %v3310 = vld [vmem:[%s3307 + $0x10] sm:$0xff]
    %v3311 = vld [vmem:[%s3307 + $0x18] sm:$0xff]
    %v3312 = vld [vmem:[%s3307 + $0x20] sm:$0xff]
    %v3313 = vld [vmem:[%s3307 + $0x28] sm:$0xff]
    %v3314 = vld [vmem:[%s3307 + $0x30] sm:$0xff]
    %v3315 = vld [vmem:[%s3307 + $0x38] sm:$0xff]
    %v3316 = vpack.c.bf16 %v3292, %v3292
    %v3317 = vpack.c.bf16 %v3293, %v3293
    %3318 = vmatpush.bf16.msra.mxu0 %v2022
    %3319 = vmatpush.bf16.msra.mxu0 %v2014
    %3320 = vmatpush.bf16.msra.mxu0 %v2006
    %3321 = vmatpush.bf16.msra.mxu0 %v1998
    %3322 = vmatpush.bf16.msra.mxu0 %v1990
    %3323 = vmatpush.bf16.msra.mxu0 %v1982
    %3324 = vmatpush.bf16.msra.mxu0 %v1974
    %3325 = vmatpush.bf16.msra.mxu0 %v1966
    %3326 = vmatmul.bf16.gmra.mxu0 %v3316
    %v3327 = vpop.f32.mrf.mxu0
    %v3328 = vadd.f32 0.0, %v3327
    %v3329 = vpop.f32.mrf.mxu0
    %3330 = vdwg.mxu0
    %3331 = vmatpush.bf16.msra.mxu0 %v2086
    %3332 = vmatpush.bf16.msra.mxu0 %v2078
    %3333 = vmatpush.bf16.msra.mxu0 %v2070
    %3334 = vmatpush.bf16.msra.mxu0 %v2062
    %3335 = vmatpush.bf16.msra.mxu0 %v2054
    %3336 = vmatpush.bf16.msra.mxu0 %v2046
    %3337 = vmatpush.bf16.msra.mxu0 %v2038
    %3338 = vmatpush.bf16.msra.mxu0 %v2030
    %3339 = vmatmul.bf16.gmra.mxu0 %v3317
    %v3340 = vpop.f32.mrf.mxu0
    %v3341 = vadd.f32 %v3328, %v3340
    %v3342 = vpop.f32.mrf.mxu0
    %3343 = vdwg.mxu0
    %3344 = vmatpush.bf16.msra.mxu0 %v2023
    %3345 = vmatpush.bf16.msra.mxu0 %v2015
    %3346 = vmatpush.bf16.msra.mxu0 %v2007
    %3347 = vmatpush.bf16.msra.mxu0 %v1999
    %3348 = vmatpush.bf16.msra.mxu0 %v1991
    %3349 = vmatpush.bf16.msra.mxu0 %v1983
    %3350 = vmatpush.bf16.msra.mxu0 %v1975
    %3351 = vmatpush.bf16.msra.mxu0 %v1967
    %3352 = vmatmul.bf16.gmra.mxu0 %v3316
    %v3353 = vpop.f32.mrf.mxu0
    %v3354 = vadd.f32 0.0, %v3353
    %v3355 = vpop.f32.mrf.mxu0
    %3356 = vdwg.mxu0
    %3357 = vmatpush.bf16.msra.mxu0 %v2087
    %3358 = vmatpush.bf16.msra.mxu0 %v2079
    %3359 = vmatpush.bf16.msra.mxu0 %v2071
    %3360 = vmatpush.bf16.msra.mxu0 %v2063
    %3361 = vmatpush.bf16.msra.mxu0 %v2055
    %3362 = vmatpush.bf16.msra.mxu0 %v2047
    %3363 = vmatpush.bf16.msra.mxu0 %v2039
    %3364 = vmatpush.bf16.msra.mxu0 %v2031
    %3365 = vmatmul.bf16.gmra.mxu0 %v3317
    %v3366 = vpop.f32.mrf.mxu0
    %v3367 = vadd.f32 %v3354, %v3366
    %v3368 = vpop.f32.mrf.mxu0
    %3369 = vdwg.mxu0
    %3370 = vmatpush.bf16.msra.mxu0 %v2024
    %3371 = vmatpush.bf16.msra.mxu0 %v2016
    %3372 = vmatpush.bf16.msra.mxu0 %v2008
    %3373 = vmatpush.bf16.msra.mxu0 %v2000
    %3374 = vmatpush.bf16.msra.mxu0 %v1992
    %3375 = vmatpush.bf16.msra.mxu0 %v1984
    %3376 = vmatpush.bf16.msra.mxu0 %v1976
    %3377 = vmatpush.bf16.msra.mxu0 %v1968
    %3378 = vmatmul.bf16.gmra.mxu0 %v3316
    %v3379 = vpop.f32.mrf.mxu0
    %v3380 = vadd.f32 0.0, %v3379
    %v3381 = vpop.f32.mrf.mxu0
    %3382 = vdwg.mxu0
    %3383 = vmatpush.bf16.msra.mxu0 %v2088
    %3384 = vmatpush.bf16.msra.mxu0 %v2080
    %3385 = vmatpush.bf16.msra.mxu0 %v2072
    %3386 = vmatpush.bf16.msra.mxu0 %v2064
    %3387 = vmatpush.bf16.msra.mxu0 %v2056
    %3388 = vmatpush.bf16.msra.mxu0 %v2048
    %3389 = vmatpush.bf16.msra.mxu0 %v2040
    %3390 = vmatpush.bf16.msra.mxu0 %v2032
    %3391 = vmatmul.bf16.gmra.mxu0 %v3317
    %v3392 = vpop.f32.mrf.mxu0
    %v3393 = vadd.f32 %v3380, %v3392
    %v3394 = vpop.f32.mrf.mxu0
    %3395 = vdwg.mxu0
    %3396 = vmatpush.bf16.msra.mxu0 %v2025
    %3397 = vmatpush.bf16.msra.mxu0 %v2017
    %3398 = vmatpush.bf16.msra.mxu0 %v2009
    %3399 = vmatpush.bf16.msra.mxu0 %v2001
    %3400 = vmatpush.bf16.msra.mxu0 %v1993
    %3401 = vmatpush.bf16.msra.mxu0 %v1985
    %3402 = vmatpush.bf16.msra.mxu0 %v1977
    %3403 = vmatpush.bf16.msra.mxu0 %v1969
    %3404 = vmatmul.bf16.gmra.mxu0 %v3316
    %v3405 = vpop.f32.mrf.mxu0
    %v3406 = vadd.f32 0.0, %v3405
    %v3407 = vpop.f32.mrf.mxu0
    %3408 = vdwg.mxu0
    %3409 = vmatpush.bf16.msra.mxu0 %v2089
    %3410 = vmatpush.bf16.msra.mxu0 %v2081
    %3411 = vmatpush.bf16.msra.mxu0 %v2073
    %3412 = vmatpush.bf16.msra.mxu0 %v2065
    %3413 = vmatpush.bf16.msra.mxu0 %v2057
    %3414 = vmatpush.bf16.msra.mxu0 %v2049
    %3415 = vmatpush.bf16.msra.mxu0 %v2041
    %3416 = vmatpush.bf16.msra.mxu0 %v2033
    %3417 = vmatmul.bf16.gmra.mxu0 %v3317
    %v3418 = vpop.f32.mrf.mxu0
    %v3419 = vadd.f32 %v3406, %v3418
    %v3420 = vpop.f32.mrf.mxu0
    %3421 = vdwg.mxu0
    %3422 = vmatpush.bf16.msra.mxu0 %v2026
    %3423 = vmatpush.bf16.msra.mxu0 %v2018
    %3424 = vmatpush.bf16.msra.mxu0 %v2010
    %3425 = vmatpush.bf16.msra.mxu0 %v2002
    %3426 = vmatpush.bf16.msra.mxu0 %v1994
    %3427 = vmatpush.bf16.msra.mxu0 %v1986
    %3428 = vmatpush.bf16.msra.mxu0 %v1978
    %3429 = vmatpush.bf16.msra.mxu0 %v1970
    %3430 = vmatmul.bf16.gmra.mxu0 %v3316
    %v3431 = vpop.f32.mrf.mxu0
    %v3432 = vadd.f32 0.0, %v3431
    %v3433 = vpop.f32.mrf.mxu0
    %3434 = vdwg.mxu0
    %3435 = vmatpush.bf16.msra.mxu0 %v2090
    %3436 = vmatpush.bf16.msra.mxu0 %v2082
    %3437 = vmatpush.bf16.msra.mxu0 %v2074
    %3438 = vmatpush.bf16.msra.mxu0 %v2066
    %3439 = vmatpush.bf16.msra.mxu0 %v2058
    %3440 = vmatpush.bf16.msra.mxu0 %v2050
    %3441 = vmatpush.bf16.msra.mxu0 %v2042
    %3442 = vmatpush.bf16.msra.mxu0 %v2034
    %3443 = vmatmul.bf16.gmra.mxu0 %v3317
    %v3444 = vpop.f32.mrf.mxu0
    %v3445 = vadd.f32 %v3432, %v3444
    %v3446 = vpop.f32.mrf.mxu0
    %3447 = vdwg.mxu0
    %3448 = vmatpush.bf16.msra.mxu0 %v2027
    %3449 = vmatpush.bf16.msra.mxu0 %v2019
    %3450 = vmatpush.bf16.msra.mxu0 %v2011
    %3451 = vmatpush.bf16.msra.mxu0 %v2003
    %3452 = vmatpush.bf16.msra.mxu0 %v1995
    %3453 = vmatpush.bf16.msra.mxu0 %v1987
    %3454 = vmatpush.bf16.msra.mxu0 %v1979
    %3455 = vmatpush.bf16.msra.mxu0 %v1971
    %3456 = vmatmul.bf16.gmra.mxu0 %v3316
    %v3457 = vpop.f32.mrf.mxu0
    %v3458 = vadd.f32 0.0, %v3457
    %v3459 = vpop.f32.mrf.mxu0
    %3460 = vdwg.mxu0
    %3461 = vmatpush.bf16.msra.mxu0 %v2091
    %3462 = vmatpush.bf16.msra.mxu0 %v2083
    %3463 = vmatpush.bf16.msra.mxu0 %v2075
    %3464 = vmatpush.bf16.msra.mxu0 %v2067
    %3465 = vmatpush.bf16.msra.mxu0 %v2059
    %3466 = vmatpush.bf16.msra.mxu0 %v2051
    %3467 = vmatpush.bf16.msra.mxu0 %v2043
    %3468 = vmatpush.bf16.msra.mxu0 %v2035
    %3469 = vmatmul.bf16.gmra.mxu0 %v3317
    %v3470 = vpop.f32.mrf.mxu0
    %v3471 = vadd.f32 %v3458, %v3470
    %v3472 = vpop.f32.mrf.mxu0
    %3473 = vdwg.mxu0
    %3474 = vmatpush.bf16.msra.mxu0 %v2028
    %3475 = vmatpush.bf16.msra.mxu0 %v2020
    %3476 = vmatpush.bf16.msra.mxu0 %v2012
    %3477 = vmatpush.bf16.msra.mxu0 %v2004
    %3478 = vmatpush.bf16.msra.mxu0 %v1996
    %3479 = vmatpush.bf16.msra.mxu0 %v1988
    %3480 = vmatpush.bf16.msra.mxu0 %v1980
    %3481 = vmatpush.bf16.msra.mxu0 %v1972
    %3482 = vmatmul.bf16.gmra.mxu0 %v3316
    %v3483 = vpop.f32.mrf.mxu0
    %v3484 = vadd.f32 0.0, %v3483
    %v3485 = vpop.f32.mrf.mxu0
    %3486 = vdwg.mxu0
    %3487 = vmatpush.bf16.msra.mxu0 %v2092
    %3488 = vmatpush.bf16.msra.mxu0 %v2084
    %3489 = vmatpush.bf16.msra.mxu0 %v2076
    %3490 = vmatpush.bf16.msra.mxu0 %v2068
    %3491 = vmatpush.bf16.msra.mxu0 %v2060
    %3492 = vmatpush.bf16.msra.mxu0 %v2052
    %3493 = vmatpush.bf16.msra.mxu0 %v2044
    %3494 = vmatpush.bf16.msra.mxu0 %v2036
    %3495 = vmatmul.bf16.gmra.mxu0 %v3317
    %v3496 = vpop.f32.mrf.mxu0
    %v3497 = vadd.f32 %v3484, %v3496
    %v3498 = vpop.f32.mrf.mxu0
    %3499 = vdwg.mxu0
    %3500 = vmatpush.bf16.msra.mxu0 %v2029
    %3501 = vmatpush.bf16.msra.mxu0 %v2021
    %3502 = vmatpush.bf16.msra.mxu0 %v2013
    %3503 = vmatpush.bf16.msra.mxu0 %v2005
    %3504 = vmatpush.bf16.msra.mxu0 %v1997
    %3505 = vmatpush.bf16.msra.mxu0 %v1989
    %3506 = vmatpush.bf16.msra.mxu0 %v1981
    %3507 = vmatpush.bf16.msra.mxu0 %v1973
    %3508 = vmatmul.bf16.gmra.mxu0 %v3316
    %v3509 = vpop.f32.mrf.mxu0
    %v3510 = vadd.f32 0.0, %v3509
    %v3511 = vpop.f32.mrf.mxu0
    %3512 = vdwg.mxu0
    %3513 = vmatpush.bf16.msra.mxu0 %v2093
    %3514 = vmatpush.bf16.msra.mxu0 %v2085
    %3515 = vmatpush.bf16.msra.mxu0 %v2077
    %3516 = vmatpush.bf16.msra.mxu0 %v2069
    %3517 = vmatpush.bf16.msra.mxu0 %v2061
    %3518 = vmatpush.bf16.msra.mxu0 %v2053
    %3519 = vmatpush.bf16.msra.mxu0 %v2045
    %3520 = vmatpush.bf16.msra.mxu0 %v2037
    %3521 = vmatmul.bf16.gmra.mxu0 %v3317
    %v3522 = vpop.f32.mrf.mxu0
    %v3523 = vadd.f32 %v3510, %v3522
    %v3524 = vpop.f32.mrf.mxu0
    %3525 = vdwg.mxu0
    %v3526 = vadd.f32 %v3308, %v3341
    %v3527 = vadd.f32 %v3309, %v3367
    %v3528 = vadd.f32 %v3310, %v3393
    %v3529 = vadd.f32 %v3311, %v3419
    %v3530 = vadd.f32 %v3312, %v3445
    %v3531 = vadd.f32 %v3313, %v3471
    %v3532 = vadd.f32 %v3314, %v3497
    %v3533 = vadd.f32 %v3315, %v3523
    %v3534 = vxor.u32 %v3526, 2147483648
    %v3535 = vxor.u32 %v3527, 2147483648
    %v3536 = vmul.f32 %v3534, 1.442695
    %v3537 = vpow.pop %v3536
    %v3538 = vmul.f32 %v3535, 1.442695
    %v3539 = vpow.pop %v3538
    %v3540 = vadd.f32 %v3537, 1.0
    %v3541 = vadd.f32 %v3539, 1.0
    %v3542 = vrcp.pop %v3540
    %v3543 = vmul.f32 %v3540, %v3542
    %v3544 = vsub.f32 1.0, %v3543
    %v3545 = vmul.f32 %v3542, %v3544
    %v3546 = vadd.f32 %v3542, %v3545
    %vm3547 = vweird.f32 %v3540
    %vm3548 = vweird.f32 %v3542
    %vm3549 = vmor %vm3547, %vm3548
    %v3550 = vsel %vm3549, %v3542, %v3546
    %v3551 = vand.u32 2147483647, %v3540
    %vm3552 = vcmp.eq.f32.partialorder %v3551, 8.507059e+37
    %v3553 = vand.u32 %v3540, 2147483648
    %v3554 = vor.u32 1.1754944e-38, %v3553
    %v3555 = vsel %vm3552, %v3554, %v3550
    %v3556 = vmul.f32 1.0, %v3555
    %v3557 = vrcp.pop %v3541
    %v3558 = vmul.f32 %v3541, %v3557
    %v3559 = vsub.f32 1.0, %v3558
    %v3560 = vmul.f32 %v3557, %v3559
    %v3561 = vadd.f32 %v3557, %v3560
    %vm3562 = vweird.f32 %v3541
    %vm3563 = vweird.f32 %v3557
    %vm3564 = vmor %vm3562, %vm3563
    %v3565 = vsel %vm3564, %v3557, %v3561
    %v3566 = vand.u32 2147483647, %v3541
    %vm3567 = vcmp.eq.f32.partialorder %v3566, 8.507059e+37
    %v3568 = vand.u32 %v3541, 2147483648
    %v3569 = vor.u32 1.1754944e-38, %v3568
    %v3570 = vsel %vm3567, %v3569, %v3565
    %v3571 = vmul.f32 1.0, %v3570
    %v3572 = vxor.u32 %v3528, 2147483648
    %v3573 = vxor.u32 %v3529, 2147483648
    %v3574 = vmul.f32 %v3572, 1.442695
    %v3575 = vpow.pop %v3574
    %v3576 = vmul.f32 %v3573, 1.442695
    %v3577 = vpow.pop %v3576
    %v3578 = vadd.f32 %v3575, 1.0
    %v3579 = vadd.f32 %v3577, 1.0
    %v3580 = vrcp.pop %v3578
    %v3581 = vmul.f32 %v3578, %v3580
    %v3582 = vsub.f32 1.0, %v3581
    %v3583 = vmul.f32 %v3580, %v3582
    %v3584 = vadd.f32 %v3580, %v3583
    %vm3585 = vweird.f32 %v3578
    %vm3586 = vweird.f32 %v3580
    %vm3587 = vmor %vm3585, %vm3586
    %v3588 = vsel %vm3587, %v3580, %v3584
    %v3589 = vand.u32 2147483647, %v3578
    %vm3590 = vcmp.eq.f32.partialorder %v3589, 8.507059e+37
    %v3591 = vand.u32 %v3578, 2147483648
    %v3592 = vor.u32 1.1754944e-38, %v3591
    %v3593 = vsel %vm3590, %v3592, %v3588
    %v3594 = vmul.f32 1.0, %v3593
    %v3595 = vrcp.pop %v3579
    %v3596 = vmul.f32 %v3579, %v3595
    %v3597 = vsub.f32 1.0, %v3596
    %v3598 = vmul.f32 %v3595, %v3597
    %v3599 = vadd.f32 %v3595, %v3598
    %vm3600 = vweird.f32 %v3579
    %vm3601 = vweird.f32 %v3595
    %vm3602 = vmor %vm3600, %vm3601
    %v3603 = vsel %vm3602, %v3595, %v3599
    %v3604 = vand.u32 2147483647, %v3579
    %vm3605 = vcmp.eq.f32.partialorder %v3604, 8.507059e+37
    %v3606 = vand.u32 %v3579, 2147483648
    %v3607 = vor.u32 1.1754944e-38, %v3606
    %v3608 = vsel %vm3605, %v3607, %v3603
    %v3609 = vmul.f32 1.0, %v3608
    %v3610 = vtanh.pop %v3530
    %v3611 = vtanh.pop %v3531
    %v3612 = vxor.u32 %v3532, 2147483648
    %v3613 = vxor.u32 %v3533, 2147483648
    %v3614 = vmul.f32 %v3612, 1.442695
    %v3615 = vpow.pop %v3614
    %v3616 = vmul.f32 %v3613, 1.442695
    %v3617 = vpow.pop %v3616
    %v3618 = vadd.f32 %v3615, 1.0
    %v3619 = vadd.f32 %v3617, 1.0
    %v3620 = vrcp.pop %v3618
    %v3621 = vmul.f32 %v3618, %v3620
    %v3622 = vsub.f32 1.0, %v3621
    %v3623 = vmul.f32 %v3620, %v3622
    %v3624 = vadd.f32 %v3620, %v3623
    %vm3625 = vweird.f32 %v3618
    %vm3626 = vweird.f32 %v3620
    %vm3627 = vmor %vm3625, %vm3626
    %v3628 = vsel %vm3627, %v3620, %v3624
    %v3629 = vand.u32 2147483647, %v3618
    %vm3630 = vcmp.eq.f32.partialorder %v3629, 8.507059e+37
    %v3631 = vand.u32 %v3618, 2147483648
    %v3632 = vor.u32 1.1754944e-38, %v3631
    %v3633 = vsel %vm3630, %v3632, %v3628
    %v3634 = vmul.f32 1.0, %v3633
    %v3635 = vrcp.pop %v3619
    %v3636 = vmul.f32 %v3619, %v3635
    %v3637 = vsub.f32 1.0, %v3636
    %v3638 = vmul.f32 %v3635, %v3637
    %v3639 = vadd.f32 %v3635, %v3638
    %vm3640 = vweird.f32 %v3619
    %vm3641 = vweird.f32 %v3635
    %vm3642 = vmor %vm3640, %vm3641
    %v3643 = vsel %vm3642, %v3635, %v3639
    %v3644 = vand.u32 2147483647, %v3619
    %vm3645 = vcmp.eq.f32.partialorder %v3644, 8.507059e+37
    %v3646 = vand.u32 %v3619, 2147483648
    %v3647 = vor.u32 1.1754944e-38, %v3646
    %v3648 = vsel %vm3645, %v3647, %v3643
    %v3649 = vmul.f32 1.0, %v3648
    %v3650 = vmul.f32 %v3594, %v3288
    %v3651 = vmul.f32 %v3609, %v3289
    %v3652 = vmul.f32 %v3556, %v3610
    %v3653 = vmul.f32 %v3571, %v3611
    %v3654 = vadd.f32 %v3650, %v3652
    %v3655 = vadd.f32 %v3651, %v3653
    %v3656 = vtanh.pop %v3654
    %v3657 = vtanh.pop %v3655
    %v3658 = vmul.f32 %v3634, %v3656
    %v3659 = vmul.f32 %v3649, %v3657
    %s3660 = sadd.s32 %s1567, 3
    %v3661 = vstv %s3660
    %vm3662 = vcmp.lt.s32.totalorder %v3661, %v1566
    %v3663 = vsel %vm3662, 1, 0
    %3664 = vset.pattern.permute.xlu0 0
    %3665 = vperm.xlu0 %3664, %v3663
    %v3666 = vpop.permute.xlu0 %3665
    %vm3667 = vcmp.eq.s32.totalorder %v3666, 1
    %v3668 = vsel %vm3667, %v3658, 0.0
    %v3669 = vsel %vm3667, %v3659, 0.0
    %v3670 = vpack.c.bf16 %v3669, %v3668
    %s3671 = scalar_lea.vmem [#allocation11], 24
    %3672 = vst [vmem:[%s3671] sm:$0xff] %v3670
    %s3673 = scalar_lea.vmem [#allocation2], 256
    %v3674 = vld [vmem:[%s3673] sm:$0xff]
    %v3675 = vld [vmem:[%s3673 + $0x8] sm:$0xff]
    %v3676 = vld [vmem:[%s3673 + $0x10] sm:$0xff]
    %v3677 = vld [vmem:[%s3673 + $0x18] sm:$0xff]
    %v3678 = vld [vmem:[%s3673 + $0x20] sm:$0xff]
    %v3679 = vld [vmem:[%s3673 + $0x28] sm:$0xff]
    %v3680 = vld [vmem:[%s3673 + $0x30] sm:$0xff]
    %v3681 = vld [vmem:[%s3673 + $0x38] sm:$0xff]
    %v3682 = vpack.c.bf16 %v3658, %v3658
    %v3683 = vpack.c.bf16 %v3659, %v3659
    %3684 = vmatpush.bf16.msra.mxu0 %v2022
    %3685 = vmatpush.bf16.msra.mxu0 %v2014
    %3686 = vmatpush.bf16.msra.mxu0 %v2006
    %3687 = vmatpush.bf16.msra.mxu0 %v1998
    %3688 = vmatpush.bf16.msra.mxu0 %v1990
    %3689 = vmatpush.bf16.msra.mxu0 %v1982
    %3690 = vmatpush.bf16.msra.mxu0 %v1974
    %3691 = vmatpush.bf16.msra.mxu0 %v1966
    %3692 = vmatmul.bf16.gmra.mxu0 %v3682
    %v3693 = vpop.f32.mrf.mxu0
    %v3694 = vadd.f32 0.0, %v3693
    %v3695 = vpop.f32.mrf.mxu0
    %3696 = vdwg.mxu0
    %3697 = vmatpush.bf16.msra.mxu0 %v2086
    %3698 = vmatpush.bf16.msra.mxu0 %v2078
    %3699 = vmatpush.bf16.msra.mxu0 %v2070
    %3700 = vmatpush.bf16.msra.mxu0 %v2062
    %3701 = vmatpush.bf16.msra.mxu0 %v2054
    %3702 = vmatpush.bf16.msra.mxu0 %v2046
    %3703 = vmatpush.bf16.msra.mxu0 %v2038
    %3704 = vmatpush.bf16.msra.mxu0 %v2030
    %3705 = vmatmul.bf16.gmra.mxu0 %v3683
    %v3706 = vpop.f32.mrf.mxu0
    %v3707 = vadd.f32 %v3694, %v3706
    %v3708 = vpop.f32.mrf.mxu0
    %3709 = vdwg.mxu0
    %3710 = vmatpush.bf16.msra.mxu0 %v2023
    %3711 = vmatpush.bf16.msra.mxu0 %v2015
    %3712 = vmatpush.bf16.msra.mxu0 %v2007
    %3713 = vmatpush.bf16.msra.mxu0 %v1999
    %3714 = vmatpush.bf16.msra.mxu0 %v1991
    %3715 = vmatpush.bf16.msra.mxu0 %v1983
    %3716 = vmatpush.bf16.msra.mxu0 %v1975
    %3717 = vmatpush.bf16.msra.mxu0 %v1967
    %3718 = vmatmul.bf16.gmra.mxu0 %v3682
    %v3719 = vpop.f32.mrf.mxu0
    %v3720 = vadd.f32 0.0, %v3719
    %v3721 = vpop.f32.mrf.mxu0
    %3722 = vdwg.mxu0
    %3723 = vmatpush.bf16.msra.mxu0 %v2087
    %3724 = vmatpush.bf16.msra.mxu0 %v2079
    %3725 = vmatpush.bf16.msra.mxu0 %v2071
    %3726 = vmatpush.bf16.msra.mxu0 %v2063
    %3727 = vmatpush.bf16.msra.mxu0 %v2055
    %3728 = vmatpush.bf16.msra.mxu0 %v2047
    %3729 = vmatpush.bf16.msra.mxu0 %v2039
    %3730 = vmatpush.bf16.msra.mxu0 %v2031
    %3731 = vmatmul.bf16.gmra.mxu0 %v3683
    %v3732 = vpop.f32.mrf.mxu0
    %v3733 = vadd.f32 %v3720, %v3732
    %v3734 = vpop.f32.mrf.mxu0
    %3735 = vdwg.mxu0
    %3736 = vmatpush.bf16.msra.mxu0 %v2024
    %3737 = vmatpush.bf16.msra.mxu0 %v2016
    %3738 = vmatpush.bf16.msra.mxu0 %v2008
    %3739 = vmatpush.bf16.msra.mxu0 %v2000
    %3740 = vmatpush.bf16.msra.mxu0 %v1992
    %3741 = vmatpush.bf16.msra.mxu0 %v1984
    %3742 = vmatpush.bf16.msra.mxu0 %v1976
    %3743 = vmatpush.bf16.msra.mxu0 %v1968
    %3744 = vmatmul.bf16.gmra.mxu0 %v3682
    %v3745 = vpop.f32.mrf.mxu0
    %v3746 = vadd.f32 0.0, %v3745
    %v3747 = vpop.f32.mrf.mxu0
    %3748 = vdwg.mxu0
    %3749 = vmatpush.bf16.msra.mxu0 %v2088
    %3750 = vmatpush.bf16.msra.mxu0 %v2080
    %3751 = vmatpush.bf16.msra.mxu0 %v2072
    %3752 = vmatpush.bf16.msra.mxu0 %v2064
    %3753 = vmatpush.bf16.msra.mxu0 %v2056
    %3754 = vmatpush.bf16.msra.mxu0 %v2048
    %3755 = vmatpush.bf16.msra.mxu0 %v2040
    %3756 = vmatpush.bf16.msra.mxu0 %v2032
    %3757 = vmatmul.bf16.gmra.mxu0 %v3683
    %v3758 = vpop.f32.mrf.mxu0
    %v3759 = vadd.f32 %v3746, %v3758
    %v3760 = vpop.f32.mrf.mxu0
    %3761 = vdwg.mxu0
    %3762 = vmatpush.bf16.msra.mxu0 %v2025
    %3763 = vmatpush.bf16.msra.mxu0 %v2017
    %3764 = vmatpush.bf16.msra.mxu0 %v2009
    %3765 = vmatpush.bf16.msra.mxu0 %v2001
    %3766 = vmatpush.bf16.msra.mxu0 %v1993
    %3767 = vmatpush.bf16.msra.mxu0 %v1985
    %3768 = vmatpush.bf16.msra.mxu0 %v1977
    %3769 = vmatpush.bf16.msra.mxu0 %v1969
    %3770 = vmatmul.bf16.gmra.mxu0 %v3682
    %v3771 = vpop.f32.mrf.mxu0
    %v3772 = vadd.f32 0.0, %v3771
    %v3773 = vpop.f32.mrf.mxu0
    %3774 = vdwg.mxu0
    %3775 = vmatpush.bf16.msra.mxu0 %v2089
    %3776 = vmatpush.bf16.msra.mxu0 %v2081
    %3777 = vmatpush.bf16.msra.mxu0 %v2073
    %3778 = vmatpush.bf16.msra.mxu0 %v2065
    %3779 = vmatpush.bf16.msra.mxu0 %v2057
    %3780 = vmatpush.bf16.msra.mxu0 %v2049
    %3781 = vmatpush.bf16.msra.mxu0 %v2041
    %3782 = vmatpush.bf16.msra.mxu0 %v2033
    %3783 = vmatmul.bf16.gmra.mxu0 %v3683
    %v3784 = vpop.f32.mrf.mxu0
    %v3785 = vadd.f32 %v3772, %v3784
    %v3786 = vpop.f32.mrf.mxu0
    %3787 = vdwg.mxu0
    %3788 = vmatpush.bf16.msra.mxu0 %v2026
    %3789 = vmatpush.bf16.msra.mxu0 %v2018
    %3790 = vmatpush.bf16.msra.mxu0 %v2010
    %3791 = vmatpush.bf16.msra.mxu0 %v2002
    %3792 = vmatpush.bf16.msra.mxu0 %v1994
    %3793 = vmatpush.bf16.msra.mxu0 %v1986
    %3794 = vmatpush.bf16.msra.mxu0 %v1978
    %3795 = vmatpush.bf16.msra.mxu0 %v1970
    %3796 = vmatmul.bf16.gmra.mxu0 %v3682
    %v3797 = vpop.f32.mrf.mxu0
    %v3798 = vadd.f32 0.0, %v3797
    %v3799 = vpop.f32.mrf.mxu0
    %3800 = vdwg.mxu0
    %3801 = vmatpush.bf16.msra.mxu0 %v2090
    %3802 = vmatpush.bf16.msra.mxu0 %v2082
    %3803 = vmatpush.bf16.msra.mxu0 %v2074
    %3804 = vmatpush.bf16.msra.mxu0 %v2066
    %3805 = vmatpush.bf16.msra.mxu0 %v2058
    %3806 = vmatpush.bf16.msra.mxu0 %v2050
    %3807 = vmatpush.bf16.msra.mxu0 %v2042
    %3808 = vmatpush.bf16.msra.mxu0 %v2034
    %3809 = vmatmul.bf16.gmra.mxu0 %v3683
    %v3810 = vpop.f32.mrf.mxu0
    %v3811 = vadd.f32 %v3798, %v3810
    %v3812 = vpop.f32.mrf.mxu0
    %3813 = vdwg.mxu0
    %3814 = vmatpush.bf16.msra.mxu0 %v2027
    %3815 = vmatpush.bf16.msra.mxu0 %v2019
    %3816 = vmatpush.bf16.msra.mxu0 %v2011
    %3817 = vmatpush.bf16.msra.mxu0 %v2003
    %3818 = vmatpush.bf16.msra.mxu0 %v1995
    %3819 = vmatpush.bf16.msra.mxu0 %v1987
    %3820 = vmatpush.bf16.msra.mxu0 %v1979
    %3821 = vmatpush.bf16.msra.mxu0 %v1971
    %3822 = vmatmul.bf16.gmra.mxu0 %v3682
    %v3823 = vpop.f32.mrf.mxu0
    %v3824 = vadd.f32 0.0, %v3823
    %v3825 = vpop.f32.mrf.mxu0
    %3826 = vdwg.mxu0
    %3827 = vmatpush.bf16.msra.mxu0 %v2091
    %3828 = vmatpush.bf16.msra.mxu0 %v2083
    %3829 = vmatpush.bf16.msra.mxu0 %v2075
    %3830 = vmatpush.bf16.msra.mxu0 %v2067
    %3831 = vmatpush.bf16.msra.mxu0 %v2059
    %3832 = vmatpush.bf16.msra.mxu0 %v2051
    %3833 = vmatpush.bf16.msra.mxu0 %v2043
    %3834 = vmatpush.bf16.msra.mxu0 %v2035
    %3835 = vmatmul.bf16.gmra.mxu0 %v3683
    %v3836 = vpop.f32.mrf.mxu0
    %v3837 = vadd.f32 %v3824, %v3836
    %v3838 = vpop.f32.mrf.mxu0
    %3839 = vdwg.mxu0
    %3840 = vmatpush.bf16.msra.mxu0 %v2028
    %3841 = vmatpush.bf16.msra.mxu0 %v2020
    %3842 = vmatpush.bf16.msra.mxu0 %v2012
    %3843 = vmatpush.bf16.msra.mxu0 %v2004
    %3844 = vmatpush.bf16.msra.mxu0 %v1996
    %3845 = vmatpush.bf16.msra.mxu0 %v1988
    %3846 = vmatpush.bf16.msra.mxu0 %v1980
    %3847 = vmatpush.bf16.msra.mxu0 %v1972
    %3848 = vmatmul.bf16.gmra.mxu0 %v3682
    %v3849 = vpop.f32.mrf.mxu0
    %v3850 = vadd.f32 0.0, %v3849
    %v3851 = vpop.f32.mrf.mxu0
    %3852 = vdwg.mxu0
    %3853 = vmatpush.bf16.msra.mxu0 %v2092
    %3854 = vmatpush.bf16.msra.mxu0 %v2084
    %3855 = vmatpush.bf16.msra.mxu0 %v2076
    %3856 = vmatpush.bf16.msra.mxu0 %v2068
    %3857 = vmatpush.bf16.msra.mxu0 %v2060
    %3858 = vmatpush.bf16.msra.mxu0 %v2052
    %3859 = vmatpush.bf16.msra.mxu0 %v2044
    %3860 = vmatpush.bf16.msra.mxu0 %v2036
    %3861 = vmatmul.bf16.gmra.mxu0 %v3683
    %v3862 = vpop.f32.mrf.mxu0
    %v3863 = vadd.f32 %v3850, %v3862
    %v3864 = vpop.f32.mrf.mxu0
    %3865 = vdwg.mxu0
    %3866 = vmatpush.bf16.msra.mxu0 %v2029
    %3867 = vmatpush.bf16.msra.mxu0 %v2021
    %3868 = vmatpush.bf16.msra.mxu0 %v2013
    %3869 = vmatpush.bf16.msra.mxu0 %v2005
    %3870 = vmatpush.bf16.msra.mxu0 %v1997
    %3871 = vmatpush.bf16.msra.mxu0 %v1989
    %3872 = vmatpush.bf16.msra.mxu0 %v1981
    %3873 = vmatpush.bf16.msra.mxu0 %v1973
    %3874 = vmatmul.bf16.gmra.mxu0 %v3682
    %v3875 = vpop.f32.mrf.mxu0
    %v3876 = vadd.f32 0.0, %v3875
    %v3877 = vpop.f32.mrf.mxu0
    %3878 = vdwg.mxu0
    %3879 = vmatpush.bf16.msra.mxu0 %v2093
    %3880 = vmatpush.bf16.msra.mxu0 %v2085
    %3881 = vmatpush.bf16.msra.mxu0 %v2077
    %3882 = vmatpush.bf16.msra.mxu0 %v2069
    %3883 = vmatpush.bf16.msra.mxu0 %v2061
    %3884 = vmatpush.bf16.msra.mxu0 %v2053
    %3885 = vmatpush.bf16.msra.mxu0 %v2045
    %3886 = vmatpush.bf16.msra.mxu0 %v2037
    %3887 = vmatmul.bf16.gmra.mxu0 %v3683
    %v3888 = vpop.f32.mrf.mxu0
    %v3889 = vadd.f32 %v3876, %v3888
    %v3890 = vpop.f32.mrf.mxu0
    %3891 = vdwg.mxu0
    %v3892 = vadd.f32 %v3674, %v3707
    %v3893 = vadd.f32 %v3675, %v3733
    %v3894 = vadd.f32 %v3676, %v3759
    %v3895 = vadd.f32 %v3677, %v3785
    %v3896 = vadd.f32 %v3678, %v3811
    %v3897 = vadd.f32 %v3679, %v3837
    %v3898 = vadd.f32 %v3680, %v3863
    %v3899 = vadd.f32 %v3681, %v3889
    %v3900 = vxor.u32 %v3892, 2147483648
    %v3901 = vxor.u32 %v3893, 2147483648
    %v3902 = vmul.f32 %v3900, 1.442695
    %v3903 = vpow.pop %v3902
    %v3904 = vmul.f32 %v3901, 1.442695
    %v3905 = vpow.pop %v3904
    %v3906 = vadd.f32 %v3903, 1.0
    %v3907 = vadd.f32 %v3905, 1.0
    %v3908 = vrcp.pop %v3906
    %v3909 = vmul.f32 %v3906, %v3908
    %v3910 = vsub.f32 1.0, %v3909
    %v3911 = vmul.f32 %v3908, %v3910
    %v3912 = vadd.f32 %v3908, %v3911
    %vm3913 = vweird.f32 %v3906
    %vm3914 = vweird.f32 %v3908
    %vm3915 = vmor %vm3913, %vm3914
    %v3916 = vsel %vm3915, %v3908, %v3912
    %v3917 = vand.u32 2147483647, %v3906
    %vm3918 = vcmp.eq.f32.partialorder %v3917, 8.507059e+37
    %v3919 = vand.u32 %v3906, 2147483648
    %v3920 = vor.u32 1.1754944e-38, %v3919
    %v3921 = vsel %vm3918, %v3920, %v3916
    %v3922 = vmul.f32 1.0, %v3921
    %v3923 = vrcp.pop %v3907
    %v3924 = vmul.f32 %v3907, %v3923
    %v3925 = vsub.f32 1.0, %v3924
    %v3926 = vmul.f32 %v3923, %v3925
    %v3927 = vadd.f32 %v3923, %v3926
    %vm3928 = vweird.f32 %v3907
    %vm3929 = vweird.f32 %v3923
    %vm3930 = vmor %vm3928, %vm3929
    %v3931 = vsel %vm3930, %v3923, %v3927
    %v3932 = vand.u32 2147483647, %v3907
    %vm3933 = vcmp.eq.f32.partialorder %v3932, 8.507059e+37
    %v3934 = vand.u32 %v3907, 2147483648
    %v3935 = vor.u32 1.1754944e-38, %v3934
    %v3936 = vsel %vm3933, %v3935, %v3931
    %v3937 = vmul.f32 1.0, %v3936
    %v3938 = vxor.u32 %v3894, 2147483648
    %v3939 = vxor.u32 %v3895, 2147483648
    %v3940 = vmul.f32 %v3938, 1.442695
    %v3941 = vpow.pop %v3940
    %v3942 = vmul.f32 %v3939, 1.442695
    %v3943 = vpow.pop %v3942
    %v3944 = vadd.f32 %v3941, 1.0
    %v3945 = vadd.f32 %v3943, 1.0
    %v3946 = vrcp.pop %v3944
    %v3947 = vmul.f32 %v3944, %v3946
    %v3948 = vsub.f32 1.0, %v3947
    %v3949 = vmul.f32 %v3946, %v3948
    %v3950 = vadd.f32 %v3946, %v3949
    %vm3951 = vweird.f32 %v3944
    %vm3952 = vweird.f32 %v3946
    %vm3953 = vmor %vm3951, %vm3952
    %v3954 = vsel %vm3953, %v3946, %v3950
    %v3955 = vand.u32 2147483647, %v3944
    %vm3956 = vcmp.eq.f32.partialorder %v3955, 8.507059e+37
    %v3957 = vand.u32 %v3944, 2147483648
    %v3958 = vor.u32 1.1754944e-38, %v3957
    %v3959 = vsel %vm3956, %v3958, %v3954
    %v3960 = vmul.f32 1.0, %v3959
    %v3961 = vrcp.pop %v3945
    %v3962 = vmul.f32 %v3945, %v3961
    %v3963 = vsub.f32 1.0, %v3962
    %v3964 = vmul.f32 %v3961, %v3963
    %v3965 = vadd.f32 %v3961, %v3964
    %vm3966 = vweird.f32 %v3945
    %vm3967 = vweird.f32 %v3961
    %vm3968 = vmor %vm3966, %vm3967
    %v3969 = vsel %vm3968, %v3961, %v3965
    %v3970 = vand.u32 2147483647, %v3945
    %vm3971 = vcmp.eq.f32.partialorder %v3970, 8.507059e+37
    %v3972 = vand.u32 %v3945, 2147483648
    %v3973 = vor.u32 1.1754944e-38, %v3972
    %v3974 = vsel %vm3971, %v3973, %v3969
    %v3975 = vmul.f32 1.0, %v3974
    %v3976 = vtanh.pop %v3896
    %v3977 = vtanh.pop %v3897
    %v3978 = vxor.u32 %v3898, 2147483648
    %v3979 = vxor.u32 %v3899, 2147483648
    %v3980 = vmul.f32 %v3978, 1.442695
    %v3981 = vpow.pop %v3980
    %v3982 = vmul.f32 %v3979, 1.442695
    %v3983 = vpow.pop %v3982
    %v3984 = vadd.f32 %v3981, 1.0
    %v3985 = vadd.f32 %v3983, 1.0
    %v3986 = vrcp.pop %v3984
    %v3987 = vmul.f32 %v3984, %v3986
    %v3988 = vsub.f32 1.0, %v3987
    %v3989 = vmul.f32 %v3986, %v3988
    %v3990 = vadd.f32 %v3986, %v3989
    %vm3991 = vweird.f32 %v3984
    %vm3992 = vweird.f32 %v3986
    %vm3993 = vmor %vm3991, %vm3992
    %v3994 = vsel %vm3993, %v3986, %v3990
    %v3995 = vand.u32 2147483647, %v3984
    %vm3996 = vcmp.eq.f32.partialorder %v3995, 8.507059e+37
    %v3997 = vand.u32 %v3984, 2147483648
    %v3998 = vor.u32 1.1754944e-38, %v3997
    %v3999 = vsel %vm3996, %v3998, %v3994
    %v4000 = vmul.f32 1.0, %v3999
    %v4001 = vrcp.pop %v3985
    %v4002 = vmul.f32 %v3985, %v4001
    %v4003 = vsub.f32 1.0, %v4002
    %v4004 = vmul.f32 %v4001, %v4003
    %v4005 = vadd.f32 %v4001, %v4004
    %vm4006 = vweird.f32 %v3985
    %vm4007 = vweird.f32 %v4001
    %vm4008 = vmor %vm4006, %vm4007
    %v4009 = vsel %vm4008, %v4001, %v4005
    %v4010 = vand.u32 2147483647, %v3985
    %vm4011 = vcmp.eq.f32.partialorder %v4010, 8.507059e+37
    %v4012 = vand.u32 %v3985, 2147483648
    %v4013 = vor.u32 1.1754944e-38, %v4012
    %v4014 = vsel %vm4011, %v4013, %v4009
    %v4015 = vmul.f32 1.0, %v4014
    %v4016 = vmul.f32 %v3960, %v3654
    %v4017 = vmul.f32 %v3975, %v3655
    %v4018 = vmul.f32 %v3922, %v3976
    %v4019 = vmul.f32 %v3937, %v3977
    %v4020 = vadd.f32 %v4016, %v4018
    %v4021 = vadd.f32 %v4017, %v4019
    %v4022 = vtanh.pop %v4020
    %v4023 = vtanh.pop %v4021
    %v4024 = vmul.f32 %v4000, %v4022
    %v4025 = vmul.f32 %v4015, %v4023
    %s4026 = sadd.s32 %s1567, 4
    %v4027 = vstv %s4026
    %vm4028 = vcmp.lt.s32.totalorder %v4027, %v1566
    %v4029 = vsel %vm4028, 1, 0
    %4030 = vset.pattern.permute.xlu0 0
    %4031 = vperm.xlu0 %4030, %v4029
    %v4032 = vpop.permute.xlu0 %4031
    %vm4033 = vcmp.eq.s32.totalorder %v4032, 1
    %v4034 = vsel %vm4033, %v4024, 0.0
    %v4035 = vsel %vm4033, %v4025, 0.0
    %v4036 = vpack.c.bf16 %v4035, %v4034
    %s4037 = scalar_lea.vmem [#allocation11], 32
    %4038 = vst [vmem:[%s4037] sm:$0xff] %v4036
    %s4039 = scalar_lea.vmem [#allocation2], 320
    %v4040 = vld [vmem:[%s4039] sm:$0xff]
    %v4041 = vld [vmem:[%s4039 + $0x8] sm:$0xff]
    %v4042 = vld [vmem:[%s4039 + $0x10] sm:$0xff]
    %v4043 = vld [vmem:[%s4039 + $0x18] sm:$0xff]
    %v4044 = vld [vmem:[%s4039 + $0x20] sm:$0xff]
    %v4045 = vld [vmem:[%s4039 + $0x28] sm:$0xff]
    %v4046 = vld [vmem:[%s4039 + $0x30] sm:$0xff]
    %v4047 = vld [vmem:[%s4039 + $0x38] sm:$0xff]
    %v4048 = vpack.c.bf16 %v4024, %v4024
    %v4049 = vpack.c.bf16 %v4025, %v4025
    %4050 = vmatpush.bf16.msra.mxu0 %v2022
    %4051 = vmatpush.bf16.msra.mxu0 %v2014
    %4052 = vmatpush.bf16.msra.mxu0 %v2006
    %4053 = vmatpush.bf16.msra.mxu0 %v1998
    %4054 = vmatpush.bf16.msra.mxu0 %v1990
    %4055 = vmatpush.bf16.msra.mxu0 %v1982
    %4056 = vmatpush.bf16.msra.mxu0 %v1974
    %4057 = vmatpush.bf16.msra.mxu0 %v1966
    %4058 = vmatmul.bf16.gmra.mxu0 %v4048
    %v4059 = vpop.f32.mrf.mxu0
    %v4060 = vadd.f32 0.0, %v4059
    %v4061 = vpop.f32.mrf.mxu0
    %4062 = vdwg.mxu0
    %4063 = vmatpush.bf16.msra.mxu0 %v2086
    %4064 = vmatpush.bf16.msra.mxu0 %v2078
    %4065 = vmatpush.bf16.msra.mxu0 %v2070
    %4066 = vmatpush.bf16.msra.mxu0 %v2062
    %4067 = vmatpush.bf16.msra.mxu0 %v2054
    %4068 = vmatpush.bf16.msra.mxu0 %v2046
    %4069 = vmatpush.bf16.msra.mxu0 %v2038
    %4070 = vmatpush.bf16.msra.mxu0 %v2030
    %4071 = vmatmul.bf16.gmra.mxu0 %v4049
    %v4072 = vpop.f32.mrf.mxu0
    %v4073 = vadd.f32 %v4060, %v4072
    %v4074 = vpop.f32.mrf.mxu0
    %4075 = vdwg.mxu0
    %4076 = vmatpush.bf16.msra.mxu0 %v2023
    %4077 = vmatpush.bf16.msra.mxu0 %v2015
    %4078 = vmatpush.bf16.msra.mxu0 %v2007
    %4079 = vmatpush.bf16.msra.mxu0 %v1999
    %4080 = vmatpush.bf16.msra.mxu0 %v1991
    %4081 = vmatpush.bf16.msra.mxu0 %v1983
    %4082 = vmatpush.bf16.msra.mxu0 %v1975
    %4083 = vmatpush.bf16.msra.mxu0 %v1967
    %4084 = vmatmul.bf16.gmra.mxu0 %v4048
    %v4085 = vpop.f32.mrf.mxu0
    %v4086 = vadd.f32 0.0, %v4085
    %v4087 = vpop.f32.mrf.mxu0
    %4088 = vdwg.mxu0
    %4089 = vmatpush.bf16.msra.mxu0 %v2087
    %4090 = vmatpush.bf16.msra.mxu0 %v2079
    %4091 = vmatpush.bf16.msra.mxu0 %v2071
    %4092 = vmatpush.bf16.msra.mxu0 %v2063
    %4093 = vmatpush.bf16.msra.mxu0 %v2055
    %4094 = vmatpush.bf16.msra.mxu0 %v2047
    %4095 = vmatpush.bf16.msra.mxu0 %v2039
    %4096 = vmatpush.bf16.msra.mxu0 %v2031
    %4097 = vmatmul.bf16.gmra.mxu0 %v4049
    %v4098 = vpop.f32.mrf.mxu0
    %v4099 = vadd.f32 %v4086, %v4098
    %v4100 = vpop.f32.mrf.mxu0
    %4101 = vdwg.mxu0
    %4102 = vmatpush.bf16.msra.mxu0 %v2024
    %4103 = vmatpush.bf16.msra.mxu0 %v2016
    %4104 = vmatpush.bf16.msra.mxu0 %v2008
    %4105 = vmatpush.bf16.msra.mxu0 %v2000
    %4106 = vmatpush.bf16.msra.mxu0 %v1992
    %4107 = vmatpush.bf16.msra.mxu0 %v1984
    %4108 = vmatpush.bf16.msra.mxu0 %v1976
    %4109 = vmatpush.bf16.msra.mxu0 %v1968
    %4110 = vmatmul.bf16.gmra.mxu0 %v4048
    %v4111 = vpop.f32.mrf.mxu0
    %v4112 = vadd.f32 0.0, %v4111
    %v4113 = vpop.f32.mrf.mxu0
    %4114 = vdwg.mxu0
    %4115 = vmatpush.bf16.msra.mxu0 %v2088
    %4116 = vmatpush.bf16.msra.mxu0 %v2080
    %4117 = vmatpush.bf16.msra.mxu0 %v2072
    %4118 = vmatpush.bf16.msra.mxu0 %v2064
    %4119 = vmatpush.bf16.msra.mxu0 %v2056
    %4120 = vmatpush.bf16.msra.mxu0 %v2048
    %4121 = vmatpush.bf16.msra.mxu0 %v2040
    %4122 = vmatpush.bf16.msra.mxu0 %v2032
    %4123 = vmatmul.bf16.gmra.mxu0 %v4049
    %v4124 = vpop.f32.mrf.mxu0
    %v4125 = vadd.f32 %v4112, %v4124
    %v4126 = vpop.f32.mrf.mxu0
    %4127 = vdwg.mxu0
    %4128 = vmatpush.bf16.msra.mxu0 %v2025
    %4129 = vmatpush.bf16.msra.mxu0 %v2017
    %4130 = vmatpush.bf16.msra.mxu0 %v2009
    %4131 = vmatpush.bf16.msra.mxu0 %v2001
    %4132 = vmatpush.bf16.msra.mxu0 %v1993
    %4133 = vmatpush.bf16.msra.mxu0 %v1985
    %4134 = vmatpush.bf16.msra.mxu0 %v1977
    %4135 = vmatpush.bf16.msra.mxu0 %v1969
    %4136 = vmatmul.bf16.gmra.mxu0 %v4048
    %v4137 = vpop.f32.mrf.mxu0
    %v4138 = vadd.f32 0.0, %v4137
    %v4139 = vpop.f32.mrf.mxu0
    %4140 = vdwg.mxu0
    %4141 = vmatpush.bf16.msra.mxu0 %v2089
    %4142 = vmatpush.bf16.msra.mxu0 %v2081
    %4143 = vmatpush.bf16.msra.mxu0 %v2073
    %4144 = vmatpush.bf16.msra.mxu0 %v2065
    %4145 = vmatpush.bf16.msra.mxu0 %v2057
    %4146 = vmatpush.bf16.msra.mxu0 %v2049
    %4147 = vmatpush.bf16.msra.mxu0 %v2041
    %4148 = vmatpush.bf16.msra.mxu0 %v2033
    %4149 = vmatmul.bf16.gmra.mxu0 %v4049
    %v4150 = vpop.f32.mrf.mxu0
    %v4151 = vadd.f32 %v4138, %v4150
    %v4152 = vpop.f32.mrf.mxu0
    %4153 = vdwg.mxu0
    %4154 = vmatpush.bf16.msra.mxu0 %v2026
    %4155 = vmatpush.bf16.msra.mxu0 %v2018
    %4156 = vmatpush.bf16.msra.mxu0 %v2010
    %4157 = vmatpush.bf16.msra.mxu0 %v2002
    %4158 = vmatpush.bf16.msra.mxu0 %v1994
    %4159 = vmatpush.bf16.msra.mxu0 %v1986
    %4160 = vmatpush.bf16.msra.mxu0 %v1978
    %4161 = vmatpush.bf16.msra.mxu0 %v1970
    %4162 = vmatmul.bf16.gmra.mxu0 %v4048
    %v4163 = vpop.f32.mrf.mxu0
    %v4164 = vadd.f32 0.0, %v4163
    %v4165 = vpop.f32.mrf.mxu0
    %4166 = vdwg.mxu0
    %4167 = vmatpush.bf16.msra.mxu0 %v2090
    %4168 = vmatpush.bf16.msra.mxu0 %v2082
    %4169 = vmatpush.bf16.msra.mxu0 %v2074
    %4170 = vmatpush.bf16.msra.mxu0 %v2066
    %4171 = vmatpush.bf16.msra.mxu0 %v2058
    %4172 = vmatpush.bf16.msra.mxu0 %v2050
    %4173 = vmatpush.bf16.msra.mxu0 %v2042
    %4174 = vmatpush.bf16.msra.mxu0 %v2034
    %4175 = vmatmul.bf16.gmra.mxu0 %v4049
    %v4176 = vpop.f32.mrf.mxu0
    %v4177 = vadd.f32 %v4164, %v4176
    %v4178 = vpop.f32.mrf.mxu0
    %4179 = vdwg.mxu0
    %4180 = vmatpush.bf16.msra.mxu0 %v2027
    %4181 = vmatpush.bf16.msra.mxu0 %v2019
    %4182 = vmatpush.bf16.msra.mxu0 %v2011
    %4183 = vmatpush.bf16.msra.mxu0 %v2003
    %4184 = vmatpush.bf16.msra.mxu0 %v1995
    %4185 = vmatpush.bf16.msra.mxu0 %v1987
    %4186 = vmatpush.bf16.msra.mxu0 %v1979
    %4187 = vmatpush.bf16.msra.mxu0 %v1971
    %4188 = vmatmul.bf16.gmra.mxu0 %v4048
    %v4189 = vpop.f32.mrf.mxu0
    %v4190 = vadd.f32 0.0, %v4189
    %v4191 = vpop.f32.mrf.mxu0
    %4192 = vdwg.mxu0
    %4193 = vmatpush.bf16.msra.mxu0 %v2091
    %4194 = vmatpush.bf16.msra.mxu0 %v2083
    %4195 = vmatpush.bf16.msra.mxu0 %v2075
    %4196 = vmatpush.bf16.msra.mxu0 %v2067
    %4197 = vmatpush.bf16.msra.mxu0 %v2059
    %4198 = vmatpush.bf16.msra.mxu0 %v2051
    %4199 = vmatpush.bf16.msra.mxu0 %v2043
    %4200 = vmatpush.bf16.msra.mxu0 %v2035
    %4201 = vmatmul.bf16.gmra.mxu0 %v4049
    %v4202 = vpop.f32.mrf.mxu0
    %v4203 = vadd.f32 %v4190, %v4202
    %v4204 = vpop.f32.mrf.mxu0
    %4205 = vdwg.mxu0
    %4206 = vmatpush.bf16.msra.mxu0 %v2028
    %4207 = vmatpush.bf16.msra.mxu0 %v2020
    %4208 = vmatpush.bf16.msra.mxu0 %v2012
    %4209 = vmatpush.bf16.msra.mxu0 %v2004
    %4210 = vmatpush.bf16.msra.mxu0 %v1996
    %4211 = vmatpush.bf16.msra.mxu0 %v1988
    %4212 = vmatpush.bf16.msra.mxu0 %v1980
    %4213 = vmatpush.bf16.msra.mxu0 %v1972
    %4214 = vmatmul.bf16.gmra.mxu0 %v4048
    %v4215 = vpop.f32.mrf.mxu0
    %v4216 = vadd.f32 0.0, %v4215
    %v4217 = vpop.f32.mrf.mxu0
    %4218 = vdwg.mxu0
    %4219 = vmatpush.bf16.msra.mxu0 %v2092
    %4220 = vmatpush.bf16.msra.mxu0 %v2084
    %4221 = vmatpush.bf16.msra.mxu0 %v2076
    %4222 = vmatpush.bf16.msra.mxu0 %v2068
    %4223 = vmatpush.bf16.msra.mxu0 %v2060
    %4224 = vmatpush.bf16.msra.mxu0 %v2052
    %4225 = vmatpush.bf16.msra.mxu0 %v2044
    %4226 = vmatpush.bf16.msra.mxu0 %v2036
    %4227 = vmatmul.bf16.gmra.mxu0 %v4049
    %v4228 = vpop.f32.mrf.mxu0
    %v4229 = vadd.f32 %v4216, %v4228
    %v4230 = vpop.f32.mrf.mxu0
    %4231 = vdwg.mxu0
    %4232 = vmatpush.bf16.msra.mxu0 %v2029
    %4233 = vmatpush.bf16.msra.mxu0 %v2021
    %4234 = vmatpush.bf16.msra.mxu0 %v2013
    %4235 = vmatpush.bf16.msra.mxu0 %v2005
    %4236 = vmatpush.bf16.msra.mxu0 %v1997
    %4237 = vmatpush.bf16.msra.mxu0 %v1989
    %4238 = vmatpush.bf16.msra.mxu0 %v1981
    %4239 = vmatpush.bf16.msra.mxu0 %v1973
    %4240 = vmatmul.bf16.gmra.mxu0 %v4048
    %v4241 = vpop.f32.mrf.mxu0
    %v4242 = vadd.f32 0.0, %v4241
    %v4243 = vpop.f32.mrf.mxu0
    %4244 = vdwg.mxu0
    %4245 = vmatpush.bf16.msra.mxu0 %v2093
    %4246 = vmatpush.bf16.msra.mxu0 %v2085
    %4247 = vmatpush.bf16.msra.mxu0 %v2077
    %4248 = vmatpush.bf16.msra.mxu0 %v2069
    %4249 = vmatpush.bf16.msra.mxu0 %v2061
    %4250 = vmatpush.bf16.msra.mxu0 %v2053
    %4251 = vmatpush.bf16.msra.mxu0 %v2045
    %4252 = vmatpush.bf16.msra.mxu0 %v2037
    %4253 = vmatmul.bf16.gmra.mxu0 %v4049
    %v4254 = vpop.f32.mrf.mxu0
    %v4255 = vadd.f32 %v4242, %v4254
    %v4256 = vpop.f32.mrf.mxu0
    %4257 = vdwg.mxu0
    %v4258 = vadd.f32 %v4040, %v4073
    %v4259 = vadd.f32 %v4041, %v4099
    %v4260 = vadd.f32 %v4042, %v4125
    %v4261 = vadd.f32 %v4043, %v4151
    %v4262 = vadd.f32 %v4044, %v4177
    %v4263 = vadd.f32 %v4045, %v4203
    %v4264 = vadd.f32 %v4046, %v4229
    %v4265 = vadd.f32 %v4047, %v4255
    %v4266 = vxor.u32 %v4258, 2147483648
    %v4267 = vxor.u32 %v4259, 2147483648
    %v4268 = vmul.f32 %v4266, 1.442695
    %v4269 = vpow.pop %v4268
    %v4270 = vmul.f32 %v4267, 1.442695
    %v4271 = vpow.pop %v4270
    %v4272 = vadd.f32 %v4269, 1.0
    %v4273 = vadd.f32 %v4271, 1.0
    %v4274 = vrcp.pop %v4272
    %v4275 = vmul.f32 %v4272, %v4274
    %v4276 = vsub.f32 1.0, %v4275
    %v4277 = vmul.f32 %v4274, %v4276
    %v4278 = vadd.f32 %v4274, %v4277
    %vm4279 = vweird.f32 %v4272
    %vm4280 = vweird.f32 %v4274
    %vm4281 = vmor %vm4279, %vm4280
    %v4282 = vsel %vm4281, %v4274, %v4278
    %v4283 = vand.u32 2147483647, %v4272
    %vm4284 = vcmp.eq.f32.partialorder %v4283, 8.507059e+37
    %v4285 = vand.u32 %v4272, 2147483648
    %v4286 = vor.u32 1.1754944e-38, %v4285
    %v4287 = vsel %vm4284, %v4286, %v4282
    %v4288 = vmul.f32 1.0, %v4287
    %v4289 = vrcp.pop %v4273
    %v4290 = vmul.f32 %v4273, %v4289
    %v4291 = vsub.f32 1.0, %v4290
    %v4292 = vmul.f32 %v4289, %v4291
    %v4293 = vadd.f32 %v4289, %v4292
    %vm4294 = vweird.f32 %v4273
    %vm4295 = vweird.f32 %v4289
    %vm4296 = vmor %vm4294, %vm4295
    %v4297 = vsel %vm4296, %v4289, %v4293
    %v4298 = vand.u32 2147483647, %v4273
    %vm4299 = vcmp.eq.f32.partialorder %v4298, 8.507059e+37
    %v4300 = vand.u32 %v4273, 2147483648
    %v4301 = vor.u32 1.1754944e-38, %v4300
    %v4302 = vsel %vm4299, %v4301, %v4297
    %v4303 = vmul.f32 1.0, %v4302
    %v4304 = vxor.u32 %v4260, 2147483648
    %v4305 = vxor.u32 %v4261, 2147483648
    %v4306 = vmul.f32 %v4304, 1.442695
    %v4307 = vpow.pop %v4306
    %v4308 = vmul.f32 %v4305, 1.442695
    %v4309 = vpow.pop %v4308
    %v4310 = vadd.f32 %v4307, 1.0
    %v4311 = vadd.f32 %v4309, 1.0
    %v4312 = vrcp.pop %v4310
    %v4313 = vmul.f32 %v4310, %v4312
    %v4314 = vsub.f32 1.0, %v4313
    %v4315 = vmul.f32 %v4312, %v4314
    %v4316 = vadd.f32 %v4312, %v4315
    %vm4317 = vweird.f32 %v4310
    %vm4318 = vweird.f32 %v4312
    %vm4319 = vmor %vm4317, %vm4318
    %v4320 = vsel %vm4319, %v4312, %v4316
    %v4321 = vand.u32 2147483647, %v4310
    %vm4322 = vcmp.eq.f32.partialorder %v4321, 8.507059e+37
    %v4323 = vand.u32 %v4310, 2147483648
    %v4324 = vor.u32 1.1754944e-38, %v4323
    %v4325 = vsel %vm4322, %v4324, %v4320
    %v4326 = vmul.f32 1.0, %v4325
    %v4327 = vrcp.pop %v4311
    %v4328 = vmul.f32 %v4311, %v4327
    %v4329 = vsub.f32 1.0, %v4328
    %v4330 = vmul.f32 %v4327, %v4329
    %v4331 = vadd.f32 %v4327, %v4330
    %vm4332 = vweird.f32 %v4311
    %vm4333 = vweird.f32 %v4327
    %vm4334 = vmor %vm4332, %vm4333
    %v4335 = vsel %vm4334, %v4327, %v4331
    %v4336 = vand.u32 2147483647, %v4311
    %vm4337 = vcmp.eq.f32.partialorder %v4336, 8.507059e+37
    %v4338 = vand.u32 %v4311, 2147483648
    %v4339 = vor.u32 1.1754944e-38, %v4338
    %v4340 = vsel %vm4337, %v4339, %v4335
    %v4341 = vmul.f32 1.0, %v4340
    %v4342 = vtanh.pop %v4262
    %v4343 = vtanh.pop %v4263
    %v4344 = vxor.u32 %v4264, 2147483648
    %v4345 = vxor.u32 %v4265, 2147483648
    %v4346 = vmul.f32 %v4344, 1.442695
    %v4347 = vpow.pop %v4346
    %v4348 = vmul.f32 %v4345, 1.442695
    %v4349 = vpow.pop %v4348
    %v4350 = vadd.f32 %v4347, 1.0
    %v4351 = vadd.f32 %v4349, 1.0
    %v4352 = vrcp.pop %v4350
    %v4353 = vmul.f32 %v4350, %v4352
    %v4354 = vsub.f32 1.0, %v4353
    %v4355 = vmul.f32 %v4352, %v4354
    %v4356 = vadd.f32 %v4352, %v4355
    %vm4357 = vweird.f32 %v4350
    %vm4358 = vweird.f32 %v4352
    %vm4359 = vmor %vm4357, %vm4358
    %v4360 = vsel %vm4359, %v4352, %v4356
    %v4361 = vand.u32 2147483647, %v4350
    %vm4362 = vcmp.eq.f32.partialorder %v4361, 8.507059e+37
    %v4363 = vand.u32 %v4350, 2147483648
    %v4364 = vor.u32 1.1754944e-38, %v4363
    %v4365 = vsel %vm4362, %v4364, %v4360
    %v4366 = vmul.f32 1.0, %v4365
    %v4367 = vrcp.pop %v4351
    %v4368 = vmul.f32 %v4351, %v4367
    %v4369 = vsub.f32 1.0, %v4368
    %v4370 = vmul.f32 %v4367, %v4369
    %v4371 = vadd.f32 %v4367, %v4370
    %vm4372 = vweird.f32 %v4351
    %vm4373 = vweird.f32 %v4367
    %vm4374 = vmor %vm4372, %vm4373
    %v4375 = vsel %vm4374, %v4367, %v4371
    %v4376 = vand.u32 2147483647, %v4351
    %vm4377 = vcmp.eq.f32.partialorder %v4376, 8.507059e+37
    %v4378 = vand.u32 %v4351, 2147483648
    %v4379 = vor.u32 1.1754944e-38, %v4378
    %v4380 = vsel %vm4377, %v4379, %v4375
    %v4381 = vmul.f32 1.0, %v4380
    %v4382 = vmul.f32 %v4326, %v4020
    %v4383 = vmul.f32 %v4341, %v4021
    %v4384 = vmul.f32 %v4288, %v4342
    %v4385 = vmul.f32 %v4303, %v4343
    %v4386 = vadd.f32 %v4382, %v4384
    %v4387 = vadd.f32 %v4383, %v4385
    %v4388 = vtanh.pop %v4386
    %v4389 = vtanh.pop %v4387
    %v4390 = vmul.f32 %v4366, %v4388
    %v4391 = vmul.f32 %v4381, %v4389
    %s4392 = sadd.s32 %s1567, 5
    %v4393 = vstv %s4392
    %vm4394 = vcmp.lt.s32.totalorder %v4393, %v1566
    %v4395 = vsel %vm4394, 1, 0
    %4396 = vset.pattern.permute.xlu0 0
    %4397 = vperm.xlu0 %4396, %v4395
    %v4398 = vpop.permute.xlu0 %4397
    %vm4399 = vcmp.eq.s32.totalorder %v4398, 1
    %v4400 = vsel %vm4399, %v4390, 0.0
    %v4401 = vsel %vm4399, %v4391, 0.0
    %v4402 = vpack.c.bf16 %v4401, %v4400
    %s4403 = scalar_lea.vmem [#allocation11], 40
    %4404 = vst [vmem:[%s4403] sm:$0xff] %v4402
    %s4405 = scalar_lea.vmem [#allocation2], 384
    %v4406 = vld [vmem:[%s4405] sm:$0xff]
    %v4407 = vld [vmem:[%s4405 + $0x8] sm:$0xff]
    %v4408 = vld [vmem:[%s4405 + $0x10] sm:$0xff]
    %v4409 = vld [vmem:[%s4405 + $0x18] sm:$0xff]
    %v4410 = vld [vmem:[%s4405 + $0x20] sm:$0xff]
    %v4411 = vld [vmem:[%s4405 + $0x28] sm:$0xff]
    %v4412 = vld [vmem:[%s4405 + $0x30] sm:$0xff]
    %v4413 = vld [vmem:[%s4405 + $0x38] sm:$0xff]
    %v4414 = vpack.c.bf16 %v4390, %v4390
    %v4415 = vpack.c.bf16 %v4391, %v4391
    %4416 = vmatpush.bf16.msra.mxu0 %v2022
    %4417 = vmatpush.bf16.msra.mxu0 %v2014
    %4418 = vmatpush.bf16.msra.mxu0 %v2006
    %4419 = vmatpush.bf16.msra.mxu0 %v1998
    %4420 = vmatpush.bf16.msra.mxu0 %v1990
    %4421 = vmatpush.bf16.msra.mxu0 %v1982
    %4422 = vmatpush.bf16.msra.mxu0 %v1974
    %4423 = vmatpush.bf16.msra.mxu0 %v1966
    %4424 = vmatmul.bf16.gmra.mxu0 %v4414
    %v4425 = vpop.f32.mrf.mxu0
    %v4426 = vadd.f32 0.0, %v4425
    %v4427 = vpop.f32.mrf.mxu0
    %4428 = vdwg.mxu0
    %4429 = vmatpush.bf16.msra.mxu0 %v2086
    %4430 = vmatpush.bf16.msra.mxu0 %v2078
    %4431 = vmatpush.bf16.msra.mxu0 %v2070
    %4432 = vmatpush.bf16.msra.mxu0 %v2062
    %4433 = vmatpush.bf16.msra.mxu0 %v2054
    %4434 = vmatpush.bf16.msra.mxu0 %v2046
    %4435 = vmatpush.bf16.msra.mxu0 %v2038
    %4436 = vmatpush.bf16.msra.mxu0 %v2030
    %4437 = vmatmul.bf16.gmra.mxu0 %v4415
    %v4438 = vpop.f32.mrf.mxu0
    %v4439 = vadd.f32 %v4426, %v4438
    %v4440 = vpop.f32.mrf.mxu0
    %4441 = vdwg.mxu0
    %4442 = vmatpush.bf16.msra.mxu0 %v2023
    %4443 = vmatpush.bf16.msra.mxu0 %v2015
    %4444 = vmatpush.bf16.msra.mxu0 %v2007
    %4445 = vmatpush.bf16.msra.mxu0 %v1999
    %4446 = vmatpush.bf16.msra.mxu0 %v1991
    %4447 = vmatpush.bf16.msra.mxu0 %v1983
    %4448 = vmatpush.bf16.msra.mxu0 %v1975
    %4449 = vmatpush.bf16.msra.mxu0 %v1967
    %4450 = vmatmul.bf16.gmra.mxu0 %v4414
    %v4451 = vpop.f32.mrf.mxu0
    %v4452 = vadd.f32 0.0, %v4451
    %v4453 = vpop.f32.mrf.mxu0
    %4454 = vdwg.mxu0
    %4455 = vmatpush.bf16.msra.mxu0 %v2087
    %4456 = vmatpush.bf16.msra.mxu0 %v2079
    %4457 = vmatpush.bf16.msra.mxu0 %v2071
    %4458 = vmatpush.bf16.msra.mxu0 %v2063
    %4459 = vmatpush.bf16.msra.mxu0 %v2055
    %4460 = vmatpush.bf16.msra.mxu0 %v2047
    %4461 = vmatpush.bf16.msra.mxu0 %v2039
    %4462 = vmatpush.bf16.msra.mxu0 %v2031
    %4463 = vmatmul.bf16.gmra.mxu0 %v4415
    %v4464 = vpop.f32.mrf.mxu0
    %v4465 = vadd.f32 %v4452, %v4464
    %v4466 = vpop.f32.mrf.mxu0
    %4467 = vdwg.mxu0
    %4468 = vmatpush.bf16.msra.mxu0 %v2024
    %4469 = vmatpush.bf16.msra.mxu0 %v2016
    %4470 = vmatpush.bf16.msra.mxu0 %v2008
    %4471 = vmatpush.bf16.msra.mxu0 %v2000
    %4472 = vmatpush.bf16.msra.mxu0 %v1992
    %4473 = vmatpush.bf16.msra.mxu0 %v1984
    %4474 = vmatpush.bf16.msra.mxu0 %v1976
    %4475 = vmatpush.bf16.msra.mxu0 %v1968
    %4476 = vmatmul.bf16.gmra.mxu0 %v4414
    %v4477 = vpop.f32.mrf.mxu0
    %v4478 = vadd.f32 0.0, %v4477
    %v4479 = vpop.f32.mrf.mxu0
    %4480 = vdwg.mxu0
    %4481 = vmatpush.bf16.msra.mxu0 %v2088
    %4482 = vmatpush.bf16.msra.mxu0 %v2080
    %4483 = vmatpush.bf16.msra.mxu0 %v2072
    %4484 = vmatpush.bf16.msra.mxu0 %v2064
    %4485 = vmatpush.bf16.msra.mxu0 %v2056
    %4486 = vmatpush.bf16.msra.mxu0 %v2048
    %4487 = vmatpush.bf16.msra.mxu0 %v2040
    %4488 = vmatpush.bf16.msra.mxu0 %v2032
    %4489 = vmatmul.bf16.gmra.mxu0 %v4415
    %v4490 = vpop.f32.mrf.mxu0
    %v4491 = vadd.f32 %v4478, %v4490
    %v4492 = vpop.f32.mrf.mxu0
    %4493 = vdwg.mxu0
    %4494 = vmatpush.bf16.msra.mxu0 %v2025
    %4495 = vmatpush.bf16.msra.mxu0 %v2017
    %4496 = vmatpush.bf16.msra.mxu0 %v2009
    %4497 = vmatpush.bf16.msra.mxu0 %v2001
    %4498 = vmatpush.bf16.msra.mxu0 %v1993
    %4499 = vmatpush.bf16.msra.mxu0 %v1985
    %4500 = vmatpush.bf16.msra.mxu0 %v1977
    %4501 = vmatpush.bf16.msra.mxu0 %v1969
    %4502 = vmatmul.bf16.gmra.mxu0 %v4414
    %v4503 = vpop.f32.mrf.mxu0
    %v4504 = vadd.f32 0.0, %v4503
    %v4505 = vpop.f32.mrf.mxu0
    %4506 = vdwg.mxu0
    %4507 = vmatpush.bf16.msra.mxu0 %v2089
    %4508 = vmatpush.bf16.msra.mxu0 %v2081
    %4509 = vmatpush.bf16.msra.mxu0 %v2073
    %4510 = vmatpush.bf16.msra.mxu0 %v2065
    %4511 = vmatpush.bf16.msra.mxu0 %v2057
    %4512 = vmatpush.bf16.msra.mxu0 %v2049
    %4513 = vmatpush.bf16.msra.mxu0 %v2041
    %4514 = vmatpush.bf16.msra.mxu0 %v2033
    %4515 = vmatmul.bf16.gmra.mxu0 %v4415
    %v4516 = vpop.f32.mrf.mxu0
    %v4517 = vadd.f32 %v4504, %v4516
    %v4518 = vpop.f32.mrf.mxu0
    %4519 = vdwg.mxu0
    %4520 = vmatpush.bf16.msra.mxu0 %v2026
    %4521 = vmatpush.bf16.msra.mxu0 %v2018
    %4522 = vmatpush.bf16.msra.mxu0 %v2010
    %4523 = vmatpush.bf16.msra.mxu0 %v2002
    %4524 = vmatpush.bf16.msra.mxu0 %v1994
    %4525 = vmatpush.bf16.msra.mxu0 %v1986
    %4526 = vmatpush.bf16.msra.mxu0 %v1978
    %4527 = vmatpush.bf16.msra.mxu0 %v1970
    %4528 = vmatmul.bf16.gmra.mxu0 %v4414
    %v4529 = vpop.f32.mrf.mxu0
    %v4530 = vadd.f32 0.0, %v4529
    %v4531 = vpop.f32.mrf.mxu0
    %4532 = vdwg.mxu0
    %4533 = vmatpush.bf16.msra.mxu0 %v2090
    %4534 = vmatpush.bf16.msra.mxu0 %v2082
    %4535 = vmatpush.bf16.msra.mxu0 %v2074
    %4536 = vmatpush.bf16.msra.mxu0 %v2066
    %4537 = vmatpush.bf16.msra.mxu0 %v2058
    %4538 = vmatpush.bf16.msra.mxu0 %v2050
    %4539 = vmatpush.bf16.msra.mxu0 %v2042
    %4540 = vmatpush.bf16.msra.mxu0 %v2034
    %4541 = vmatmul.bf16.gmra.mxu0 %v4415
    %v4542 = vpop.f32.mrf.mxu0
    %v4543 = vadd.f32 %v4530, %v4542
    %v4544 = vpop.f32.mrf.mxu0
    %4545 = vdwg.mxu0
    %4546 = vmatpush.bf16.msra.mxu0 %v2027
    %4547 = vmatpush.bf16.msra.mxu0 %v2019
    %4548 = vmatpush.bf16.msra.mxu0 %v2011
    %4549 = vmatpush.bf16.msra.mxu0 %v2003
    %4550 = vmatpush.bf16.msra.mxu0 %v1995
    %4551 = vmatpush.bf16.msra.mxu0 %v1987
    %4552 = vmatpush.bf16.msra.mxu0 %v1979
    %4553 = vmatpush.bf16.msra.mxu0 %v1971
    %4554 = vmatmul.bf16.gmra.mxu0 %v4414
    %v4555 = vpop.f32.mrf.mxu0
    %v4556 = vadd.f32 0.0, %v4555
    %v4557 = vpop.f32.mrf.mxu0
    %4558 = vdwg.mxu0
    %4559 = vmatpush.bf16.msra.mxu0 %v2091
    %4560 = vmatpush.bf16.msra.mxu0 %v2083
    %4561 = vmatpush.bf16.msra.mxu0 %v2075
    %4562 = vmatpush.bf16.msra.mxu0 %v2067
    %4563 = vmatpush.bf16.msra.mxu0 %v2059
    %4564 = vmatpush.bf16.msra.mxu0 %v2051
    %4565 = vmatpush.bf16.msra.mxu0 %v2043
    %4566 = vmatpush.bf16.msra.mxu0 %v2035
    %4567 = vmatmul.bf16.gmra.mxu0 %v4415
    %v4568 = vpop.f32.mrf.mxu0
    %v4569 = vadd.f32 %v4556, %v4568
    %v4570 = vpop.f32.mrf.mxu0
    %4571 = vdwg.mxu0
    %4572 = vmatpush.bf16.msra.mxu0 %v2028
    %4573 = vmatpush.bf16.msra.mxu0 %v2020
    %4574 = vmatpush.bf16.msra.mxu0 %v2012
    %4575 = vmatpush.bf16.msra.mxu0 %v2004
    %4576 = vmatpush.bf16.msra.mxu0 %v1996
    %4577 = vmatpush.bf16.msra.mxu0 %v1988
    %4578 = vmatpush.bf16.msra.mxu0 %v1980
    %4579 = vmatpush.bf16.msra.mxu0 %v1972
    %4580 = vmatmul.bf16.gmra.mxu0 %v4414
    %v4581 = vpop.f32.mrf.mxu0
    %v4582 = vadd.f32 0.0, %v4581
    %v4583 = vpop.f32.mrf.mxu0
    %4584 = vdwg.mxu0
    %4585 = vmatpush.bf16.msra.mxu0 %v2092
    %4586 = vmatpush.bf16.msra.mxu0 %v2084
    %4587 = vmatpush.bf16.msra.mxu0 %v2076
    %4588 = vmatpush.bf16.msra.mxu0 %v2068
    %4589 = vmatpush.bf16.msra.mxu0 %v2060
    %4590 = vmatpush.bf16.msra.mxu0 %v2052
    %4591 = vmatpush.bf16.msra.mxu0 %v2044
    %4592 = vmatpush.bf16.msra.mxu0 %v2036
    %4593 = vmatmul.bf16.gmra.mxu0 %v4415
    %v4594 = vpop.f32.mrf.mxu0
    %v4595 = vadd.f32 %v4582, %v4594
    %v4596 = vpop.f32.mrf.mxu0
    %4597 = vdwg.mxu0
    %4598 = vmatpush.bf16.msra.mxu0 %v2029
    %4599 = vmatpush.bf16.msra.mxu0 %v2021
    %4600 = vmatpush.bf16.msra.mxu0 %v2013
    %4601 = vmatpush.bf16.msra.mxu0 %v2005
    %4602 = vmatpush.bf16.msra.mxu0 %v1997
    %4603 = vmatpush.bf16.msra.mxu0 %v1989
    %4604 = vmatpush.bf16.msra.mxu0 %v1981
    %4605 = vmatpush.bf16.msra.mxu0 %v1973
    %4606 = vmatmul.bf16.gmra.mxu0 %v4414
    %v4607 = vpop.f32.mrf.mxu0
    %v4608 = vadd.f32 0.0, %v4607
    %v4609 = vpop.f32.mrf.mxu0
    %4610 = vdwg.mxu0
    %4611 = vmatpush.bf16.msra.mxu0 %v2093
    %4612 = vmatpush.bf16.msra.mxu0 %v2085
    %4613 = vmatpush.bf16.msra.mxu0 %v2077
    %4614 = vmatpush.bf16.msra.mxu0 %v2069
    %4615 = vmatpush.bf16.msra.mxu0 %v2061
    %4616 = vmatpush.bf16.msra.mxu0 %v2053
    %4617 = vmatpush.bf16.msra.mxu0 %v2045
    %4618 = vmatpush.bf16.msra.mxu0 %v2037
    %4619 = vmatmul.bf16.gmra.mxu0 %v4415
    %v4620 = vpop.f32.mrf.mxu0
    %v4621 = vadd.f32 %v4608, %v4620
    %v4622 = vpop.f32.mrf.mxu0
    %4623 = vdwg.mxu0
    %v4624 = vadd.f32 %v4406, %v4439
    %v4625 = vadd.f32 %v4407, %v4465
    %v4626 = vadd.f32 %v4408, %v4491
    %v4627 = vadd.f32 %v4409, %v4517
    %v4628 = vadd.f32 %v4410, %v4543
    %v4629 = vadd.f32 %v4411, %v4569
    %v4630 = vadd.f32 %v4412, %v4595
    %v4631 = vadd.f32 %v4413, %v4621
    %v4632 = vxor.u32 %v4624, 2147483648
    %v4633 = vxor.u32 %v4625, 2147483648
    %v4634 = vmul.f32 %v4632, 1.442695
    %v4635 = vpow.pop %v4634
    %v4636 = vmul.f32 %v4633, 1.442695
    %v4637 = vpow.pop %v4636
    %v4638 = vadd.f32 %v4635, 1.0
    %v4639 = vadd.f32 %v4637, 1.0
    %v4640 = vrcp.pop %v4638
    %v4641 = vmul.f32 %v4638, %v4640
    %v4642 = vsub.f32 1.0, %v4641
    %v4643 = vmul.f32 %v4640, %v4642
    %v4644 = vadd.f32 %v4640, %v4643
    %vm4645 = vweird.f32 %v4638
    %vm4646 = vweird.f32 %v4640
    %vm4647 = vmor %vm4645, %vm4646
    %v4648 = vsel %vm4647, %v4640, %v4644
    %v4649 = vand.u32 2147483647, %v4638
    %vm4650 = vcmp.eq.f32.partialorder %v4649, 8.507059e+37
    %v4651 = vand.u32 %v4638, 2147483648
    %v4652 = vor.u32 1.1754944e-38, %v4651
    %v4653 = vsel %vm4650, %v4652, %v4648
    %v4654 = vmul.f32 1.0, %v4653
    %v4655 = vrcp.pop %v4639
    %v4656 = vmul.f32 %v4639, %v4655
    %v4657 = vsub.f32 1.0, %v4656
    %v4658 = vmul.f32 %v4655, %v4657
    %v4659 = vadd.f32 %v4655, %v4658
    %vm4660 = vweird.f32 %v4639
    %vm4661 = vweird.f32 %v4655
    %vm4662 = vmor %vm4660, %vm4661
    %v4663 = vsel %vm4662, %v4655, %v4659
    %v4664 = vand.u32 2147483647, %v4639
    %vm4665 = vcmp.eq.f32.partialorder %v4664, 8.507059e+37
    %v4666 = vand.u32 %v4639, 2147483648
    %v4667 = vor.u32 1.1754944e-38, %v4666
    %v4668 = vsel %vm4665, %v4667, %v4663
    %v4669 = vmul.f32 1.0, %v4668
    %v4670 = vxor.u32 %v4626, 2147483648
    %v4671 = vxor.u32 %v4627, 2147483648
    %v4672 = vmul.f32 %v4670, 1.442695
    %v4673 = vpow.pop %v4672
    %v4674 = vmul.f32 %v4671, 1.442695
    %v4675 = vpow.pop %v4674
    %v4676 = vadd.f32 %v4673, 1.0
    %v4677 = vadd.f32 %v4675, 1.0
    %v4678 = vrcp.pop %v4676
    %v4679 = vmul.f32 %v4676, %v4678
    %v4680 = vsub.f32 1.0, %v4679
    %v4681 = vmul.f32 %v4678, %v4680
    %v4682 = vadd.f32 %v4678, %v4681
    %vm4683 = vweird.f32 %v4676
    %vm4684 = vweird.f32 %v4678
    %vm4685 = vmor %vm4683, %vm4684
    %v4686 = vsel %vm4685, %v4678, %v4682
    %v4687 = vand.u32 2147483647, %v4676
    %vm4688 = vcmp.eq.f32.partialorder %v4687, 8.507059e+37
    %v4689 = vand.u32 %v4676, 2147483648
    %v4690 = vor.u32 1.1754944e-38, %v4689
    %v4691 = vsel %vm4688, %v4690, %v4686
    %v4692 = vmul.f32 1.0, %v4691
    %v4693 = vrcp.pop %v4677
    %v4694 = vmul.f32 %v4677, %v4693
    %v4695 = vsub.f32 1.0, %v4694
    %v4696 = vmul.f32 %v4693, %v4695
    %v4697 = vadd.f32 %v4693, %v4696
    %vm4698 = vweird.f32 %v4677
    %vm4699 = vweird.f32 %v4693
    %vm4700 = vmor %vm4698, %vm4699
    %v4701 = vsel %vm4700, %v4693, %v4697
    %v4702 = vand.u32 2147483647, %v4677
    %vm4703 = vcmp.eq.f32.partialorder %v4702, 8.507059e+37
    %v4704 = vand.u32 %v4677, 2147483648
    %v4705 = vor.u32 1.1754944e-38, %v4704
    %v4706 = vsel %vm4703, %v4705, %v4701
    %v4707 = vmul.f32 1.0, %v4706
    %v4708 = vtanh.pop %v4628
    %v4709 = vtanh.pop %v4629
    %v4710 = vxor.u32 %v4630, 2147483648
    %v4711 = vxor.u32 %v4631, 2147483648
    %v4712 = vmul.f32 %v4710, 1.442695
    %v4713 = vpow.pop %v4712
    %v4714 = vmul.f32 %v4711, 1.442695
    %v4715 = vpow.pop %v4714
    %v4716 = vadd.f32 %v4713, 1.0
    %v4717 = vadd.f32 %v4715, 1.0
    %v4718 = vrcp.pop %v4716
    %v4719 = vmul.f32 %v4716, %v4718
    %v4720 = vsub.f32 1.0, %v4719
    %v4721 = vmul.f32 %v4718, %v4720
    %v4722 = vadd.f32 %v4718, %v4721
    %vm4723 = vweird.f32 %v4716
    %vm4724 = vweird.f32 %v4718
    %vm4725 = vmor %vm4723, %vm4724
    %v4726 = vsel %vm4725, %v4718, %v4722
    %v4727 = vand.u32 2147483647, %v4716
    %vm4728 = vcmp.eq.f32.partialorder %v4727, 8.507059e+37
    %v4729 = vand.u32 %v4716, 2147483648
    %v4730 = vor.u32 1.1754944e-38, %v4729
    %v4731 = vsel %vm4728, %v4730, %v4726
    %v4732 = vmul.f32 1.0, %v4731
    %v4733 = vrcp.pop %v4717
    %v4734 = vmul.f32 %v4717, %v4733
    %v4735 = vsub.f32 1.0, %v4734
    %v4736 = vmul.f32 %v4733, %v4735
    %v4737 = vadd.f32 %v4733, %v4736
    %vm4738 = vweird.f32 %v4717
    %vm4739 = vweird.f32 %v4733
    %vm4740 = vmor %vm4738, %vm4739
    %v4741 = vsel %vm4740, %v4733, %v4737
    %v4742 = vand.u32 2147483647, %v4717
    %vm4743 = vcmp.eq.f32.partialorder %v4742, 8.507059e+37
    %v4744 = vand.u32 %v4717, 2147483648
    %v4745 = vor.u32 1.1754944e-38, %v4744
    %v4746 = vsel %vm4743, %v4745, %v4741
    %v4747 = vmul.f32 1.0, %v4746
    %v4748 = vmul.f32 %v4692, %v4386
    %v4749 = vmul.f32 %v4707, %v4387
    %v4750 = vmul.f32 %v4654, %v4708
    %v4751 = vmul.f32 %v4669, %v4709
    %v4752 = vadd.f32 %v4748, %v4750
    %v4753 = vadd.f32 %v4749, %v4751
    %v4754 = vtanh.pop %v4752
    %v4755 = vtanh.pop %v4753
    %v4756 = vmul.f32 %v4732, %v4754
    %v4757 = vmul.f32 %v4747, %v4755
    %s4758 = sadd.s32 %s1567, 6
    %v4759 = vstv %s4758
    %vm4760 = vcmp.lt.s32.totalorder %v4759, %v1566
    %v4761 = vsel %vm4760, 1, 0
    %4762 = vset.pattern.permute.xlu0 0
    %4763 = vperm.xlu0 %4762, %v4761
    %v4764 = vpop.permute.xlu0 %4763
    %vm4765 = vcmp.eq.s32.totalorder %v4764, 1
    %v4766 = vsel %vm4765, %v4756, 0.0
    %v4767 = vsel %vm4765, %v4757, 0.0
    %v4768 = vpack.c.bf16 %v4767, %v4766
    %s4769 = scalar_lea.vmem [#allocation11], 48
    %4770 = vst [vmem:[%s4769] sm:$0xff] %v4768
    %s4771 = scalar_lea.vmem [#allocation2], 448
    %v4772 = vld [vmem:[%s4771] sm:$0xff]
    %v4773 = vld [vmem:[%s4771 + $0x8] sm:$0xff]
    %v4774 = vld [vmem:[%s4771 + $0x10] sm:$0xff]
    %v4775 = vld [vmem:[%s4771 + $0x18] sm:$0xff]
    %v4776 = vld [vmem:[%s4771 + $0x20] sm:$0xff]
    %v4777 = vld [vmem:[%s4771 + $0x28] sm:$0xff]
    %v4778 = vld [vmem:[%s4771 + $0x30] sm:$0xff]
    %v4779 = vld [vmem:[%s4771 + $0x38] sm:$0xff]
    %v4780 = vpack.c.bf16 %v4756, %v4756
    %v4781 = vpack.c.bf16 %v4757, %v4757
    %4782 = vmatpush.bf16.msra.mxu0 %v2022
    %4783 = vmatpush.bf16.msra.mxu0 %v2014
    %4784 = vmatpush.bf16.msra.mxu0 %v2006
    %4785 = vmatpush.bf16.msra.mxu0 %v1998
    %4786 = vmatpush.bf16.msra.mxu0 %v1990
    %4787 = vmatpush.bf16.msra.mxu0 %v1982
    %4788 = vmatpush.bf16.msra.mxu0 %v1974
    %4789 = vmatpush.bf16.msra.mxu0 %v1966
    %4790 = vmatmul.bf16.gmra.mxu0 %v4780
    %v4791 = vpop.f32.mrf.mxu0
    %v4792 = vadd.f32 0.0, %v4791
    %v4793 = vpop.f32.mrf.mxu0
    %4794 = vdwg.mxu0
    %4795 = vmatpush.bf16.msra.mxu0 %v2086
    %4796 = vmatpush.bf16.msra.mxu0 %v2078
    %4797 = vmatpush.bf16.msra.mxu0 %v2070
    %4798 = vmatpush.bf16.msra.mxu0 %v2062
    %4799 = vmatpush.bf16.msra.mxu0 %v2054
    %4800 = vmatpush.bf16.msra.mxu0 %v2046
    %4801 = vmatpush.bf16.msra.mxu0 %v2038
    %4802 = vmatpush.bf16.msra.mxu0 %v2030
    %4803 = vmatmul.bf16.gmra.mxu0 %v4781
    %v4804 = vpop.f32.mrf.mxu0
    %v4805 = vadd.f32 %v4792, %v4804
    %v4806 = vpop.f32.mrf.mxu0
    %4807 = vdwg.mxu0
    %4808 = vmatpush.bf16.msra.mxu0 %v2023
    %4809 = vmatpush.bf16.msra.mxu0 %v2015
    %4810 = vmatpush.bf16.msra.mxu0 %v2007
    %4811 = vmatpush.bf16.msra.mxu0 %v1999
    %4812 = vmatpush.bf16.msra.mxu0 %v1991
    %4813 = vmatpush.bf16.msra.mxu0 %v1983
    %4814 = vmatpush.bf16.msra.mxu0 %v1975
    %4815 = vmatpush.bf16.msra.mxu0 %v1967
    %4816 = vmatmul.bf16.gmra.mxu0 %v4780
    %v4817 = vpop.f32.mrf.mxu0
    %v4818 = vadd.f32 0.0, %v4817
    %v4819 = vpop.f32.mrf.mxu0
    %4820 = vdwg.mxu0
    %4821 = vmatpush.bf16.msra.mxu0 %v2087
    %4822 = vmatpush.bf16.msra.mxu0 %v2079
    %4823 = vmatpush.bf16.msra.mxu0 %v2071
    %4824 = vmatpush.bf16.msra.mxu0 %v2063
    %4825 = vmatpush.bf16.msra.mxu0 %v2055
    %4826 = vmatpush.bf16.msra.mxu0 %v2047
    %4827 = vmatpush.bf16.msra.mxu0 %v2039
    %4828 = vmatpush.bf16.msra.mxu0 %v2031
    %4829 = vmatmul.bf16.gmra.mxu0 %v4781
    %v4830 = vpop.f32.mrf.mxu0
    %v4831 = vadd.f32 %v4818, %v4830
    %v4832 = vpop.f32.mrf.mxu0
    %4833 = vdwg.mxu0
    %4834 = vmatpush.bf16.msra.mxu0 %v2024
    %4835 = vmatpush.bf16.msra.mxu0 %v2016
    %4836 = vmatpush.bf16.msra.mxu0 %v2008
    %4837 = vmatpush.bf16.msra.mxu0 %v2000
    %4838 = vmatpush.bf16.msra.mxu0 %v1992
    %4839 = vmatpush.bf16.msra.mxu0 %v1984
    %4840 = vmatpush.bf16.msra.mxu0 %v1976
    %4841 = vmatpush.bf16.msra.mxu0 %v1968
    %4842 = vmatmul.bf16.gmra.mxu0 %v4780
    %v4843 = vpop.f32.mrf.mxu0
    %v4844 = vadd.f32 0.0, %v4843
    %v4845 = vpop.f32.mrf.mxu0
    %4846 = vdwg.mxu0
    %4847 = vmatpush.bf16.msra.mxu0 %v2088
    %4848 = vmatpush.bf16.msra.mxu0 %v2080
    %4849 = vmatpush.bf16.msra.mxu0 %v2072
    %4850 = vmatpush.bf16.msra.mxu0 %v2064
    %4851 = vmatpush.bf16.msra.mxu0 %v2056
    %4852 = vmatpush.bf16.msra.mxu0 %v2048
    %4853 = vmatpush.bf16.msra.mxu0 %v2040
    %4854 = vmatpush.bf16.msra.mxu0 %v2032
    %4855 = vmatmul.bf16.gmra.mxu0 %v4781
    %v4856 = vpop.f32.mrf.mxu0
    %v4857 = vadd.f32 %v4844, %v4856
    %v4858 = vpop.f32.mrf.mxu0
    %4859 = vdwg.mxu0
    %4860 = vmatpush.bf16.msra.mxu0 %v2025
    %4861 = vmatpush.bf16.msra.mxu0 %v2017
    %4862 = vmatpush.bf16.msra.mxu0 %v2009
    %4863 = vmatpush.bf16.msra.mxu0 %v2001
    %4864 = vmatpush.bf16.msra.mxu0 %v1993
    %4865 = vmatpush.bf16.msra.mxu0 %v1985
    %4866 = vmatpush.bf16.msra.mxu0 %v1977
    %4867 = vmatpush.bf16.msra.mxu0 %v1969
    %4868 = vmatmul.bf16.gmra.mxu0 %v4780
    %v4869 = vpop.f32.mrf.mxu0
    %v4870 = vadd.f32 0.0, %v4869
    %v4871 = vpop.f32.mrf.mxu0
    %4872 = vdwg.mxu0
    %4873 = vmatpush.bf16.msra.mxu0 %v2089
    %4874 = vmatpush.bf16.msra.mxu0 %v2081
    %4875 = vmatpush.bf16.msra.mxu0 %v2073
    %4876 = vmatpush.bf16.msra.mxu0 %v2065
    %4877 = vmatpush.bf16.msra.mxu0 %v2057
    %4878 = vmatpush.bf16.msra.mxu0 %v2049
    %4879 = vmatpush.bf16.msra.mxu0 %v2041
    %4880 = vmatpush.bf16.msra.mxu0 %v2033
    %4881 = vmatmul.bf16.gmra.mxu0 %v4781
    %v4882 = vpop.f32.mrf.mxu0
    %v4883 = vadd.f32 %v4870, %v4882
    %v4884 = vpop.f32.mrf.mxu0
    %4885 = vdwg.mxu0
    %4886 = vmatpush.bf16.msra.mxu0 %v2026
    %4887 = vmatpush.bf16.msra.mxu0 %v2018
    %4888 = vmatpush.bf16.msra.mxu0 %v2010
    %4889 = vmatpush.bf16.msra.mxu0 %v2002
    %4890 = vmatpush.bf16.msra.mxu0 %v1994
    %4891 = vmatpush.bf16.msra.mxu0 %v1986
    %4892 = vmatpush.bf16.msra.mxu0 %v1978
    %4893 = vmatpush.bf16.msra.mxu0 %v1970
    %4894 = vmatmul.bf16.gmra.mxu0 %v4780
    %v4895 = vpop.f32.mrf.mxu0
    %v4896 = vadd.f32 0.0, %v4895
    %v4897 = vpop.f32.mrf.mxu0
    %4898 = vdwg.mxu0
    %4899 = vmatpush.bf16.msra.mxu0 %v2090
    %4900 = vmatpush.bf16.msra.mxu0 %v2082
    %4901 = vmatpush.bf16.msra.mxu0 %v2074
    %4902 = vmatpush.bf16.msra.mxu0 %v2066
    %4903 = vmatpush.bf16.msra.mxu0 %v2058
    %4904 = vmatpush.bf16.msra.mxu0 %v2050
    %4905 = vmatpush.bf16.msra.mxu0 %v2042
    %4906 = vmatpush.bf16.msra.mxu0 %v2034
    %4907 = vmatmul.bf16.gmra.mxu0 %v4781
    %v4908 = vpop.f32.mrf.mxu0
    %v4909 = vadd.f32 %v4896, %v4908
    %v4910 = vpop.f32.mrf.mxu0
    %4911 = vdwg.mxu0
    %4912 = vmatpush.bf16.msra.mxu0 %v2027
    %4913 = vmatpush.bf16.msra.mxu0 %v2019
    %4914 = vmatpush.bf16.msra.mxu0 %v2011
    %4915 = vmatpush.bf16.msra.mxu0 %v2003
    %4916 = vmatpush.bf16.msra.mxu0 %v1995
    %4917 = vmatpush.bf16.msra.mxu0 %v1987
    %4918 = vmatpush.bf16.msra.mxu0 %v1979
    %4919 = vmatpush.bf16.msra.mxu0 %v1971
    %4920 = vmatmul.bf16.gmra.mxu0 %v4780
    %v4921 = vpop.f32.mrf.mxu0
    %v4922 = vadd.f32 0.0, %v4921
    %v4923 = vpop.f32.mrf.mxu0
    %4924 = vdwg.mxu0
    %4925 = vmatpush.bf16.msra.mxu0 %v2091
    %4926 = vmatpush.bf16.msra.mxu0 %v2083
    %4927 = vmatpush.bf16.msra.mxu0 %v2075
    %4928 = vmatpush.bf16.msra.mxu0 %v2067
    %4929 = vmatpush.bf16.msra.mxu0 %v2059
    %4930 = vmatpush.bf16.msra.mxu0 %v2051
    %4931 = vmatpush.bf16.msra.mxu0 %v2043
    %4932 = vmatpush.bf16.msra.mxu0 %v2035
    %4933 = vmatmul.bf16.gmra.mxu0 %v4781
    %v4934 = vpop.f32.mrf.mxu0
    %v4935 = vadd.f32 %v4922, %v4934
    %v4936 = vpop.f32.mrf.mxu0
    %4937 = vdwg.mxu0
    %4938 = vmatpush.bf16.msra.mxu0 %v2028
    %4939 = vmatpush.bf16.msra.mxu0 %v2020
    %4940 = vmatpush.bf16.msra.mxu0 %v2012
    %4941 = vmatpush.bf16.msra.mxu0 %v2004
    %4942 = vmatpush.bf16.msra.mxu0 %v1996
    %4943 = vmatpush.bf16.msra.mxu0 %v1988
    %4944 = vmatpush.bf16.msra.mxu0 %v1980
    %4945 = vmatpush.bf16.msra.mxu0 %v1972
    %4946 = vmatmul.bf16.gmra.mxu0 %v4780
    %v4947 = vpop.f32.mrf.mxu0
    %v4948 = vadd.f32 0.0, %v4947
    %v4949 = vpop.f32.mrf.mxu0
    %4950 = vdwg.mxu0
    %4951 = vmatpush.bf16.msra.mxu0 %v2092
    %4952 = vmatpush.bf16.msra.mxu0 %v2084
    %4953 = vmatpush.bf16.msra.mxu0 %v2076
    %4954 = vmatpush.bf16.msra.mxu0 %v2068
    %4955 = vmatpush.bf16.msra.mxu0 %v2060
    %4956 = vmatpush.bf16.msra.mxu0 %v2052
    %4957 = vmatpush.bf16.msra.mxu0 %v2044
    %4958 = vmatpush.bf16.msra.mxu0 %v2036
    %4959 = vmatmul.bf16.gmra.mxu0 %v4781
    %v4960 = vpop.f32.mrf.mxu0
    %v4961 = vadd.f32 %v4948, %v4960
    %v4962 = vpop.f32.mrf.mxu0
    %4963 = vdwg.mxu0
    %4964 = vmatpush.bf16.msra.mxu0 %v2029
    %4965 = vmatpush.bf16.msra.mxu0 %v2021
    %4966 = vmatpush.bf16.msra.mxu0 %v2013
    %4967 = vmatpush.bf16.msra.mxu0 %v2005
    %4968 = vmatpush.bf16.msra.mxu0 %v1997
    %4969 = vmatpush.bf16.msra.mxu0 %v1989
    %4970 = vmatpush.bf16.msra.mxu0 %v1981
    %4971 = vmatpush.bf16.msra.mxu0 %v1973
    %4972 = vmatmul.bf16.gmra.mxu0 %v4780
    %v4973 = vpop.f32.mrf.mxu0
    %v4974 = vadd.f32 0.0, %v4973
    %v4975 = vpop.f32.mrf.mxu0
    %4976 = vdwg.mxu0
    %4977 = vmatpush.bf16.msra.mxu0 %v2093
    %4978 = vmatpush.bf16.msra.mxu0 %v2085
    %4979 = vmatpush.bf16.msra.mxu0 %v2077
    %4980 = vmatpush.bf16.msra.mxu0 %v2069
    %4981 = vmatpush.bf16.msra.mxu0 %v2061
    %4982 = vmatpush.bf16.msra.mxu0 %v2053
    %4983 = vmatpush.bf16.msra.mxu0 %v2045
    %4984 = vmatpush.bf16.msra.mxu0 %v2037
    %4985 = vmatmul.bf16.gmra.mxu0 %v4781
    %v4986 = vpop.f32.mrf.mxu0
    %v4987 = vadd.f32 %v4974, %v4986
    %v4988 = vpop.f32.mrf.mxu0
    %4989 = vdwg.mxu0
    %v4990 = vadd.f32 %v4772, %v4805
    %v4991 = vadd.f32 %v4773, %v4831
    %v4992 = vadd.f32 %v4774, %v4857
    %v4993 = vadd.f32 %v4775, %v4883
    %v4994 = vadd.f32 %v4776, %v4909
    %v4995 = vadd.f32 %v4777, %v4935
    %v4996 = vadd.f32 %v4778, %v4961
    %v4997 = vadd.f32 %v4779, %v4987
    %v4998 = vxor.u32 %v4990, 2147483648
    %v4999 = vxor.u32 %v4991, 2147483648
    %v5000 = vmul.f32 %v4998, 1.442695
    %v5001 = vpow.pop %v5000
    %v5002 = vmul.f32 %v4999, 1.442695
    %v5003 = vpow.pop %v5002
    %v5004 = vadd.f32 %v5001, 1.0
    %v5005 = vadd.f32 %v5003, 1.0
    %v5006 = vrcp.pop %v5004
    %v5007 = vmul.f32 %v5004, %v5006
    %v5008 = vsub.f32 1.0, %v5007
    %v5009 = vmul.f32 %v5006, %v5008
    %v5010 = vadd.f32 %v5006, %v5009
    %vm5011 = vweird.f32 %v5004
    %vm5012 = vweird.f32 %v5006
    %vm5013 = vmor %vm5011, %vm5012
    %v5014 = vsel %vm5013, %v5006, %v5010
    %v5015 = vand.u32 2147483647, %v5004
    %vm5016 = vcmp.eq.f32.partialorder %v5015, 8.507059e+37
    %v5017 = vand.u32 %v5004, 2147483648
    %v5018 = vor.u32 1.1754944e-38, %v5017
    %v5019 = vsel %vm5016, %v5018, %v5014
    %v5020 = vmul.f32 1.0, %v5019
    %v5021 = vrcp.pop %v5005
    %v5022 = vmul.f32 %v5005, %v5021
    %v5023 = vsub.f32 1.0, %v5022
    %v5024 = vmul.f32 %v5021, %v5023
    %v5025 = vadd.f32 %v5021, %v5024
    %vm5026 = vweird.f32 %v5005
    %vm5027 = vweird.f32 %v5021
    %vm5028 = vmor %vm5026, %vm5027
    %v5029 = vsel %vm5028, %v5021, %v5025
    %v5030 = vand.u32 2147483647, %v5005
    %vm5031 = vcmp.eq.f32.partialorder %v5030, 8.507059e+37
    %v5032 = vand.u32 %v5005, 2147483648
    %v5033 = vor.u32 1.1754944e-38, %v5032
    %v5034 = vsel %vm5031, %v5033, %v5029
    %v5035 = vmul.f32 1.0, %v5034
    %v5036 = vxor.u32 %v4992, 2147483648
    %v5037 = vxor.u32 %v4993, 2147483648
    %v5038 = vmul.f32 %v5036, 1.442695
    %v5039 = vpow.pop %v5038
    %v5040 = vmul.f32 %v5037, 1.442695
    %v5041 = vpow.pop %v5040
    %v5042 = vadd.f32 %v5039, 1.0
    %v5043 = vadd.f32 %v5041, 1.0
    %v5044 = vrcp.pop %v5042
    %v5045 = vmul.f32 %v5042, %v5044
    %v5046 = vsub.f32 1.0, %v5045
    %v5047 = vmul.f32 %v5044, %v5046
    %v5048 = vadd.f32 %v5044, %v5047
    %vm5049 = vweird.f32 %v5042
    %vm5050 = vweird.f32 %v5044
    %vm5051 = vmor %vm5049, %vm5050
    %v5052 = vsel %vm5051, %v5044, %v5048
    %v5053 = vand.u32 2147483647, %v5042
    %vm5054 = vcmp.eq.f32.partialorder %v5053, 8.507059e+37
    %v5055 = vand.u32 %v5042, 2147483648
    %v5056 = vor.u32 1.1754944e-38, %v5055
    %v5057 = vsel %vm5054, %v5056, %v5052
    %v5058 = vmul.f32 1.0, %v5057
    %v5059 = vrcp.pop %v5043
    %v5060 = vmul.f32 %v5043, %v5059
    %v5061 = vsub.f32 1.0, %v5060
    %v5062 = vmul.f32 %v5059, %v5061
    %v5063 = vadd.f32 %v5059, %v5062
    %vm5064 = vweird.f32 %v5043
    %vm5065 = vweird.f32 %v5059
    %vm5066 = vmor %vm5064, %vm5065
    %v5067 = vsel %vm5066, %v5059, %v5063
    %v5068 = vand.u32 2147483647, %v5043
    %vm5069 = vcmp.eq.f32.partialorder %v5068, 8.507059e+37
    %v5070 = vand.u32 %v5043, 2147483648
    %v5071 = vor.u32 1.1754944e-38, %v5070
    %v5072 = vsel %vm5069, %v5071, %v5067
    %v5073 = vmul.f32 1.0, %v5072
    %v5074 = vtanh.pop %v4994
    %v5075 = vtanh.pop %v4995
    %v5076 = vxor.u32 %v4996, 2147483648
    %v5077 = vxor.u32 %v4997, 2147483648
    %v5078 = vmul.f32 %v5076, 1.442695
    %v5079 = vpow.pop %v5078
    %v5080 = vmul.f32 %v5077, 1.442695
    %v5081 = vpow.pop %v5080
    %v5082 = vadd.f32 %v5079, 1.0
    %v5083 = vadd.f32 %v5081, 1.0
    %v5084 = vrcp.pop %v5082
    %v5085 = vmul.f32 %v5082, %v5084
    %v5086 = vsub.f32 1.0, %v5085
    %v5087 = vmul.f32 %v5084, %v5086
    %v5088 = vadd.f32 %v5084, %v5087
    %vm5089 = vweird.f32 %v5082
    %vm5090 = vweird.f32 %v5084
    %vm5091 = vmor %vm5089, %vm5090
    %v5092 = vsel %vm5091, %v5084, %v5088
    %v5093 = vand.u32 2147483647, %v5082
    %vm5094 = vcmp.eq.f32.partialorder %v5093, 8.507059e+37
    %v5095 = vand.u32 %v5082, 2147483648
    %v5096 = vor.u32 1.1754944e-38, %v5095
    %v5097 = vsel %vm5094, %v5096, %v5092
    %v5098 = vmul.f32 1.0, %v5097
    %v5099 = vrcp.pop %v5083
    %v5100 = vmul.f32 %v5083, %v5099
    %v5101 = vsub.f32 1.0, %v5100
    %v5102 = vmul.f32 %v5099, %v5101
    %v5103 = vadd.f32 %v5099, %v5102
    %vm5104 = vweird.f32 %v5083
    %vm5105 = vweird.f32 %v5099
    %vm5106 = vmor %vm5104, %vm5105
    %v5107 = vsel %vm5106, %v5099, %v5103
    %v5108 = vand.u32 2147483647, %v5083
    %vm5109 = vcmp.eq.f32.partialorder %v5108, 8.507059e+37
    %v5110 = vand.u32 %v5083, 2147483648
    %v5111 = vor.u32 1.1754944e-38, %v5110
    %v5112 = vsel %vm5109, %v5111, %v5107
    %v5113 = vmul.f32 1.0, %v5112
    %v5114 = vmul.f32 %v5058, %v4752
    %v5115 = vmul.f32 %v5073, %v4753
    %v5116 = vmul.f32 %v5020, %v5074
    %v5117 = vmul.f32 %v5035, %v5075
    %v5118 = vadd.f32 %v5114, %v5116
    %v5119 = vadd.f32 %v5115, %v5117
    %v5120 = vtanh.pop %v5118
    %v5121 = vtanh.pop %v5119
    %v5122 = vmul.f32 %v5098, %v5120
    %v5123 = vmul.f32 %v5113, %v5121
    %s5124 = sadd.s32 %s1567, 7
    %v5125 = vstv %s5124
    %vm5126 = vcmp.lt.s32.totalorder %v5125, %v1566
    %v5127 = vsel %vm5126, 1, 0
    %5128 = vset.pattern.permute.xlu0 0
    %5129 = vperm.xlu0 %5128, %v5127
    %v5130 = vpop.permute.xlu0 %5129
    %vm5131 = vcmp.eq.s32.totalorder %v5130, 1
    %v5132 = vsel %vm5131, %v5122, 0.0
    %v5133 = vsel %vm5131, %v5123, 0.0
    %v5134 = vpack.c.bf16 %v5133, %v5132
    %s5135 = scalar_lea.vmem [#allocation11], 56
    %5136 = vst [vmem:[%s5135] sm:$0xff] %v5134
    %5137 = vst [vmem:[#allocation3] sm:$0xff] %v5122
    %5138 = vst [vmem:[#allocation3 + $0x8] sm:$0xff] %v5123
    %5139 = vst [vmem:[#allocation4] sm:$0xff] %v5118
    %5140 = vst [vmem:[#allocation4 + $0x8] sm:$0xff] %v5119
    // Predicated region
    $region38: #{tpu_custom_call.1} parent=1 // pred_check
      _
    $region39: #{tpu_custom_call.1} parent=1 // pred_check_branch
      %5142 = sbr.rel (0) target = $region41
    $region40: #{tpu_custom_call.1} parent=1 // pred_region
      %5144 = vsyncadd [#allocation7], 0
      %s5145 = sshll.u32 [#allocation11], 4
      %s5146 = int_to_ptr.vmem [resolvable:$true] %s5145
      %s5147 = sshll.u32 %s5, 4
      %s5148 = int_to_ptr.hbm [resolvable:$true] %s5147
      %5153 = dma.vmem_to_hbm [thread:$0]  %s5146, 1024, %s5148, [#allocation7], 128, 128, 8
    $region41: #{tpu_custom_call.1} parent=1 // pred_fallthru
      _
    // Predicated region
    $region42: #{tpu_custom_call.1} parent=1 // pred_check
      _
    $region43: #{tpu_custom_call.1} parent=1 // pred_check_branch
      %5155 = sbr.rel (0) target = $region45
    $region44: #{tpu_custom_call.1} parent=1 // pred_region
      %5157 = dma.done [#allocation7], 1024
    $region45: #{tpu_custom_call.1} parent=1 // pred_fallthru
      _
    %5158 = vsyncpa [#allocation6], 1
    %5159 = vsyncpa [#allocation9], 1
    %5160 = vsyncpa [#allocation7], 1

</llo_original>
